<compile_context>
chip_gen: v6e
topology: v6e:2x2x1
jax: 0.10.0
libtpu: 0.0.40
codegen_flags: <defaults>
</compile_context>

<pallas_src>
import functools

import jax
import jax.numpy as jnp
from jax import lax
from jax.experimental import pallas as pl
from jax.experimental.pallas import tpu as pltpu


def _round_up(x, m):
    return -(-x // m) * m


@functools.lru_cache(maxsize=None)
def _tpu_hw_info():
    """Returns (vmem_capacity_bytes, bf16_elementwise_ok) with safe fallbacks."""
    vmem_cap = 64 << 20                      # conservative floor (v7x: 64 MiB / TC)
    try:
        vmem_cap = int(pltpu.get_tpu_info().vmem_capacity_bytes)
    except Exception:
        pass
    bf16_ok = False
    try:
        kind = jax.devices()[0].device_kind.lower()
        # bf16 VALU/EUP exist on v6e and later; on v5e/older bf16 only adds converts.
        bf16_ok = not any(t in kind for t in ("v2", "v3", "v4", "v5"))
    except Exception:
        pass
    return vmem_cap, bf16_ok


# ----------------------------------------------------------------------------
# Glue: per-gaussian projection (tanh-space means -> pixel coords, cholesky -> conic)
# ----------------------------------------------------------------------------
def project_gaussians_2d(xyz, cholesky, H, W):
    """Means live in pre-tanh space (params init'd with atanh); tanh maps to [-1, 1],
    scaled to pixel coordinates.  Sigma = L L^T with L = [[l1, 0], [l2, l3]];
    conic = Sigma^{-1} (xx, xy, yy)."""
    t = jnp.tanh(xyz)
    xys = jnp.stack([0.5 * W * (t[:, 0] + 1.0), 0.5 * H * (t[:, 1] + 1.0)], axis=-1)
    l1, l2, l3 = cholesky[:, 0], cholesky[:, 1], cholesky[:, 2]
    a = l1 * l1
    b = l1 * l2
    c = l2 * l2 + l3 * l3
    det = a * c - b * b
    conics = jnp.stack([c / det, -b / det, a / det], axis=-1)
    return xys, conics


# ----------------------------------------------------------------------------
# Pallas kernel 1: accumulated-sum rasterizer (lane-dense, channel-first output)
#   out[:, p] = sum_g colors[:, g] * min(0.999, opacity[g] * exp(-sigma(p, g)))
#   (contributions with alpha < 1/255 are dropped, like the CUDA kernel; sigma >= 0
#    holds by construction since cholesky_bound keeps det(Sigma) > 0.)
# ----------------------------------------------------------------------------
def _chunk_contribution(gt, col_t, px, py, compute_dtype):
    """gt: (tile_g, 8) f32 [x, y, 0.5*cxx, cxy, 0.5*cyy, opacity, 0, 0];
    col_t: (Kc, tile_g) in compute_dtype; px/py: (1, tile_p) f32.
    Returns the (Kc, tile_p) f32 partial sum for this gaussian chunk."""
    gx, gy = gt[:, 0:1], gt[:, 1:2]
    ca, cb, cc = gt[:, 2:3], gt[:, 3:4], gt[:, 4:5]       # 0.5 pre-folded in ca/cc
    op = gt[:, 5:6]
    dx = gx - px                                          # f32 subtraction (exact-ish)
    dy = gy - py
    if compute_dtype != jnp.float32:
        dx = dx.astype(compute_dtype)
        dy = dy.astype(compute_dtype)
        ca = ca.astype(compute_dtype)
        cb = cb.astype(compute_dtype)
        cc = cc.astype(compute_dtype)
        op = op.astype(compute_dtype)
    sigma = ca * dx * dx + cc * dy * dy + cb * (dx * dy)
    alpha = jnp.minimum(jnp.asarray(0.999, compute_dtype), op * jnp.exp(-sigma))
    alpha = jnp.where(alpha >= jnp.asarray(1.0 / 255.0, compute_dtype), alpha,
                      jnp.asarray(0.0, compute_dtype))
    # (Kc, tile_g) @ (tile_g, tile_p) -> (Kc, tile_p); f32 accumulation on the MXU.
    return jnp.dot(col_t, alpha, preferred_element_type=jnp.float32)


def _make_resident_kernel(Np, tile_g, Kc, tile_p, compute_dtype):
    num_chunks = Np // tile_g

    def kernel(pix_ref, g_ref, colT_ref, out_ref):
        px = pix_ref[0:1, :]                              # (1, tile_p)
        py = pix_ref[1:2, :]

        def body(c, acc):
            gs = pl.multiple_of(c * tile_g, tile_g)
            gt = g_ref[pl.ds(gs, tile_g), :]              # (tile_g, 8)
            col_t = colT_ref[:, pl.ds(gs, tile_g)]        # (Kc, tile_g)
            return acc + _chunk_contribution(gt, col_t, px, py, compute_dtype)

        acc0 = jnp.zeros((Kc, tile_p), jnp.float32)
        if num_chunks <= 2:
            acc = lax.fori_loop(0, num_chunks, body, acc0, unroll=True)
        else:
            acc = lax.fori_loop(0, num_chunks, body, acc0)
        out_ref[...] = acc                                # single write per pixel tile

    return kernel


def _make_streamed_kernel(compute_dtype):
    def kernel(pix_ref, g_ref, colT_ref, out_ref):
        @pl.when(pl.program_id(1) == 0)
        def _():
            out_ref[...] = jnp.zeros_like(out_ref)

        px = pix_ref[0:1, :]
        py = pix_ref[1:2, :]
        out_ref[...] += _chunk_contribution(g_ref[...], colT_ref[...], px, py,
                                            compute_dtype)

    return kernel


def rasterize_gaussians_sum_pallas(xys, conics, colors, opacity, H, W,
                                   *, tile_p=1024, tile_g=512, compute_dtype=None):
    N = xys.shape[0]
    Kc = colors.shape[-1]
    P = H * W

    vmem_cap, bf16_ok = _tpu_hw_info()
    if compute_dtype is None:
        # bf16 elementwise chain only where the VPU/EUP are bf16-capable (v6e/v7x).
        compute_dtype = jnp.bfloat16 if bf16_ok else jnp.float32
    compute_dtype = jnp.dtype(compute_dtype).type

    tile_p = min(tile_p, _round_up(P, 128))
    tile_g = min(tile_g, _round_up(N, 128))
    Pp = _round_up(P, tile_p)
    Np = _round_up(N, tile_g)

    # (Np, 8) gaussian params, one gaussian per sublane row:
    #   [x, y, 0.5*conic_xx, conic_xy, 0.5*conic_yy, opacity, 0, 0]
    # Zero-padded gaussians contribute exactly 0 (alpha = 0 < 1/255 -> masked).
    par = jnp.concatenate(
        [xys,
         conics * jnp.array([0.5, 1.0, 0.5], jnp.float32),
         opacity.reshape(-1, 1)], axis=1).astype(jnp.float32)            # (N, 6)
    g = jnp.pad(par, ((0, Np - N), (0, 2)))                              # (Np, 8)

    # Colors transposed (channels x gaussians) in the compute dtype.
    colT = jnp.pad(colors.astype(compute_dtype).T, ((0, 0), (0, Np - N)))  # (Kc, Np)

    # Pixel centers, pixels on the lane axis: rows [x+0.5, y+0.5].
    yy, xx = jnp.meshgrid(jnp.arange(H, dtype=jnp.float32),
                          jnp.arange(W, dtype=jnp.float32), indexing="ij")
    pix = jnp.stack([xx.reshape(-1), yy.reshape(-1)], axis=0) + 0.5      # (2, P)
    pix = jnp.pad(pix, ((0, 0), (0, Pp - P)))                            # (2, Pp)

    # Generation-aware VMEM budgeting.  The resident blocks are single-buffered
    # (Buffered(1), DMA'd once); budget leaves headroom for the per-chunk
    # (tile_g, tile_p) elementwise temporaries and the pix/out pipeline buffers.
    vmem_limit = int(min(vmem_cap * 3 // 4, 100 << 20))
    itemsize = jnp.dtype(compute_dtype).itemsize
    temp_bytes = 6 * tile_g * tile_p * 4                    # ~live f32 temps per chunk
    io_bytes = 2 * 2 * (8 + _round_up(Kc, 8)) * tile_p * 4  # pix + out, double-buffered
    g_resident_bytes = Np * 128 * 4                         # (Np, 8) lane-pads 8 -> 128
    colT_resident_bytes = _round_up(Kc, max(1, 32 // itemsize)) * Np * itemsize
    resident = (g_resident_bytes + colT_resident_bytes + temp_bytes + io_bytes
                <= vmem_limit)

    cparams = pltpu.CompilerParams(
        dimension_semantics=("parallel",) if resident else ("parallel", "arbitrary"),
        vmem_limit_bytes=vmem_limit)

    def _call(single_buffer_resident):
        if resident:
            if single_buffer_resident:
                g_spec = pl.BlockSpec((Np, 8), lambda p: (0, 0),
                                      pipeline_mode=pl.Buffered(1))
                c_spec = pl.BlockSpec((Kc, Np), lambda p: (0, 0),
                                      pipeline_mode=pl.Buffered(1))
            else:
                g_spec = pl.BlockSpec((Np, 8), lambda p: (0, 0))
                c_spec = pl.BlockSpec((Kc, Np), lambda p: (0, 0))
            kernel = _make_resident_kernel(Np, tile_g, Kc, tile_p, compute_dtype)
            grid = (Pp // tile_p,)
            in_specs = [pl.BlockSpec((2, tile_p), lambda p: (0, p)), g_spec, c_spec]
            out_specs = pl.BlockSpec((Kc, tile_p), lambda p: (0, p))
        else:
            kernel = _make_streamed_kernel(compute_dtype)
            grid = (Pp // tile_p, Np // tile_g)
            in_specs = [pl.BlockSpec((2, tile_p), lambda p, gi: (0, p)),
                        pl.BlockSpec((tile_g, 8), lambda p, gi: (gi, 0)),
                        pl.BlockSpec((Kc, tile_g), lambda p, gi: (0, gi))]
            out_specs = pl.BlockSpec((Kc, tile_p), lambda p, gi: (0, p))

        return pl.pallas_call(
            kernel,
            out_shape=jax.ShapeDtypeStruct((Kc, Pp), jnp.float32),
            grid_spec=pltpu.PrefetchScalarGridSpec(
                num_scalar_prefetch=0, grid=grid,
                in_specs=in_specs, out_specs=out_specs),
            compiler_params=cparams,
        )(pix, g, colT)

    if resident:
        try:
            out = _call(True)
        except Exception:
            # Fall back to default (double-buffered) resident blocks if the
            # single-buffer pipeline_mode request is rejected by this jax/Mosaic.
            out = _call(False)
    else:
        out = _call(False)

    # Channel-first image for free (no HBM transpose pass).
    return out[:, :P].reshape(Kc, H, W)


# ----------------------------------------------------------------------------
# Pallas kernel 2: kPCA splat-feature mixing (lane-dense: gaussians on lanes)
#   splat[n] = sum_c softmax(alpha_logits)[n, c] * (mu_c + w_proj[n, c, :] @ V_c)
# ----------------------------------------------------------------------------
def kpca_splat_features_pallas(alpha_logits, w_proj, cluster_means, cluster_bases,
                               *, tile_n=1024):
    N, C = alpha_logits.shape
    j = w_proj.shape[2]
    Cj = C * j
    tile_n = min(tile_n, _round_up(N, 128))
    Np = _round_up(N, tile_n)

    alT = jnp.pad(alpha_logits.astype(jnp.float32).T, ((0, 0), (0, Np - N)))  # (C, Np)
    wpT = jnp.pad(w_proj.astype(jnp.float32).reshape(N, Cj).T,
                  ((0, 0), (0, Np - N)))                                      # (Cj, Np)
    # Indicator repeating each cluster weight j times along the flattened (c, j) axis.
    rep = jnp.repeat(jnp.eye(C, dtype=jnp.float32), j, axis=0)                # (Cj, C)
    muT = cluster_means.astype(jnp.float32).T                                 # (3, C)
    VT = cluster_bases.astype(jnp.float32).reshape(Cj, 3).T                   # (3, Cj)

    def kernel(alT_ref, wpT_ref, rep_ref, muT_ref, VT_ref, out_ref):
        logits = alT_ref[...]                                   # (C, tile_n)
        m = jnp.max(logits, axis=0, keepdims=True)
        e = jnp.exp(logits - m)
        aw = e / jnp.sum(e, axis=0, keepdims=True)              # softmax over clusters
        aw_rep = jnp.dot(rep_ref[...], aw,
                         preferred_element_type=jnp.float32)    # (Cj, tile_n)
        acc = jnp.dot(muT_ref[...], aw,
                      preferred_element_type=jnp.float32)       # (3, tile_n)
        acc = acc + jnp.dot(VT_ref[...], aw_rep * wpT_ref[...],
                            preferred_element_type=jnp.float32)
        out_ref[...] = acc                                      # lane-dense store

    out = pl.pallas_call(
        kernel,
        out_shape=jax.ShapeDtypeStruct((3, Np), jnp.float32),
        grid_spec=pltpu.PrefetchScalarGridSpec(
            num_scalar_prefetch=0, grid=(Np // tile_n,),
            in_specs=[pl.BlockSpec((C, tile_n), lambda i: (0, i)),
                      pl.BlockSpec((Cj, tile_n), lambda i: (0, i)),
                      pl.BlockSpec((Cj, C), lambda i: (0, 0)),
                      pl.BlockSpec((3, C), lambda i: (0, 0)),
                      pl.BlockSpec((3, Cj), lambda i: (0, 0))],
            out_specs=pl.BlockSpec((3, tile_n), lambda i: (0, i))),
        compiler_params=pltpu.CompilerParams(dimension_semantics=("parallel",)),
    )(alT, wpT, rep, muT, VT)
    return out[:, :N].T                                         # (N, 3)


# ----------------------------------------------------------------------------
# The module (forward-pass only), parameters initialized deterministically.
# ----------------------------------------------------------------------------
class GaussianBasisPallas:
    def __init__(self, key, loss_type="L2", **kwargs):
        self.loss_type = loss_type
        self.init_num_points = kwargs["num_points"]
        self.num_comps = kwargs["num_comps"]
        self.H, self.W = kwargs["H"], kwargs["W"]
        self.BLOCK_W, self.BLOCK_H = kwargs["BLOCK_W"], kwargs["BLOCK_H"]
        self.tile_bounds = ((self.W + self.BLOCK_W - 1) // self.BLOCK_W,
                            (self.H + self.BLOCK_H - 1) // self.BLOCK_H, 1)
        self.config = kwargs["freq_config"]
        self.cur_freq = None

        ks = iter(jax.random.split(key, 32))
        self._opacity = jnp.ones((self.init_num_points, 1), jnp.float32)
        # torch.empty -> deterministic random stand-in
        self._colors = jax.random.normal(next(ks), (self.init_num_points, 3), jnp.float32)

        self.params = {}
        for freq in ("low", "high", "all"):
            c = self.config[freq]
            u = jax.random.uniform(next(ks), (c[2], 2), jnp.float32)
            self.params[f"{freq}_xyz"] = jnp.arctanh(
                jnp.clip(2.0 * (u - 0.5), -0.999, 0.999))
            self.params[f"{freq}_cholesky"] = jax.random.uniform(
                next(ks), (c[2], 3), jnp.float32)
            self.params[f"{freq}_features_dc"] = jax.random.uniform(
                next(ks), (c[1] - c[0], c[2], 3), jnp.float32)

        self.shift_factor = jnp.float32(0.0)
        self.scale_factor = jnp.float32(1.0)
        self.image_mean = jnp.zeros((self.H * self.W,), jnp.float32)
        self.background = jnp.ones((3,), jnp.float32)   # unused by the "sum" rasterizer
        self.cholesky_bound = jnp.array([[0.5, 0.0, 0.5]], jnp.float32)

        C = kwargs["num_clusters"]
        j = kwargs["num_proj_dim"]
        self.num_clusters, self.num_proj_dim = C, j
        self.cluster_means = jax.random.normal(next(ks), (C, 3), jnp.float32)
        self.cluster_bases = jax.random.normal(next(ks), (C, j, 3), jnp.float32)
        self.alpha_logits = jax.random.normal(next(ks), (self.init_num_points, C),
                                              jnp.float32)
        self.w_proj = jax.random.normal(next(ks), (self.init_num_points, C, j),
                                        jnp.float32)

        self.opt_type = kwargs["opt_type"]
        self.lr = kwargs["lr"]

    # -- properties mirroring the torch module --
    @property
    def get_colors(self):
        return self._colors

    @property
    def get_xyz(self):
        return self.params[f"{self.cur_freq}_xyz"]

    @property
    def get_features(self):
        return self.params[f"{self.cur_freq}_features_dc"]

    @property
    def get_cholesky_elements(self):
        return self.params[f"{self.cur_freq}_cholesky"] + self.cholesky_bound

    @property
    def get_scale_cholesky_elements(self):
        return self.params[f"{self.cur_freq}_cholesky"] * 0.92 + self.cholesky_bound

    @property
    def get_opacity(self):
        cfg = self.config[self.cur_freq]
        return self._opacity[:cfg[2], :]

    # -- forward paths --
    def _forward_colors(self):
        xys, conics = project_gaussians_2d(self.get_xyz, self.get_cholesky_elements,
                                           self.H, self.W)
        img = rasterize_gaussians_sum_pallas(xys, conics, self.get_colors,
                                             self.get_opacity, self.H, self.W)
        img = img * self.scale_factor + self.shift_factor
        return img                                               # (3, H, W) channel-first

    def _forward_featrues_dc(self):
        xys, conics = project_gaussians_2d(self.get_xyz, self.get_cholesky_elements,
                                           self.H, self.W)
        feats = self.get_features                                # (K, N, 3)
        K, N, _ = feats.shape
        # one rasterization with concatenated colors == K rasterizations (same alpha)
        colors = jnp.transpose(feats, (1, 0, 2)).reshape(N, K * 3)
        img = rasterize_gaussians_sum_pallas(xys, conics, colors,
                                             self.get_opacity, self.H, self.W)
        return img.reshape(K, 3, self.H, self.W)                 # (K, 3, H, W)

    def _forward_colors_and_features(self):
        """Fused path: one rasterization (Kc = 3 + 3K) yields both the render_colors
        image and all per-component feature images -- the dominant per-(gaussian,pixel)
        alpha work (same xys/conics/opacity) is shared."""
        xys, conics = project_gaussians_2d(self.get_xyz, self.get_cholesky_elements,
                                           self.H, self.W)
        feats = self.get_features                                # (K, N, 3)
        K, N, _ = feats.shape
        colors = jnp.concatenate(
            [self.get_colors[:N],
             jnp.transpose(feats, (1, 0, 2)).reshape(N, K * 3)], axis=1)
        img = rasterize_gaussians_sum_pallas(xys, conics, colors,
                                             self.get_opacity, self.H, self.W)
        col_img = img[:3] * self.scale_factor + self.shift_factor          # (3, H, W)
        feat_img = img[3:].reshape(K, 3, self.H, self.W)                   # (K, 3, H, W)
        return col_img, feat_img

    def _forward_kpca_features(self):
        # TODO(synk): the reference indexes params['kpca_xyz'] / config['kpca'],
        # which are never created in __init__; we substitute the 'all' frequency
        # parameters for geometry/opacity (the only consistent interpretation).
        xyz = self.params["all_xyz"]
        chol = self.params["all_cholesky"] + self.cholesky_bound
        xys, conics = project_gaussians_2d(xyz, chol, self.H, self.W)
        splat = kpca_splat_features_pallas(self.alpha_logits, self.w_proj,
                                           self.cluster_means, self.cluster_bases)
        opac = self._opacity[:self.config["all"][2], :]
        img = rasterize_gaussians_sum_pallas(xys, conics, splat, opac, self.H, self.W)
        img = img * self.scale_factor + self.shift_factor
        return img                                               # (3, H, W)

    def forward(self, render_colors=False):
        if self.cur_freq == "kpca":
            return self._forward_kpca_features()
        elif render_colors:
            return self._forward_colors()
        else:
            return self._forward_featrues_dc()


if __name__ == "__main__":
    key = jax.random.PRNGKey(0)
    H = W = 16
    kwargs = dict(
        num_points=512,
        num_comps=2,
        H=H, W=W,
        BLOCK_W=16, BLOCK_H=16,
        device=None,
        freq_config={"low": (0, 1, 256), "high": (1, 2, 256), "all": (0, 2, 512)},
        opt_type="adam",
        lr=1e-3,
        num_clusters=4,
        num_proj_dim=8,
    )
    model = GaussianBasisPallas(key, **kwargs)

    # default path: per-component DC features -> (num_comps, 3, H, W)
    model.cur_freq = "all"
    out_feat = model.forward(render_colors=False)
    # render_colors path -> (3, H, W)
    out_col = model.forward(render_colors=True)
    # fused colors + features (single rasterization, shared alpha work)
    col_fused, feat_fused = model._forward_colors_and_features()
    # kPCA path (softmax cluster mixing + per-cluster matmul in Pallas) -> (3, H, W)
    model.cur_freq = "kpca"
    out_kpca = model.forward()

    jax.block_until_ready((out_feat, out_col, out_kpca, col_fused, feat_fused))

    assert out_feat.shape == (2, 3, H, W), out_feat.shape
    assert out_col.shape == (3, H, W), out_col.shape
    assert out_kpca.shape == (3, H, W), out_kpca.shape
    assert col_fused.shape == (3, H, W) and feat_fused.shape == (2, 3, H, W)
    # fused and separate rasterizations share the identical alpha computation
    assert jnp.allclose(col_fused, out_col, atol=1e-3, rtol=1e-3)
    assert jnp.allclose(feat_fused, out_feat, atol=1e-3, rtol=1e-3)
    for o in (out_feat, out_col, out_kpca):
        assert bool(jnp.all(jnp.isfinite(o)))
    print("KERNEL_OK")
</pallas_src>

<mosaic_0001>
module attributes {stable_mosaic.version = 11 : i64} {
  func.func @kernel(%arg0: i32, %arg1: memref<2x256xf32, #tpu.memory_space<vmem>>, %arg2: memref<512x8xf32, #tpu.memory_space<vmem>>, %arg3: memref<6x512xbf16, #tpu.memory_space<vmem>>, %arg4: memref<6x256xf32, #tpu.memory_space<vmem>>) attributes {dimension_semantics = [#tpu.dimension_semantics<parallel>], iteration_bounds = array<i64: 1>, scalar_prefetch = 0 : i64, scratch_operands = 0 : i64, tpu.core_type = #tpu.core_type<tc>, window_params = [{transform_indices = @transform_0, window_bounds = array<i64: 2, 256>}, {pipeline_mode = #tpu.pipeline_mode<synchronous>, transform_indices = @transform_1, window_bounds = array<i64: 512, 8>}, {pipeline_mode = #tpu.pipeline_mode<synchronous>, transform_indices = @transform_2, window_bounds = array<i64: 6, 512>}, {transform_indices = @transform_3, window_bounds = array<i64: 6, 256>}]} {
    %c0 = arith.constant 0 : index
    %c0_0 = arith.constant 0 : index
    %0 = vector.load %arg1[%c0, %c0_0] : memref<2x256xf32, #tpu.memory_space<vmem>>, vector<1x256xf32>
    %c1 = arith.constant 1 : index
    %c0_1 = arith.constant 0 : index
    %1 = vector.load %arg1[%c1, %c0_1] : memref<2x256xf32, #tpu.memory_space<vmem>>, vector<1x256xf32>
    %cst = arith.constant 0.000000e+00 : f32
    %2 = vector.broadcast %cst : f32 to vector<6x256xf32>
    %c0_i32 = arith.constant 0 : i32
    %c512_i32 = arith.constant 512 : i32
    %3 = arith.muli %c0_i32, %c512_i32 : i32
    %4 = tpu.assume_multiple %3, 512 : i32
    %5 = arith.index_cast %4 : i32 to index
    %c0_2 = arith.constant 0 : index
    %6 = vector.load %arg2[%5, %c0_2] : memref<512x8xf32, #tpu.memory_space<vmem>>, vector<512x8xf32>
    %c0_3 = arith.constant 0 : index
    %7 = arith.index_cast %4 : i32 to index
    %8 = vector.load %arg3[%c0_3, %7] : memref<6x512xbf16, #tpu.memory_space<vmem>>, vector<6x512xbf16>
    %9 = vector.extract_strided_slice %6 {offsets = [0, 0], sizes = [512, 1], strides = [1, 1]} : vector<512x8xf32> to vector<512x1xf32>
    %10 = vector.extract_strided_slice %6 {offsets = [0, 1], sizes = [512, 1], strides = [1, 1]} : vector<512x8xf32> to vector<512x1xf32>
    %11 = vector.extract_strided_slice %6 {offsets = [0, 2], sizes = [512, 1], strides = [1, 1]} : vector<512x8xf32> to vector<512x1xf32>
    %12 = vector.extract_strided_slice %6 {offsets = [0, 3], sizes = [512, 1], strides = [1, 1]} : vector<512x8xf32> to vector<512x1xf32>
    %13 = vector.extract_strided_slice %6 {offsets = [0, 4], sizes = [512, 1], strides = [1, 1]} : vector<512x8xf32> to vector<512x1xf32>
    %14 = vector.extract_strided_slice %6 {offsets = [0, 5], sizes = [512, 1], strides = [1, 1]} : vector<512x8xf32> to vector<512x1xf32>
    %15 = vector.broadcast %9 : vector<512x1xf32> to vector<512x256xf32>
    %16 = vector.broadcast %0 : vector<1x256xf32> to vector<512x256xf32>
    %17 = arith.subf %15, %16 : vector<512x256xf32>
    %18 = vector.broadcast %10 : vector<512x1xf32> to vector<512x256xf32>
    %19 = vector.broadcast %1 : vector<1x256xf32> to vector<512x256xf32>
    %20 = arith.subf %18, %19 : vector<512x256xf32>
    %21 = arith.truncf %17 : vector<512x256xf32> to vector<512x256xbf16>
    %22 = arith.truncf %20 : vector<512x256xf32> to vector<512x256xbf16>
    %23 = arith.truncf %11 : vector<512x1xf32> to vector<512x1xbf16>
    %24 = arith.truncf %12 : vector<512x1xf32> to vector<512x1xbf16>
    %25 = arith.truncf %13 : vector<512x1xf32> to vector<512x1xbf16>
    %26 = arith.truncf %14 : vector<512x1xf32> to vector<512x1xbf16>
    %27 = vector.broadcast %23 : vector<512x1xbf16> to vector<512x256xbf16>
    %28 = arith.mulf %27, %21 : vector<512x256xbf16>
    %29 = arith.mulf %28, %21 : vector<512x256xbf16>
    %30 = vector.broadcast %25 : vector<512x1xbf16> to vector<512x256xbf16>
    %31 = arith.mulf %30, %22 : vector<512x256xbf16>
    %32 = arith.mulf %31, %22 : vector<512x256xbf16>
    %33 = arith.addf %29, %32 : vector<512x256xbf16>
    %34 = arith.mulf %21, %22 : vector<512x256xbf16>
    %35 = vector.broadcast %24 : vector<512x1xbf16> to vector<512x256xbf16>
    %36 = arith.mulf %35, %34 : vector<512x256xbf16>
    %37 = arith.addf %33, %36 : vector<512x256xbf16>
    %cst_4 = arith.constant 0.000000e+00 : bf16
    %38 = vector.broadcast %cst_4 : bf16 to vector<512x256xbf16>
    %39 = arith.subf %38, %37 : vector<512x256xbf16>
    %40 = math.exp %39 : vector<512x256xbf16>
    %41 = vector.broadcast %26 : vector<512x1xbf16> to vector<512x256xbf16>
    %42 = arith.mulf %41, %40 : vector<512x256xbf16>
    %cst_5 = arith.constant 1.000000e+00 : bf16
    %43 = vector.broadcast %cst_5 : bf16 to vector<512x256xbf16>
    %44 = arith.minimumf %43, %42 : vector<512x256xbf16>
    %cst_6 = arith.constant 3.936770e-03 : bf16
    %45 = vector.broadcast %cst_6 : bf16 to vector<512x256xbf16>
    %46 = arith.cmpf oge, %44, %45 : vector<512x256xbf16>
    %cst_7 = arith.constant 0.000000e+00 : bf16
    %47 = vector.broadcast %cst_7 : bf16 to vector<512x256xbf16>
    %48 = arith.select %46, %44, %47 : vector<512x256xi1>, vector<512x256xbf16>
    %cst_8 = arith.constant dense<0.000000e+00> : vector<6x256xf32>
    %49 = tpu.matmul %8, %48, %cst_8 {dimension_numbers = #tpu.dot_dimension_numbers<[1], [0], [0], [1], [0, 0, 1, 1], [], []>} : vector<6x512xbf16>, vector<512x256xbf16>, vector<6x256xf32> -> vector<6x256xf32>
    %50 = arith.addf %2, %49 : vector<6x256xf32>
    %c1_i32 = arith.constant 1 : i32
    %c0_9 = arith.constant 0 : index
    %c0_10 = arith.constant 0 : index
    %51 = vector.load %arg4[%c0_9, %c0_10] : memref<6x256xf32, #tpu.memory_space<vmem>>, vector<6x256xf32>
    tpu.vector_store %arg4[%c0_9, %c0_10], %50 {strides = array<i32>} : memref<6x256xf32, #tpu.memory_space<vmem>>, vector<6x256xf32>,
    return
  }
  func.func @transform_0(%arg0: i32) -> (i32, i32) {
    %c0_i32 = arith.constant 0 : i32
    %c0_i32_0 = arith.constant 0 : i32
    return %c0_i32, %arg0 : i32, i32
  }
  func.func @transform_1(%arg0: i32) -> (i32, i32) {
    %c0_i32 = arith.constant 0 : i32
    %c0_i32_0 = arith.constant 0 : i32
    %c0_i32_1 = arith.constant 0 : i32
    return %c0_i32, %c0_i32_0 : i32, i32
  }
  func.func @transform_2(%arg0: i32) -> (i32, i32) {
    %c0_i32 = arith.constant 0 : i32
    %c0_i32_0 = arith.constant 0 : i32
    %c0_i32_1 = arith.constant 0 : i32
    return %c0_i32, %c0_i32_0 : i32, i32
  }
  func.func @transform_3(%arg0: i32) -> (i32, i32) {
    %c0_i32 = arith.constant 0 : i32
    %c0_i32_0 = arith.constant 0 : i32
    return %c0_i32, %arg0 : i32, i32
  }
}

module attributes {stable_mosaic.version = 11 : i64} {
  func.func @kernel(%arg0: i32, %arg1: memref<2x256xf32, #tpu.memory_space<vmem>>, %arg2: memref<512x8xf32, #tpu.memory_space<vmem>>, %arg3: memref<6x512xbf16, #tpu.memory_space<vmem>>, %arg4: memref<6x256xf32, #tpu.memory_space<vmem>>) attributes {dimension_semantics = [#tpu.dimension_semantics<parallel>], iteration_bounds = array<i64: 1>, scalar_prefetch = 0 : i64, scratch_operands = 0 : i64, tpu.core_type = #tpu.core_type<tc>, window_params = [{transform_indices = @transform_0, window_bounds = array<i64: 2, 256>}, {pipeline_mode = #tpu.pipeline_mode<synchronous>, transform_indices = @transform_1, window_bounds = array<i64: 512, 8>}, {pipeline_mode = #tpu.pipeline_mode<synchronous>, transform_indices = @transform_2, window_bounds = array<i64: 6, 512>}, {transform_indices = @transform_3, window_bounds = array<i64: 6, 256>}]} {
    %c0 = arith.constant 0 : index
    %c0_0 = arith.constant 0 : index
    %0 = vector.load %arg1[%c0, %c0_0] : memref<2x256xf32, #tpu.memory_space<vmem>>, vector<1x256xf32>
    %c1 = arith.constant 1 : index
    %c0_1 = arith.constant 0 : index
    %1 = vector.load %arg1[%c1, %c0_1] : memref<2x256xf32, #tpu.memory_space<vmem>>, vector<1x256xf32>
    %cst = arith.constant 0.000000e+00 : f32
    %2 = vector.broadcast %cst : f32 to vector<6x256xf32>
    %c0_i32 = arith.constant 0 : i32
    %c512_i32 = arith.constant 512 : i32
    %3 = arith.muli %c0_i32, %c512_i32 : i32
    %4 = tpu.assume_multiple %3, 512 : i32
    %5 = arith.index_cast %4 : i32 to index
    %c0_2 = arith.constant 0 : index
    %6 = vector.load %arg2[%5, %c0_2] : memref<512x8xf32, #tpu.memory_space<vmem>>, vector<512x8xf32>
    %c0_3 = arith.constant 0 : index
    %7 = arith.index_cast %4 : i32 to index
    %8 = vector.load %arg3[%c0_3, %7] : memref<6x512xbf16, #tpu.memory_space<vmem>>, vector<6x512xbf16>
    %9 = vector.extract_strided_slice %6 {offsets = [0, 0], sizes = [512, 1], strides = [1, 1]} : vector<512x8xf32> to vector<512x1xf32>
    %10 = vector.extract_strided_slice %6 {offsets = [0, 1], sizes = [512, 1], strides = [1, 1]} : vector<512x8xf32> to vector<512x1xf32>
    %11 = vector.extract_strided_slice %6 {offsets = [0, 2], sizes = [512, 1], strides = [1, 1]} : vector<512x8xf32> to vector<512x1xf32>
    %12 = vector.extract_strided_slice %6 {offsets = [0, 3], sizes = [512, 1], strides = [1, 1]} : vector<512x8xf32> to vector<512x1xf32>
    %13 = vector.extract_strided_slice %6 {offsets = [0, 4], sizes = [512, 1], strides = [1, 1]} : vector<512x8xf32> to vector<512x1xf32>
    %14 = vector.extract_strided_slice %6 {offsets = [0, 5], sizes = [512, 1], strides = [1, 1]} : vector<512x8xf32> to vector<512x1xf32>
    %15 = vector.broadcast %9 : vector<512x1xf32> to vector<512x256xf32>
    %16 = vector.broadcast %0 : vector<1x256xf32> to vector<512x256xf32>
    %17 = arith.subf %15, %16 : vector<512x256xf32>
    %18 = vector.broadcast %10 : vector<512x1xf32> to vector<512x256xf32>
    %19 = vector.broadcast %1 : vector<1x256xf32> to vector<512x256xf32>
    %20 = arith.subf %18, %19 : vector<512x256xf32>
    %21 = arith.truncf %17 : vector<512x256xf32> to vector<512x256xbf16>
    %22 = arith.truncf %20 : vector<512x256xf32> to vector<512x256xbf16>
    %23 = arith.truncf %11 : vector<512x1xf32> to vector<512x1xbf16>
    %24 = arith.truncf %12 : vector<512x1xf32> to vector<512x1xbf16>
    %25 = arith.truncf %13 : vector<512x1xf32> to vector<512x1xbf16>
    %26 = arith.truncf %14 : vector<512x1xf32> to vector<512x1xbf16>
    %27 = vector.broadcast %23 : vector<512x1xbf16> to vector<512x256xbf16>
    %28 = arith.mulf %27, %21 : vector<512x256xbf16>
    %29 = arith.mulf %28, %21 : vector<512x256xbf16>
    %30 = vector.broadcast %25 : vector<512x1xbf16> to vector<512x256xbf16>
    %31 = arith.mulf %30, %22 : vector<512x256xbf16>
    %32 = arith.mulf %31, %22 : vector<512x256xbf16>
    %33 = arith.addf %29, %32 : vector<512x256xbf16>
    %34 = arith.mulf %21, %22 : vector<512x256xbf16>
    %35 = vector.broadcast %24 : vector<512x1xbf16> to vector<512x256xbf16>
    %36 = arith.mulf %35, %34 : vector<512x256xbf16>
    %37 = arith.addf %33, %36 : vector<512x256xbf16>
    %cst_4 = arith.constant 0.000000e+00 : bf16
    %38 = vector.broadcast %cst_4 : bf16 to vector<512x256xbf16>
    %39 = arith.subf %38, %37 : vector<512x256xbf16>
    %40 = math.exp %39 : vector<512x256xbf16>
    %41 = vector.broadcast %26 : vector<512x1xbf16> to vector<512x256xbf16>
    %42 = arith.mulf %41, %40 : vector<512x256xbf16>
    %cst_5 = arith.constant 1.000000e+00 : bf16
    %43 = vector.broadcast %cst_5 : bf16 to vector<512x256xbf16>
    %44 = arith.minimumf %43, %42 : vector<512x256xbf16>
    %cst_6 = arith.constant 3.936770e-03 : bf16
    %45 = vector.broadcast %cst_6 : bf16 to vector<512x256xbf16>
    %46 = arith.cmpf oge, %44, %45 : vector<512x256xbf16>
    %cst_7 = arith.constant 0.000000e+00 : bf16
    %47 = vector.broadcast %cst_7 : bf16 to vector<512x256xbf16>
    %48 = arith.select %46, %44, %47 : vector<512x256xi1>, vector<512x256xbf16>
    %cst_8 = arith.constant dense<0.000000e+00> : vector<6x256xf32>
    %49 = tpu.matmul %8, %48, %cst_8 {dimension_numbers = #tpu.dot_dimension_numbers<[1], [0], [0], [1], [0, 0, 1, 1], [], []>} : vector<6x512xbf16>, vector<512x256xbf16>, vector<6x256xf32> -> vector<6x256xf32>
    %50 = arith.addf %2, %49 : vector<6x256xf32>
    %c1_i32 = arith.constant 1 : i32
    %c0_9 = arith.constant 0 : index
    %c0_10 = arith.constant 0 : index
    %51 = vector.load %arg4[%c0_9, %c0_10] : memref<6x256xf32, #tpu.memory_space<vmem>>, vector<6x256xf32>
    tpu.vector_store %arg4[%c0_9, %c0_10], %50 {strides = array<i32>} : memref<6x256xf32, #tpu.memory_space<vmem>>, vector<6x256xf32>,
    return
  }
  func.func @transform_0(%arg0: i32) -> (i32, i32) {
    %c0_i32 = arith.constant 0 : i32
    %c0_i32_0 = arith.constant 0 : i32
    return %c0_i32, %arg0 : i32, i32
  }
  func.func @transform_1(%arg0: i32) -> (i32, i32) {
    %c0_i32 = arith.constant 0 : i32
    %c0_i32_0 = arith.constant 0 : i32
    %c0_i32_1 = arith.constant 0 : i32
    return %c0_i32, %c0_i32_0 : i32, i32
  }
  func.func @transform_2(%arg0: i32) -> (i32, i32) {
    %c0_i32 = arith.constant 0 : i32
    %c0_i32_0 = arith.constant 0 : i32
    %c0_i32_1 = arith.constant 0 : i32
    return %c0_i32, %c0_i32_0 : i32, i32
  }
  func.func @transform_3(%arg0: i32) -> (i32, i32) {
    %c0_i32 = arith.constant 0 : i32
    %c0_i32_0 = arith.constant 0 : i32
    return %c0_i32, %arg0 : i32, i32
  }
}

</mosaic_0001>

<llo_original>
// kernel: tpu_custom_call.1
$region0: #{tpu_custom_call.1}
  #allocation0 [shape = 'u32[]', space=smem, size = 0x4, offset = 0x4, fixed_abs, tag = 'smem constant byte address 0x4 - core index']
  #allocation1 [shape = 'u32[144,128]{1,0:T(1,128)}', space=vmem, size = 0x12000, scoped, tag = 'internal scratch']
  %s0 = inlined_call_operand.vmem [shape: f32[2,256], index: 0, kind: input, shape index: {}]
  %s1 = inlined_call_operand.vmem [shape: f32[512,8], index: 1, kind: input, shape index: {}]
  %s2 = inlined_call_operand.vmem [shape: bf16[6,512], index: 2, kind: input, shape index: {}]
  %s3 = inlined_call_operand.hbm [shape: f32[6,256], index: 3, kind: output, shape index: {}]
  %s4 = sld [smem:[#allocation0]]
  $region22: #{tpu_custom_call.1} parent=0
    _
  %s6 = ssub.s32 1, %s4
  %s7 = scalar_select 0, %s6, %s4
  $region1: #{tpu_custom_call.1} parent=0
    #allocation2 [shape = 'u8[8192]{0}', space=vmem, size = 0x2000, scoped, tag = 'output window, operand 0, single buffered']
    #allocation3 [shape = 's32[1]{0}', space=sflag, size = 0x4, scoped, tag = 'scoped memory for tpu_custom_call.1']
    %8 = vsyncpa [#allocation3], 0
    // Predicated region
    $region2: #{tpu_custom_call.1} parent=1 // pred_check
      _
    $region3: #{tpu_custom_call.1} parent=1 // pred_check_branch
      %10 = sbr.rel (0) target = $region5
    $region4: #{tpu_custom_call.1} parent=1 // pred_region
      _
    $region5: #{tpu_custom_call.1} parent=1 // pred_fallthru
      _
    // Predicated region
    $region6: #{tpu_custom_call.1} parent=1 // pred_check
      _
    $region7: #{tpu_custom_call.1} parent=1 // pred_check_branch
      %12 = sbr.rel (0) target = $region9
    $region8: #{tpu_custom_call.1} parent=1 // pred_region
      _
    $region9: #{tpu_custom_call.1} parent=1 // pred_fallthru
      _
    // Predicated region
    $region10: #{tpu_custom_call.1} parent=1 // pred_check
      _
    $region11: #{tpu_custom_call.1} parent=1 // pred_check_branch
      %14 = sbr.rel (0) target = $region13
    $region12: #{tpu_custom_call.1} parent=1 // pred_region
      _
    $region13: #{tpu_custom_call.1} parent=1 // pred_fallthru
      _
    %v18 = vld [vmem:[%s0] ss:$2 sm:$0x3]
    %s19 = scalar_lea.vmem %s0, 1
    %v20 = vld [vmem:[%s19] ss:$2 sm:$0x3]
    %v21 = vld [vmem:[%s1] sm:$0xff]
    %v22 = vld [vmem:[%s1 + $0x8] sm:$0xff]
    %v23 = vld [vmem:[%s1 + $0x10] sm:$0xff]
    %v24 = vld [vmem:[%s1 + $0x18] sm:$0xff]
    %v25 = vld [vmem:[%s1 + $0x20] sm:$0xff]
    %v26 = vld [vmem:[%s1 + $0x28] sm:$0xff]
    %v27 = vld [vmem:[%s1 + $0x30] sm:$0xff]
    %v28 = vld [vmem:[%s1 + $0x38] sm:$0xff]
    %v29 = vld [vmem:[%s1 + $0x40] sm:$0xff]
    %v30 = vld [vmem:[%s1 + $0x48] sm:$0xff]
    %v31 = vld [vmem:[%s1 + $0x50] sm:$0xff]
    %v32 = vld [vmem:[%s1 + $0x58] sm:$0xff]
    %v33 = vld [vmem:[%s1 + $0x60] sm:$0xff]
    %v34 = vld [vmem:[%s1 + $0x68] sm:$0xff]
    %v35 = vld [vmem:[%s1 + $0x70] sm:$0xff]
    %v36 = vld [vmem:[%s1 + $0x78] sm:$0xff]
    %v37 = vld [vmem:[%s1 + $0x80] sm:$0xff]
    %v38 = vld [vmem:[%s1 + $0x88] sm:$0xff]
    %v39 = vld [vmem:[%s1 + $0x90] sm:$0xff]
    %v40 = vld [vmem:[%s1 + $0x98] sm:$0xff]
    %v41 = vld [vmem:[%s1 + $0xa0] sm:$0xff]
    %v42 = vld [vmem:[%s1 + $0xa8] sm:$0xff]
    %v43 = vld [vmem:[%s1 + $0xb0] sm:$0xff]
    %v44 = vld [vmem:[%s1 + $0xb8] sm:$0xff]
    %v45 = vld [vmem:[%s1 + $0xc0] sm:$0xff]
    %v46 = vld [vmem:[%s1 + $0xc8] sm:$0xff]
    %v47 = vld [vmem:[%s1 + $0xd0] sm:$0xff]
    %v48 = vld [vmem:[%s1 + $0xd8] sm:$0xff]
    %v49 = vld [vmem:[%s1 + $0xe0] sm:$0xff]
    %v50 = vld [vmem:[%s1 + $0xe8] sm:$0xff]
    %v51 = vld [vmem:[%s1 + $0xf0] sm:$0xff]
    %v52 = vld [vmem:[%s1 + $0xf8] sm:$0xff]
    %v53 = vld [vmem:[%s1 + $0x100] sm:$0xff]
    %v54 = vld [vmem:[%s1 + $0x108] sm:$0xff]
    %v55 = vld [vmem:[%s1 + $0x110] sm:$0xff]
    %v56 = vld [vmem:[%s1 + $0x118] sm:$0xff]
    %v57 = vld [vmem:[%s1 + $0x120] sm:$0xff]
    %v58 = vld [vmem:[%s1 + $0x128] sm:$0xff]
    %v59 = vld [vmem:[%s1 + $0x130] sm:$0xff]
    %v60 = vld [vmem:[%s1 + $0x138] sm:$0xff]
    %v61 = vld [vmem:[%s1 + $0x140] sm:$0xff]
    %v62 = vld [vmem:[%s1 + $0x148] sm:$0xff]
    %v63 = vld [vmem:[%s1 + $0x150] sm:$0xff]
    %v64 = vld [vmem:[%s1 + $0x158] sm:$0xff]
    %v65 = vld [vmem:[%s1 + $0x160] sm:$0xff]
    %v66 = vld [vmem:[%s1 + $0x168] sm:$0xff]
    %v67 = vld [vmem:[%s1 + $0x170] sm:$0xff]
    %v68 = vld [vmem:[%s1 + $0x178] sm:$0xff]
    %v69 = vld [vmem:[%s1 + $0x180] sm:$0xff]
    %v70 = vld [vmem:[%s1 + $0x188] sm:$0xff]
    %v71 = vld [vmem:[%s1 + $0x190] sm:$0xff]
    %v72 = vld [vmem:[%s1 + $0x198] sm:$0xff]
    %v73 = vld [vmem:[%s1 + $0x1a0] sm:$0xff]
    %v74 = vld [vmem:[%s1 + $0x1a8] sm:$0xff]
    %v75 = vld [vmem:[%s1 + $0x1b0] sm:$0xff]
    %v76 = vld [vmem:[%s1 + $0x1b8] sm:$0xff]
    %v77 = vld [vmem:[%s1 + $0x1c0] sm:$0xff]
    %v78 = vld [vmem:[%s1 + $0x1c8] sm:$0xff]
    %v79 = vld [vmem:[%s1 + $0x1d0] sm:$0xff]
    %v80 = vld [vmem:[%s1 + $0x1d8] sm:$0xff]
    %v81 = vld [vmem:[%s1 + $0x1e0] sm:$0xff]
    %v82 = vld [vmem:[%s1 + $0x1e8] sm:$0xff]
    %v83 = vld [vmem:[%s1 + $0x1f0] sm:$0xff]
    %v84 = vld [vmem:[%s1 + $0x1f8] sm:$0xff]
    %v85 = vld [vmem:[%s2] sm:$0x77]
    %v86 = vld [vmem:[%s2 + $0x8] sm:$0x77]
    %88 = vset.pattern.permute.xlu0 0
    %89 = vperm.xlu0 %88, %v21
    %v90 = vpop.permute.xlu0 %89
    %93 = vset.pattern.permute.xlu0 0
    %94 = vperm.xlu0 %93, %v22
    %v95 = vpop.permute.xlu0 %94
    %98 = vset.pattern.permute.xlu0 0
    %99 = vperm.xlu0 %98, %v23
    %v100 = vpop.permute.xlu0 %99
    %103 = vset.pattern.permute.xlu0 0
    %104 = vperm.xlu0 %103, %v24
    %v105 = vpop.permute.xlu0 %104
    %108 = vset.pattern.permute.xlu0 0
    %109 = vperm.xlu0 %108, %v25
    %v110 = vpop.permute.xlu0 %109
    %113 = vset.pattern.permute.xlu0 0
    %114 = vperm.xlu0 %113, %v26
    %v115 = vpop.permute.xlu0 %114
    %118 = vset.pattern.permute.xlu0 0
    %119 = vperm.xlu0 %118, %v27
    %v120 = vpop.permute.xlu0 %119
    %123 = vset.pattern.permute.xlu0 0
    %124 = vperm.xlu0 %123, %v28
    %v125 = vpop.permute.xlu0 %124
    %128 = vset.pattern.permute.xlu0 0
    %129 = vperm.xlu0 %128, %v29
    %v130 = vpop.permute.xlu0 %129
    %133 = vset.pattern.permute.xlu0 0
    %134 = vperm.xlu0 %133, %v30
    %v135 = vpop.permute.xlu0 %134
    %138 = vset.pattern.permute.xlu0 0
    %139 = vperm.xlu0 %138, %v31
    %v140 = vpop.permute.xlu0 %139
    %143 = vset.pattern.permute.xlu0 0
    %144 = vperm.xlu0 %143, %v32
    %v145 = vpop.permute.xlu0 %144
    %148 = vset.pattern.permute.xlu0 0
    %149 = vperm.xlu0 %148, %v33
    %v150 = vpop.permute.xlu0 %149
    %153 = vset.pattern.permute.xlu0 0
    %154 = vperm.xlu0 %153, %v34
    %v155 = vpop.permute.xlu0 %154
    %158 = vset.pattern.permute.xlu0 0
    %159 = vperm.xlu0 %158, %v35
    %v160 = vpop.permute.xlu0 %159
    %163 = vset.pattern.permute.xlu0 0
    %164 = vperm.xlu0 %163, %v36
    %v165 = vpop.permute.xlu0 %164
    %168 = vset.pattern.permute.xlu0 0
    %169 = vperm.xlu0 %168, %v37
    %v170 = vpop.permute.xlu0 %169
    %173 = vset.pattern.permute.xlu0 0
    %174 = vperm.xlu0 %173, %v38
    %v175 = vpop.permute.xlu0 %174
    %178 = vset.pattern.permute.xlu0 0
    %179 = vperm.xlu0 %178, %v39
    %v180 = vpop.permute.xlu0 %179
    %183 = vset.pattern.permute.xlu0 0
    %184 = vperm.xlu0 %183, %v40
    %v185 = vpop.permute.xlu0 %184
    %188 = vset.pattern.permute.xlu0 0
    %189 = vperm.xlu0 %188, %v41
    %v190 = vpop.permute.xlu0 %189
    %193 = vset.pattern.permute.xlu0 0
    %194 = vperm.xlu0 %193, %v42
    %v195 = vpop.permute.xlu0 %194
    %198 = vset.pattern.permute.xlu0 0
    %199 = vperm.xlu0 %198, %v43
    %v200 = vpop.permute.xlu0 %199
    %203 = vset.pattern.permute.xlu0 0
    %204 = vperm.xlu0 %203, %v44
    %v205 = vpop.permute.xlu0 %204
    %208 = vset.pattern.permute.xlu0 0
    %209 = vperm.xlu0 %208, %v45
    %v210 = vpop.permute.xlu0 %209
    %213 = vset.pattern.permute.xlu0 0
    %214 = vperm.xlu0 %213, %v46
    %v215 = vpop.permute.xlu0 %214
    %218 = vset.pattern.permute.xlu0 0
    %219 = vperm.xlu0 %218, %v47
    %v220 = vpop.permute.xlu0 %219
    %223 = vset.pattern.permute.xlu0 0
    %224 = vperm.xlu0 %223, %v48
    %v225 = vpop.permute.xlu0 %224
    %228 = vset.pattern.permute.xlu0 0
    %229 = vperm.xlu0 %228, %v49
    %v230 = vpop.permute.xlu0 %229
    %233 = vset.pattern.permute.xlu0 0
    %234 = vperm.xlu0 %233, %v50
    %v235 = vpop.permute.xlu0 %234
    %238 = vset.pattern.permute.xlu0 0
    %239 = vperm.xlu0 %238, %v51
    %v240 = vpop.permute.xlu0 %239
    %243 = vset.pattern.permute.xlu0 0
    %244 = vperm.xlu0 %243, %v52
    %v245 = vpop.permute.xlu0 %244
    %248 = vset.pattern.permute.xlu0 0
    %249 = vperm.xlu0 %248, %v53
    %v250 = vpop.permute.xlu0 %249
    %253 = vset.pattern.permute.xlu0 0
    %254 = vperm.xlu0 %253, %v54
    %v255 = vpop.permute.xlu0 %254
    %258 = vset.pattern.permute.xlu0 0
    %259 = vperm.xlu0 %258, %v55
    %v260 = vpop.permute.xlu0 %259
    %263 = vset.pattern.permute.xlu0 0
    %264 = vperm.xlu0 %263, %v56
    %v265 = vpop.permute.xlu0 %264
    %268 = vset.pattern.permute.xlu0 0
    %269 = vperm.xlu0 %268, %v57
    %v270 = vpop.permute.xlu0 %269
    %273 = vset.pattern.permute.xlu0 0
    %274 = vperm.xlu0 %273, %v58
    %v275 = vpop.permute.xlu0 %274
    %278 = vset.pattern.permute.xlu0 0
    %279 = vperm.xlu0 %278, %v59
    %v280 = vpop.permute.xlu0 %279
    %283 = vset.pattern.permute.xlu0 0
    %284 = vperm.xlu0 %283, %v60
    %v285 = vpop.permute.xlu0 %284
    %288 = vset.pattern.permute.xlu0 0
    %289 = vperm.xlu0 %288, %v61
    %v290 = vpop.permute.xlu0 %289
    %293 = vset.pattern.permute.xlu0 0
    %294 = vperm.xlu0 %293, %v62
    %v295 = vpop.permute.xlu0 %294
    %298 = vset.pattern.permute.xlu0 0
    %299 = vperm.xlu0 %298, %v63
    %v300 = vpop.permute.xlu0 %299
    %303 = vset.pattern.permute.xlu0 0
    %304 = vperm.xlu0 %303, %v64
    %v305 = vpop.permute.xlu0 %304
    %308 = vset.pattern.permute.xlu0 0
    %309 = vperm.xlu0 %308, %v65
    %v310 = vpop.permute.xlu0 %309
    %313 = vset.pattern.permute.xlu0 0
    %314 = vperm.xlu0 %313, %v66
    %v315 = vpop.permute.xlu0 %314
    %318 = vset.pattern.permute.xlu0 0
    %319 = vperm.xlu0 %318, %v67
    %v320 = vpop.permute.xlu0 %319
    %323 = vset.pattern.permute.xlu0 0
    %324 = vperm.xlu0 %323, %v68
    %v325 = vpop.permute.xlu0 %324
    %328 = vset.pattern.permute.xlu0 0
    %329 = vperm.xlu0 %328, %v69
    %v330 = vpop.permute.xlu0 %329
    %333 = vset.pattern.permute.xlu0 0
    %334 = vperm.xlu0 %333, %v70
    %v335 = vpop.permute.xlu0 %334
    %338 = vset.pattern.permute.xlu0 0
    %339 = vperm.xlu0 %338, %v71
    %v340 = vpop.permute.xlu0 %339
    %343 = vset.pattern.permute.xlu0 0
    %344 = vperm.xlu0 %343, %v72
    %v345 = vpop.permute.xlu0 %344
    %348 = vset.pattern.permute.xlu0 0
    %349 = vperm.xlu0 %348, %v73
    %v350 = vpop.permute.xlu0 %349
    %353 = vset.pattern.permute.xlu0 0
    %354 = vperm.xlu0 %353, %v74
    %v355 = vpop.permute.xlu0 %354
    %358 = vset.pattern.permute.xlu0 0
    %359 = vperm.xlu0 %358, %v75
    %v360 = vpop.permute.xlu0 %359
    %363 = vset.pattern.permute.xlu0 0
    %364 = vperm.xlu0 %363, %v76
    %v365 = vpop.permute.xlu0 %364
    %368 = vset.pattern.permute.xlu0 0
    %369 = vperm.xlu0 %368, %v77
    %v370 = vpop.permute.xlu0 %369
    %373 = vset.pattern.permute.xlu0 0
    %374 = vperm.xlu0 %373, %v78
    %v375 = vpop.permute.xlu0 %374
    %378 = vset.pattern.permute.xlu0 0
    %379 = vperm.xlu0 %378, %v79
    %v380 = vpop.permute.xlu0 %379
    %383 = vset.pattern.permute.xlu0 0
    %384 = vperm.xlu0 %383, %v80
    %v385 = vpop.permute.xlu0 %384
    %388 = vset.pattern.permute.xlu0 0
    %389 = vperm.xlu0 %388, %v81
    %v390 = vpop.permute.xlu0 %389
    %393 = vset.pattern.permute.xlu0 0
    %394 = vperm.xlu0 %393, %v82
    %v395 = vpop.permute.xlu0 %394
    %398 = vset.pattern.permute.xlu0 0
    %399 = vperm.xlu0 %398, %v83
    %v400 = vpop.permute.xlu0 %399
    %403 = vset.pattern.permute.xlu0 0
    %404 = vperm.xlu0 %403, %v84
    %v405 = vpop.permute.xlu0 %404
    %v408 = vlaneseq
    %v409 = vshrl.u32 %v408, 7
    %v410 = vsub.s32 0, %v409
    %v411 = vrot.slane %v18, %v410
    %v412 = vlaneseq
    %v413 = vshrl.u32 %v412, 7
    %v414 = vsub.s32 1, %v413
    %v415 = vrot.slane %v18, %v414
    %v418 = vsub.f32 %v90, %v411
    %v419 = vsub.f32 %v90, %v415
    %v420 = vsub.f32 %v95, %v411
    %v421 = vsub.f32 %v95, %v415
    %v422 = vsub.f32 %v100, %v411
    %v423 = vsub.f32 %v100, %v415
    %v424 = vsub.f32 %v105, %v411
    %v425 = vsub.f32 %v105, %v415
    %v426 = vsub.f32 %v110, %v411
    %v427 = vsub.f32 %v110, %v415
    %v428 = vsub.f32 %v115, %v411
    %v429 = vsub.f32 %v115, %v415
    %v430 = vsub.f32 %v120, %v411
    %v431 = vsub.f32 %v120, %v415
    %v432 = vsub.f32 %v125, %v411
    %v433 = vsub.f32 %v125, %v415
    %v434 = vsub.f32 %v130, %v411
    %v435 = vsub.f32 %v130, %v415
    %v436 = vsub.f32 %v135, %v411
    %v437 = vsub.f32 %v135, %v415
    %v438 = vsub.f32 %v140, %v411
    %v439 = vsub.f32 %v140, %v415
    %v440 = vsub.f32 %v145, %v411
    %v441 = vsub.f32 %v145, %v415
    %v442 = vsub.f32 %v150, %v411
    %v443 = vsub.f32 %v150, %v415
    %v444 = vsub.f32 %v155, %v411
    %v445 = vsub.f32 %v155, %v415
    %v446 = vsub.f32 %v160, %v411
    %v447 = vsub.f32 %v160, %v415
    %v448 = vsub.f32 %v165, %v411
    %v449 = vsub.f32 %v165, %v415
    %v450 = vsub.f32 %v170, %v411
    %v451 = vsub.f32 %v170, %v415
    %v452 = vsub.f32 %v175, %v411
    %v453 = vsub.f32 %v175, %v415
    %v454 = vsub.f32 %v180, %v411
    %v455 = vsub.f32 %v180, %v415
    %v456 = vsub.f32 %v185, %v411
    %v457 = vsub.f32 %v185, %v415
    %v458 = vsub.f32 %v190, %v411
    %v459 = vsub.f32 %v190, %v415
    %v460 = vsub.f32 %v195, %v411
    %v461 = vsub.f32 %v195, %v415
    %v462 = vsub.f32 %v200, %v411
    %v463 = vsub.f32 %v200, %v415
    %v464 = vsub.f32 %v205, %v411
    %v465 = vsub.f32 %v205, %v415
    %v466 = vsub.f32 %v210, %v411
    %v467 = vsub.f32 %v210, %v415
    %v468 = vsub.f32 %v215, %v411
    %v469 = vsub.f32 %v215, %v415
    %v470 = vsub.f32 %v220, %v411
    %v471 = vsub.f32 %v220, %v415
    %v472 = vsub.f32 %v225, %v411
    %v473 = vsub.f32 %v225, %v415
    %v474 = vsub.f32 %v230, %v411
    %v475 = vsub.f32 %v230, %v415
    %v476 = vsub.f32 %v235, %v411
    %v477 = vsub.f32 %v235, %v415
    %v478 = vsub.f32 %v240, %v411
    %v479 = vsub.f32 %v240, %v415
    %v480 = vsub.f32 %v245, %v411
    %v481 = vsub.f32 %v245, %v415
    %v482 = vsub.f32 %v250, %v411
    %v483 = vsub.f32 %v250, %v415
    %v484 = vsub.f32 %v255, %v411
    %v485 = vsub.f32 %v255, %v415
    %v486 = vsub.f32 %v260, %v411
    %v487 = vsub.f32 %v260, %v415
    %v488 = vsub.f32 %v265, %v411
    %v489 = vsub.f32 %v265, %v415
    %v490 = vsub.f32 %v270, %v411
    %v491 = vsub.f32 %v270, %v415
    %v492 = vsub.f32 %v275, %v411
    %v493 = vsub.f32 %v275, %v415
    %v494 = vsub.f32 %v280, %v411
    %v495 = vsub.f32 %v280, %v415
    %v496 = vsub.f32 %v285, %v411
    %v497 = vsub.f32 %v285, %v415
    %v498 = vsub.f32 %v290, %v411
    %v499 = vsub.f32 %v290, %v415
    %v500 = vsub.f32 %v295, %v411
    %v501 = vsub.f32 %v295, %v415
    %v502 = vsub.f32 %v300, %v411
    %v503 = vsub.f32 %v300, %v415
    %v504 = vsub.f32 %v305, %v411
    %v505 = vsub.f32 %v305, %v415
    %v506 = vsub.f32 %v310, %v411
    %v507 = vsub.f32 %v310, %v415
    %v508 = vsub.f32 %v315, %v411
    %v509 = vsub.f32 %v315, %v415
    %v510 = vsub.f32 %v320, %v411
    %v511 = vsub.f32 %v320, %v415
    %v512 = vsub.f32 %v325, %v411
    %v513 = vsub.f32 %v325, %v415
    %v514 = vsub.f32 %v330, %v411
    %v515 = vsub.f32 %v330, %v415
    %v516 = vsub.f32 %v335, %v411
    %v517 = vsub.f32 %v335, %v415
    %v518 = vsub.f32 %v340, %v411
    %v519 = vsub.f32 %v340, %v415
    %v520 = vsub.f32 %v345, %v411
    %v521 = vsub.f32 %v345, %v415
    %v522 = vsub.f32 %v350, %v411
    %v523 = vsub.f32 %v350, %v415
    %v524 = vsub.f32 %v355, %v411
    %v525 = vsub.f32 %v355, %v415
    %v526 = vsub.f32 %v360, %v411
    %v527 = vsub.f32 %v360, %v415
    %v528 = vsub.f32 %v365, %v411
    %v529 = vsub.f32 %v365, %v415
    %v530 = vsub.f32 %v370, %v411
    %v531 = vsub.f32 %v370, %v415
    %v532 = vsub.f32 %v375, %v411
    %v533 = vsub.f32 %v375, %v415
    %v534 = vsub.f32 %v380, %v411
    %v535 = vsub.f32 %v380, %v415
    %v536 = vsub.f32 %v385, %v411
    %v537 = vsub.f32 %v385, %v415
    %v538 = vsub.f32 %v390, %v411
    %v539 = vsub.f32 %v390, %v415
    %v540 = vsub.f32 %v395, %v411
    %v541 = vsub.f32 %v395, %v415
    %v542 = vsub.f32 %v400, %v411
    %v543 = vsub.f32 %v400, %v415
    %v544 = vsub.f32 %v405, %v411
    %v545 = vsub.f32 %v405, %v415
    %546 = vset.pattern.permute.xlu0 1
    %547 = vperm.xlu0 %546, %v21
    %v548 = vpop.permute.xlu0 %547
    %550 = vset.pattern.permute.xlu0 1
    %551 = vperm.xlu0 %550, %v22
    %v552 = vpop.permute.xlu0 %551
    %554 = vset.pattern.permute.xlu0 1
    %555 = vperm.xlu0 %554, %v23
    %v556 = vpop.permute.xlu0 %555
    %558 = vset.pattern.permute.xlu0 1
    %559 = vperm.xlu0 %558, %v24
    %v560 = vpop.permute.xlu0 %559
    %562 = vset.pattern.permute.xlu0 1
    %563 = vperm.xlu0 %562, %v25
    %v564 = vpop.permute.xlu0 %563
    %566 = vset.pattern.permute.xlu0 1
    %567 = vperm.xlu0 %566, %v26
    %v568 = vpop.permute.xlu0 %567
    %570 = vset.pattern.permute.xlu0 1
    %571 = vperm.xlu0 %570, %v27
    %v572 = vpop.permute.xlu0 %571
    %574 = vset.pattern.permute.xlu0 1
    %575 = vperm.xlu0 %574, %v28
    %v576 = vpop.permute.xlu0 %575
    %578 = vset.pattern.permute.xlu0 1
    %579 = vperm.xlu0 %578, %v29
    %v580 = vpop.permute.xlu0 %579
    %582 = vset.pattern.permute.xlu0 1
    %583 = vperm.xlu0 %582, %v30
    %v584 = vpop.permute.xlu0 %583
    %586 = vset.pattern.permute.xlu0 1
    %587 = vperm.xlu0 %586, %v31
    %v588 = vpop.permute.xlu0 %587
    %590 = vset.pattern.permute.xlu0 1
    %591 = vperm.xlu0 %590, %v32
    %v592 = vpop.permute.xlu0 %591
    %594 = vset.pattern.permute.xlu0 1
    %595 = vperm.xlu0 %594, %v33
    %v596 = vpop.permute.xlu0 %595
    %598 = vset.pattern.permute.xlu0 1
    %599 = vperm.xlu0 %598, %v34
    %v600 = vpop.permute.xlu0 %599
    %602 = vset.pattern.permute.xlu0 1
    %603 = vperm.xlu0 %602, %v35
    %v604 = vpop.permute.xlu0 %603
    %606 = vset.pattern.permute.xlu0 1
    %607 = vperm.xlu0 %606, %v36
    %v608 = vpop.permute.xlu0 %607
    %610 = vset.pattern.permute.xlu0 1
    %611 = vperm.xlu0 %610, %v37
    %v612 = vpop.permute.xlu0 %611
    %614 = vset.pattern.permute.xlu0 1
    %615 = vperm.xlu0 %614, %v38
    %v616 = vpop.permute.xlu0 %615
    %618 = vset.pattern.permute.xlu0 1
    %619 = vperm.xlu0 %618, %v39
    %v620 = vpop.permute.xlu0 %619
    %622 = vset.pattern.permute.xlu0 1
    %623 = vperm.xlu0 %622, %v40
    %v624 = vpop.permute.xlu0 %623
    %626 = vset.pattern.permute.xlu0 1
    %627 = vperm.xlu0 %626, %v41
    %v628 = vpop.permute.xlu0 %627
    %630 = vset.pattern.permute.xlu0 1
    %631 = vperm.xlu0 %630, %v42
    %v632 = vpop.permute.xlu0 %631
    %634 = vset.pattern.permute.xlu0 1
    %635 = vperm.xlu0 %634, %v43
    %v636 = vpop.permute.xlu0 %635
    %638 = vset.pattern.permute.xlu0 1
    %639 = vperm.xlu0 %638, %v44
    %v640 = vpop.permute.xlu0 %639
    %642 = vset.pattern.permute.xlu0 1
    %643 = vperm.xlu0 %642, %v45
    %v644 = vpop.permute.xlu0 %643
    %646 = vset.pattern.permute.xlu0 1
    %647 = vperm.xlu0 %646, %v46
    %v648 = vpop.permute.xlu0 %647
    %650 = vset.pattern.permute.xlu0 1
    %651 = vperm.xlu0 %650, %v47
    %v652 = vpop.permute.xlu0 %651
    %654 = vset.pattern.permute.xlu0 1
    %655 = vperm.xlu0 %654, %v48
    %v656 = vpop.permute.xlu0 %655
    %658 = vset.pattern.permute.xlu0 1
    %659 = vperm.xlu0 %658, %v49
    %v660 = vpop.permute.xlu0 %659
    %662 = vset.pattern.permute.xlu0 1
    %663 = vperm.xlu0 %662, %v50
    %v664 = vpop.permute.xlu0 %663
    %666 = vset.pattern.permute.xlu0 1
    %667 = vperm.xlu0 %666, %v51
    %v668 = vpop.permute.xlu0 %667
    %670 = vset.pattern.permute.xlu0 1
    %671 = vperm.xlu0 %670, %v52
    %v672 = vpop.permute.xlu0 %671
    %674 = vset.pattern.permute.xlu0 1
    %675 = vperm.xlu0 %674, %v53
    %v676 = vpop.permute.xlu0 %675
    %678 = vset.pattern.permute.xlu0 1
    %679 = vperm.xlu0 %678, %v54
    %v680 = vpop.permute.xlu0 %679
    %682 = vset.pattern.permute.xlu0 1
    %683 = vperm.xlu0 %682, %v55
    %v684 = vpop.permute.xlu0 %683
    %686 = vset.pattern.permute.xlu0 1
    %687 = vperm.xlu0 %686, %v56
    %v688 = vpop.permute.xlu0 %687
    %690 = vset.pattern.permute.xlu0 1
    %691 = vperm.xlu0 %690, %v57
    %v692 = vpop.permute.xlu0 %691
    %694 = vset.pattern.permute.xlu0 1
    %695 = vperm.xlu0 %694, %v58
    %v696 = vpop.permute.xlu0 %695
    %698 = vset.pattern.permute.xlu0 1
    %699 = vperm.xlu0 %698, %v59
    %v700 = vpop.permute.xlu0 %699
    %702 = vset.pattern.permute.xlu0 1
    %703 = vperm.xlu0 %702, %v60
    %v704 = vpop.permute.xlu0 %703
    %706 = vset.pattern.permute.xlu0 1
    %707 = vperm.xlu0 %706, %v61
    %v708 = vpop.permute.xlu0 %707
    %710 = vset.pattern.permute.xlu0 1
    %711 = vperm.xlu0 %710, %v62
    %v712 = vpop.permute.xlu0 %711
    %714 = vset.pattern.permute.xlu0 1
    %715 = vperm.xlu0 %714, %v63
    %v716 = vpop.permute.xlu0 %715
    %718 = vset.pattern.permute.xlu0 1
    %719 = vperm.xlu0 %718, %v64
    %v720 = vpop.permute.xlu0 %719
    %722 = vset.pattern.permute.xlu0 1
    %723 = vperm.xlu0 %722, %v65
    %v724 = vpop.permute.xlu0 %723
    %726 = vset.pattern.permute.xlu0 1
    %727 = vperm.xlu0 %726, %v66
    %v728 = vpop.permute.xlu0 %727
    %730 = vset.pattern.permute.xlu0 1
    %731 = vperm.xlu0 %730, %v67
    %v732 = vpop.permute.xlu0 %731
    %734 = vset.pattern.permute.xlu0 1
    %735 = vperm.xlu0 %734, %v68
    %v736 = vpop.permute.xlu0 %735
    %738 = vset.pattern.permute.xlu0 1
    %739 = vperm.xlu0 %738, %v69
    %v740 = vpop.permute.xlu0 %739
    %742 = vset.pattern.permute.xlu0 1
    %743 = vperm.xlu0 %742, %v70
    %v744 = vpop.permute.xlu0 %743
    %746 = vset.pattern.permute.xlu0 1
    %747 = vperm.xlu0 %746, %v71
    %v748 = vpop.permute.xlu0 %747
    %750 = vset.pattern.permute.xlu0 1
    %751 = vperm.xlu0 %750, %v72
    %v752 = vpop.permute.xlu0 %751
    %754 = vset.pattern.permute.xlu0 1
    %755 = vperm.xlu0 %754, %v73
    %v756 = vpop.permute.xlu0 %755
    %758 = vset.pattern.permute.xlu0 1
    %759 = vperm.xlu0 %758, %v74
    %v760 = vpop.permute.xlu0 %759
    %762 = vset.pattern.permute.xlu0 1
    %763 = vperm.xlu0 %762, %v75
    %v764 = vpop.permute.xlu0 %763
    %766 = vset.pattern.permute.xlu0 1
    %767 = vperm.xlu0 %766, %v76
    %v768 = vpop.permute.xlu0 %767
    %770 = vset.pattern.permute.xlu0 1
    %771 = vperm.xlu0 %770, %v77
    %v772 = vpop.permute.xlu0 %771
    %774 = vset.pattern.permute.xlu0 1
    %775 = vperm.xlu0 %774, %v78
    %v776 = vpop.permute.xlu0 %775
    %778 = vset.pattern.permute.xlu0 1
    %779 = vperm.xlu0 %778, %v79
    %v780 = vpop.permute.xlu0 %779
    %782 = vset.pattern.permute.xlu0 1
    %783 = vperm.xlu0 %782, %v80
    %v784 = vpop.permute.xlu0 %783
    %786 = vset.pattern.permute.xlu0 1
    %787 = vperm.xlu0 %786, %v81
    %v788 = vpop.permute.xlu0 %787
    %790 = vset.pattern.permute.xlu0 1
    %791 = vperm.xlu0 %790, %v82
    %v792 = vpop.permute.xlu0 %791
    %794 = vset.pattern.permute.xlu0 1
    %795 = vperm.xlu0 %794, %v83
    %v796 = vpop.permute.xlu0 %795
    %798 = vset.pattern.permute.xlu0 1
    %799 = vperm.xlu0 %798, %v84
    %v800 = vpop.permute.xlu0 %799
    %v803 = vlaneseq
    %v804 = vshrl.u32 %v803, 7
    %v805 = vsub.s32 0, %v804
    %v806 = vrot.slane %v20, %v805
    %v807 = vlaneseq
    %v808 = vshrl.u32 %v807, 7
    %v809 = vsub.s32 1, %v808
    %v810 = vrot.slane %v20, %v809
    %v813 = vsub.f32 %v548, %v806
    %v814 = vsub.f32 %v548, %v810
    %v815 = vsub.f32 %v552, %v806
    %v816 = vsub.f32 %v552, %v810
    %v817 = vsub.f32 %v556, %v806
    %v818 = vsub.f32 %v556, %v810
    %v819 = vsub.f32 %v560, %v806
    %v820 = vsub.f32 %v560, %v810
    %v821 = vsub.f32 %v564, %v806
    %v822 = vsub.f32 %v564, %v810
    %v823 = vsub.f32 %v568, %v806
    %v824 = vsub.f32 %v568, %v810
    %v825 = vsub.f32 %v572, %v806
    %v826 = vsub.f32 %v572, %v810
    %v827 = vsub.f32 %v576, %v806
    %v828 = vsub.f32 %v576, %v810
    %v829 = vsub.f32 %v580, %v806
    %v830 = vsub.f32 %v580, %v810
    %v831 = vsub.f32 %v584, %v806
    %v832 = vsub.f32 %v584, %v810
    %v833 = vsub.f32 %v588, %v806
    %v834 = vsub.f32 %v588, %v810
    %v835 = vsub.f32 %v592, %v806
    %v836 = vsub.f32 %v592, %v810
    %v837 = vsub.f32 %v596, %v806
    %v838 = vsub.f32 %v596, %v810
    %v839 = vsub.f32 %v600, %v806
    %v840 = vsub.f32 %v600, %v810
    %v841 = vsub.f32 %v604, %v806
    %v842 = vsub.f32 %v604, %v810
    %v843 = vsub.f32 %v608, %v806
    %v844 = vsub.f32 %v608, %v810
    %v845 = vsub.f32 %v612, %v806
    %v846 = vsub.f32 %v612, %v810
    %v847 = vsub.f32 %v616, %v806
    %v848 = vsub.f32 %v616, %v810
    %v849 = vsub.f32 %v620, %v806
    %v850 = vsub.f32 %v620, %v810
    %v851 = vsub.f32 %v624, %v806
    %v852 = vsub.f32 %v624, %v810
    %v853 = vsub.f32 %v628, %v806
    %v854 = vsub.f32 %v628, %v810
    %v855 = vsub.f32 %v632, %v806
    %v856 = vsub.f32 %v632, %v810
    %v857 = vsub.f32 %v636, %v806
    %v858 = vsub.f32 %v636, %v810
    %v859 = vsub.f32 %v640, %v806
    %v860 = vsub.f32 %v640, %v810
    %v861 = vsub.f32 %v644, %v806
    %v862 = vsub.f32 %v644, %v810
    %v863 = vsub.f32 %v648, %v806
    %v864 = vsub.f32 %v648, %v810
    %v865 = vsub.f32 %v652, %v806
    %v866 = vsub.f32 %v652, %v810
    %v867 = vsub.f32 %v656, %v806
    %v868 = vsub.f32 %v656, %v810
    %v869 = vsub.f32 %v660, %v806
    %v870 = vsub.f32 %v660, %v810
    %v871 = vsub.f32 %v664, %v806
    %v872 = vsub.f32 %v664, %v810
    %v873 = vsub.f32 %v668, %v806
    %v874 = vsub.f32 %v668, %v810
    %v875 = vsub.f32 %v672, %v806
    %v876 = vsub.f32 %v672, %v810
    %v877 = vsub.f32 %v676, %v806
    %v878 = vsub.f32 %v676, %v810
    %v879 = vsub.f32 %v680, %v806
    %v880 = vsub.f32 %v680, %v810
    %v881 = vsub.f32 %v684, %v806
    %v882 = vsub.f32 %v684, %v810
    %v883 = vsub.f32 %v688, %v806
    %v884 = vsub.f32 %v688, %v810
    %v885 = vsub.f32 %v692, %v806
    %v886 = vsub.f32 %v692, %v810
    %v887 = vsub.f32 %v696, %v806
    %v888 = vsub.f32 %v696, %v810
    %v889 = vsub.f32 %v700, %v806
    %v890 = vsub.f32 %v700, %v810
    %v891 = vsub.f32 %v704, %v806
    %v892 = vsub.f32 %v704, %v810
    %v893 = vsub.f32 %v708, %v806
    %v894 = vsub.f32 %v708, %v810
    %v895 = vsub.f32 %v712, %v806
    %v896 = vsub.f32 %v712, %v810
    %v897 = vsub.f32 %v716, %v806
    %v898 = vsub.f32 %v716, %v810
    %v899 = vsub.f32 %v720, %v806
    %v900 = vsub.f32 %v720, %v810
    %v901 = vsub.f32 %v724, %v806
    %v902 = vsub.f32 %v724, %v810
    %v903 = vsub.f32 %v728, %v806
    %v904 = vsub.f32 %v728, %v810
    %v905 = vsub.f32 %v732, %v806
    %v906 = vsub.f32 %v732, %v810
    %v907 = vsub.f32 %v736, %v806
    %v908 = vsub.f32 %v736, %v810
    %v909 = vsub.f32 %v740, %v806
    %v910 = vsub.f32 %v740, %v810
    %v911 = vsub.f32 %v744, %v806
    %v912 = vsub.f32 %v744, %v810
    %v913 = vsub.f32 %v748, %v806
    %v914 = vsub.f32 %v748, %v810
    %v915 = vsub.f32 %v752, %v806
    %v916 = vsub.f32 %v752, %v810
    %v917 = vsub.f32 %v756, %v806
    %v918 = vsub.f32 %v756, %v810
    %v919 = vsub.f32 %v760, %v806
    %v920 = vsub.f32 %v760, %v810
    %v921 = vsub.f32 %v764, %v806
    %v922 = vsub.f32 %v764, %v810
    %v923 = vsub.f32 %v768, %v806
    %v924 = vsub.f32 %v768, %v810
    %v925 = vsub.f32 %v772, %v806
    %v926 = vsub.f32 %v772, %v810
    %v927 = vsub.f32 %v776, %v806
    %v928 = vsub.f32 %v776, %v810
    %v929 = vsub.f32 %v780, %v806
    %v930 = vsub.f32 %v780, %v810
    %v931 = vsub.f32 %v784, %v806
    %v932 = vsub.f32 %v784, %v810
    %v933 = vsub.f32 %v788, %v806
    %v934 = vsub.f32 %v788, %v810
    %v935 = vsub.f32 %v792, %v806
    %v936 = vsub.f32 %v792, %v810
    %v937 = vsub.f32 %v796, %v806
    %v938 = vsub.f32 %v796, %v810
    %v939 = vsub.f32 %v800, %v806
    %v940 = vsub.f32 %v800, %v810
    %v941 = vpack.c.bf16 %v420, %v418
    %v942 = vpack.c.bf16 %v421, %v419
    %v943 = vpack.c.bf16 %v424, %v422
    %v944 = vpack.c.bf16 %v425, %v423
    %v945 = vpack.c.bf16 %v428, %v426
    %v946 = vpack.c.bf16 %v429, %v427
    %v947 = vpack.c.bf16 %v432, %v430
    %v948 = vpack.c.bf16 %v433, %v431
    %v949 = vpack.c.bf16 %v436, %v434
    %v950 = vpack.c.bf16 %v437, %v435
    %v951 = vpack.c.bf16 %v440, %v438
    %v952 = vpack.c.bf16 %v441, %v439
    %v953 = vpack.c.bf16 %v444, %v442
    %v954 = vpack.c.bf16 %v445, %v443
    %v955 = vpack.c.bf16 %v448, %v446
    %v956 = vpack.c.bf16 %v449, %v447
    %v957 = vpack.c.bf16 %v452, %v450
    %v958 = vpack.c.bf16 %v453, %v451
    %v959 = vpack.c.bf16 %v456, %v454
    %v960 = vpack.c.bf16 %v457, %v455
    %v961 = vpack.c.bf16 %v460, %v458
    %v962 = vpack.c.bf16 %v461, %v459
    %v963 = vpack.c.bf16 %v464, %v462
    %v964 = vpack.c.bf16 %v465, %v463
    %v965 = vpack.c.bf16 %v468, %v466
    %v966 = vpack.c.bf16 %v469, %v467
    %v967 = vpack.c.bf16 %v472, %v470
    %v968 = vpack.c.bf16 %v473, %v471
    %v969 = vpack.c.bf16 %v476, %v474
    %v970 = vpack.c.bf16 %v477, %v475
    %v971 = vpack.c.bf16 %v480, %v478
    %v972 = vpack.c.bf16 %v481, %v479
    %v973 = vpack.c.bf16 %v484, %v482
    %v974 = vpack.c.bf16 %v485, %v483
    %v975 = vpack.c.bf16 %v488, %v486
    %v976 = vpack.c.bf16 %v489, %v487
    %v977 = vpack.c.bf16 %v492, %v490
    %v978 = vpack.c.bf16 %v493, %v491
    %v979 = vpack.c.bf16 %v496, %v494
    %v980 = vpack.c.bf16 %v497, %v495
    %v981 = vpack.c.bf16 %v500, %v498
    %v982 = vpack.c.bf16 %v501, %v499
    %v983 = vpack.c.bf16 %v504, %v502
    %v984 = vpack.c.bf16 %v505, %v503
    %v985 = vpack.c.bf16 %v508, %v506
    %v986 = vpack.c.bf16 %v509, %v507
    %v987 = vpack.c.bf16 %v512, %v510
    %v988 = vpack.c.bf16 %v513, %v511
    %v989 = vpack.c.bf16 %v516, %v514
    %v990 = vpack.c.bf16 %v517, %v515
    %v991 = vpack.c.bf16 %v520, %v518
    %v992 = vpack.c.bf16 %v521, %v519
    %v993 = vpack.c.bf16 %v524, %v522
    %v994 = vpack.c.bf16 %v525, %v523
    %v995 = vpack.c.bf16 %v528, %v526
    %v996 = vpack.c.bf16 %v529, %v527
    %v997 = vpack.c.bf16 %v532, %v530
    %v998 = vpack.c.bf16 %v533, %v531
    %v999 = vpack.c.bf16 %v536, %v534
    %v1000 = vpack.c.bf16 %v537, %v535
    %v1001 = vpack.c.bf16 %v540, %v538
    %v1002 = vpack.c.bf16 %v541, %v539
    %v1003 = vpack.c.bf16 %v544, %v542
    %v1004 = vpack.c.bf16 %v545, %v543
    %v1005 = vpack.c.bf16 %v815, %v813
    %v1006 = vpack.c.bf16 %v816, %v814
    %v1007 = vpack.c.bf16 %v819, %v817
    %v1008 = vpack.c.bf16 %v820, %v818
    %v1009 = vpack.c.bf16 %v823, %v821
    %v1010 = vpack.c.bf16 %v824, %v822
    %v1011 = vpack.c.bf16 %v827, %v825
    %v1012 = vpack.c.bf16 %v828, %v826
    %v1013 = vpack.c.bf16 %v831, %v829
    %v1014 = vpack.c.bf16 %v832, %v830
    %v1015 = vpack.c.bf16 %v835, %v833
    %v1016 = vpack.c.bf16 %v836, %v834
    %v1017 = vpack.c.bf16 %v839, %v837
    %v1018 = vpack.c.bf16 %v840, %v838
    %v1019 = vpack.c.bf16 %v843, %v841
    %v1020 = vpack.c.bf16 %v844, %v842
    %v1021 = vpack.c.bf16 %v847, %v845
    %v1022 = vpack.c.bf16 %v848, %v846
    %v1023 = vpack.c.bf16 %v851, %v849
    %v1024 = vpack.c.bf16 %v852, %v850
    %v1025 = vpack.c.bf16 %v855, %v853
    %v1026 = vpack.c.bf16 %v856, %v854
    %v1027 = vpack.c.bf16 %v859, %v857
    %v1028 = vpack.c.bf16 %v860, %v858
    %v1029 = vpack.c.bf16 %v863, %v861
    %v1030 = vpack.c.bf16 %v864, %v862
    %v1031 = vpack.c.bf16 %v867, %v865
    %v1032 = vpack.c.bf16 %v868, %v866
    %v1033 = vpack.c.bf16 %v871, %v869
    %v1034 = vpack.c.bf16 %v872, %v870
    %v1035 = vpack.c.bf16 %v875, %v873
    %v1036 = vpack.c.bf16 %v876, %v874
    %v1037 = vpack.c.bf16 %v879, %v877
    %v1038 = vpack.c.bf16 %v880, %v878
    %v1039 = vpack.c.bf16 %v883, %v881
    %v1040 = vpack.c.bf16 %v884, %v882
    %v1041 = vpack.c.bf16 %v887, %v885
    %v1042 = vpack.c.bf16 %v888, %v886
    %v1043 = vpack.c.bf16 %v891, %v889
    %v1044 = vpack.c.bf16 %v892, %v890
    %v1045 = vpack.c.bf16 %v895, %v893
    %v1046 = vpack.c.bf16 %v896, %v894
    %v1047 = vpack.c.bf16 %v899, %v897
    %v1048 = vpack.c.bf16 %v900, %v898
    %v1049 = vpack.c.bf16 %v903, %v901
    %v1050 = vpack.c.bf16 %v904, %v902
    %v1051 = vpack.c.bf16 %v907, %v905
    %v1052 = vpack.c.bf16 %v908, %v906
    %v1053 = vpack.c.bf16 %v911, %v909
    %v1054 = vpack.c.bf16 %v912, %v910
    %v1055 = vpack.c.bf16 %v915, %v913
    %v1056 = vpack.c.bf16 %v916, %v914
    %v1057 = vpack.c.bf16 %v919, %v917
    %v1058 = vpack.c.bf16 %v920, %v918
    %v1059 = vpack.c.bf16 %v923, %v921
    %v1060 = vpack.c.bf16 %v924, %v922
    %v1061 = vpack.c.bf16 %v927, %v925
    %v1062 = vpack.c.bf16 %v928, %v926
    %v1063 = vpack.c.bf16 %v931, %v929
    %v1064 = vpack.c.bf16 %v932, %v930
    %v1065 = vpack.c.bf16 %v935, %v933
    %v1066 = vpack.c.bf16 %v936, %v934
    %v1067 = vpack.c.bf16 %v939, %v937
    %v1068 = vpack.c.bf16 %v940, %v938
    %v1069 = vpack.c.bf16 %v22, %v21
    %v1070 = vpack.c.bf16 %v24, %v23
    %v1071 = vpack.c.bf16 %v26, %v25
    %v1072 = vpack.c.bf16 %v28, %v27
    %v1073 = vpack.c.bf16 %v30, %v29
    %v1074 = vpack.c.bf16 %v32, %v31
    %v1075 = vpack.c.bf16 %v34, %v33
    %v1076 = vpack.c.bf16 %v36, %v35
    %v1077 = vpack.c.bf16 %v38, %v37
    %v1078 = vpack.c.bf16 %v40, %v39
    %v1079 = vpack.c.bf16 %v42, %v41
    %v1080 = vpack.c.bf16 %v44, %v43
    %v1081 = vpack.c.bf16 %v46, %v45
    %v1082 = vpack.c.bf16 %v48, %v47
    %v1083 = vpack.c.bf16 %v50, %v49
    %v1084 = vpack.c.bf16 %v52, %v51
    %v1085 = vpack.c.bf16 %v54, %v53
    %v1086 = vpack.c.bf16 %v56, %v55
    %v1087 = vpack.c.bf16 %v58, %v57
    %v1088 = vpack.c.bf16 %v60, %v59
    %v1089 = vpack.c.bf16 %v62, %v61
    %v1090 = vpack.c.bf16 %v64, %v63
    %v1091 = vpack.c.bf16 %v66, %v65
    %v1092 = vpack.c.bf16 %v68, %v67
    %v1093 = vpack.c.bf16 %v70, %v69
    %v1094 = vpack.c.bf16 %v72, %v71
    %v1095 = vpack.c.bf16 %v74, %v73
    %v1096 = vpack.c.bf16 %v76, %v75
    %v1097 = vpack.c.bf16 %v78, %v77
    %v1098 = vpack.c.bf16 %v80, %v79
    %v1099 = vpack.c.bf16 %v82, %v81
    %v1100 = vpack.c.bf16 %v84, %v83
    %1102 = vset.pattern.permute.xlu0 2
    %1103 = vperm.xlu0 %1102, %v1069
    %v1104 = vpop.permute.xlu0 %1103
    %1107 = vset.pattern.permute.xlu0 2
    %1108 = vperm.xlu0 %1107, %v1070
    %v1109 = vpop.permute.xlu0 %1108
    %1112 = vset.pattern.permute.xlu0 2
    %1113 = vperm.xlu0 %1112, %v1071
    %v1114 = vpop.permute.xlu0 %1113
    %1117 = vset.pattern.permute.xlu0 2
    %1118 = vperm.xlu0 %1117, %v1072
    %v1119 = vpop.permute.xlu0 %1118
    %1122 = vset.pattern.permute.xlu0 2
    %1123 = vperm.xlu0 %1122, %v1073
    %v1124 = vpop.permute.xlu0 %1123
    %1127 = vset.pattern.permute.xlu0 2
    %1128 = vperm.xlu0 %1127, %v1074
    %v1129 = vpop.permute.xlu0 %1128
    %1132 = vset.pattern.permute.xlu0 2
    %1133 = vperm.xlu0 %1132, %v1075
    %v1134 = vpop.permute.xlu0 %1133
    %1137 = vset.pattern.permute.xlu0 2
    %1138 = vperm.xlu0 %1137, %v1076
    %v1139 = vpop.permute.xlu0 %1138
    %1142 = vset.pattern.permute.xlu0 2
    %1143 = vperm.xlu0 %1142, %v1077
    %v1144 = vpop.permute.xlu0 %1143
    %1147 = vset.pattern.permute.xlu0 2
    %1148 = vperm.xlu0 %1147, %v1078
    %v1149 = vpop.permute.xlu0 %1148
    %1152 = vset.pattern.permute.xlu0 2
    %1153 = vperm.xlu0 %1152, %v1079
    %v1154 = vpop.permute.xlu0 %1153
    %1157 = vset.pattern.permute.xlu0 2
    %1158 = vperm.xlu0 %1157, %v1080
    %v1159 = vpop.permute.xlu0 %1158
    %1162 = vset.pattern.permute.xlu0 2
    %1163 = vperm.xlu0 %1162, %v1081
    %v1164 = vpop.permute.xlu0 %1163
    %1167 = vset.pattern.permute.xlu0 2
    %1168 = vperm.xlu0 %1167, %v1082
    %v1169 = vpop.permute.xlu0 %1168
    %1172 = vset.pattern.permute.xlu0 2
    %1173 = vperm.xlu0 %1172, %v1083
    %v1174 = vpop.permute.xlu0 %1173
    %1177 = vset.pattern.permute.xlu0 2
    %1178 = vperm.xlu0 %1177, %v1084
    %v1179 = vpop.permute.xlu0 %1178
    %1182 = vset.pattern.permute.xlu0 2
    %1183 = vperm.xlu0 %1182, %v1085
    %v1184 = vpop.permute.xlu0 %1183
    %1187 = vset.pattern.permute.xlu0 2
    %1188 = vperm.xlu0 %1187, %v1086
    %v1189 = vpop.permute.xlu0 %1188
    %1192 = vset.pattern.permute.xlu0 2
    %1193 = vperm.xlu0 %1192, %v1087
    %v1194 = vpop.permute.xlu0 %1193
    %1197 = vset.pattern.permute.xlu0 2
    %1198 = vperm.xlu0 %1197, %v1088
    %v1199 = vpop.permute.xlu0 %1198
    %1202 = vset.pattern.permute.xlu0 2
    %1203 = vperm.xlu0 %1202, %v1089
    %v1204 = vpop.permute.xlu0 %1203
    %1207 = vset.pattern.permute.xlu0 2
    %1208 = vperm.xlu0 %1207, %v1090
    %v1209 = vpop.permute.xlu0 %1208
    %1212 = vset.pattern.permute.xlu0 2
    %1213 = vperm.xlu0 %1212, %v1091
    %v1214 = vpop.permute.xlu0 %1213
    %1217 = vset.pattern.permute.xlu0 2
    %1218 = vperm.xlu0 %1217, %v1092
    %v1219 = vpop.permute.xlu0 %1218
    %1222 = vset.pattern.permute.xlu0 2
    %1223 = vperm.xlu0 %1222, %v1093
    %v1224 = vpop.permute.xlu0 %1223
    %1227 = vset.pattern.permute.xlu0 2
    %1228 = vperm.xlu0 %1227, %v1094
    %v1229 = vpop.permute.xlu0 %1228
    %1232 = vset.pattern.permute.xlu0 2
    %1233 = vperm.xlu0 %1232, %v1095
    %v1234 = vpop.permute.xlu0 %1233
    %1237 = vset.pattern.permute.xlu0 2
    %1238 = vperm.xlu0 %1237, %v1096
    %v1239 = vpop.permute.xlu0 %1238
    %1242 = vset.pattern.permute.xlu0 2
    %1243 = vperm.xlu0 %1242, %v1097
    %v1244 = vpop.permute.xlu0 %1243
    %1247 = vset.pattern.permute.xlu0 2
    %1248 = vperm.xlu0 %1247, %v1098
    %v1249 = vpop.permute.xlu0 %1248
    %1252 = vset.pattern.permute.xlu0 2
    %1253 = vperm.xlu0 %1252, %v1099
    %v1254 = vpop.permute.xlu0 %1253
    %1257 = vset.pattern.permute.xlu0 2
    %1258 = vperm.xlu0 %1257, %v1100
    %v1259 = vpop.permute.xlu0 %1258
    %v1261 = vmul.bf16 %v1104, %v941
    %v1262 = vmul.bf16 %v1104, %v942
    %v1263 = vmul.bf16 %v1109, %v943
    %v1264 = vmul.bf16 %v1109, %v944
    %v1265 = vmul.bf16 %v1114, %v945
    %v1266 = vmul.bf16 %v1114, %v946
    %v1267 = vmul.bf16 %v1119, %v947
    %v1268 = vmul.bf16 %v1119, %v948
    %v1269 = vmul.bf16 %v1124, %v949
    %v1270 = vmul.bf16 %v1124, %v950
    %v1271 = vmul.bf16 %v1129, %v951
    %v1272 = vmul.bf16 %v1129, %v952
    %v1273 = vmul.bf16 %v1134, %v953
    %v1274 = vmul.bf16 %v1134, %v954
    %v1275 = vmul.bf16 %v1139, %v955
    %v1276 = vmul.bf16 %v1139, %v956
    %v1277 = vmul.bf16 %v1144, %v957
    %v1278 = vmul.bf16 %v1144, %v958
    %v1279 = vmul.bf16 %v1149, %v959
    %v1280 = vmul.bf16 %v1149, %v960
    %v1281 = vmul.bf16 %v1154, %v961
    %v1282 = vmul.bf16 %v1154, %v962
    %v1283 = vmul.bf16 %v1159, %v963
    %v1284 = vmul.bf16 %v1159, %v964
    %v1285 = vmul.bf16 %v1164, %v965
    %v1286 = vmul.bf16 %v1164, %v966
    %v1287 = vmul.bf16 %v1169, %v967
    %v1288 = vmul.bf16 %v1169, %v968
    %v1289 = vmul.bf16 %v1174, %v969
    %v1290 = vmul.bf16 %v1174, %v970
    %v1291 = vmul.bf16 %v1179, %v971
    %v1292 = vmul.bf16 %v1179, %v972
    %v1293 = vmul.bf16 %v1184, %v973
    %v1294 = vmul.bf16 %v1184, %v974
    %v1295 = vmul.bf16 %v1189, %v975
    %v1296 = vmul.bf16 %v1189, %v976
    %v1297 = vmul.bf16 %v1194, %v977
    %v1298 = vmul.bf16 %v1194, %v978
    %v1299 = vmul.bf16 %v1199, %v979
    %v1300 = vmul.bf16 %v1199, %v980
    %v1301 = vmul.bf16 %v1204, %v981
    %v1302 = vmul.bf16 %v1204, %v982
    %v1303 = vmul.bf16 %v1209, %v983
    %v1304 = vmul.bf16 %v1209, %v984
    %v1305 = vmul.bf16 %v1214, %v985
    %v1306 = vmul.bf16 %v1214, %v986
    %v1307 = vmul.bf16 %v1219, %v987
    %v1308 = vmul.bf16 %v1219, %v988
    %v1309 = vmul.bf16 %v1224, %v989
    %v1310 = vmul.bf16 %v1224, %v990
    %v1311 = vmul.bf16 %v1229, %v991
    %v1312 = vmul.bf16 %v1229, %v992
    %v1313 = vmul.bf16 %v1234, %v993
    %v1314 = vmul.bf16 %v1234, %v994
    %v1315 = vmul.bf16 %v1239, %v995
    %v1316 = vmul.bf16 %v1239, %v996
    %v1317 = vmul.bf16 %v1244, %v997
    %v1318 = vmul.bf16 %v1244, %v998
    %v1319 = vmul.bf16 %v1249, %v999
    %v1320 = vmul.bf16 %v1249, %v1000
    %v1321 = vmul.bf16 %v1254, %v1001
    %v1322 = vmul.bf16 %v1254, %v1002
    %v1323 = vmul.bf16 %v1259, %v1003
    %v1324 = vmul.bf16 %v1259, %v1004
    %v1325 = vmul.bf16 %v1261, %v941
    %v1326 = vmul.bf16 %v1262, %v942
    %v1327 = vmul.bf16 %v1263, %v943
    %v1328 = vmul.bf16 %v1264, %v944
    %v1329 = vmul.bf16 %v1265, %v945
    %v1330 = vmul.bf16 %v1266, %v946
    %v1331 = vmul.bf16 %v1267, %v947
    %v1332 = vmul.bf16 %v1268, %v948
    %v1333 = vmul.bf16 %v1269, %v949
    %v1334 = vmul.bf16 %v1270, %v950
    %v1335 = vmul.bf16 %v1271, %v951
    %v1336 = vmul.bf16 %v1272, %v952
    %v1337 = vmul.bf16 %v1273, %v953
    %v1338 = vmul.bf16 %v1274, %v954
    %v1339 = vmul.bf16 %v1275, %v955
    %v1340 = vmul.bf16 %v1276, %v956
    %v1341 = vmul.bf16 %v1277, %v957
    %v1342 = vmul.bf16 %v1278, %v958
    %v1343 = vmul.bf16 %v1279, %v959
    %v1344 = vmul.bf16 %v1280, %v960
    %v1345 = vmul.bf16 %v1281, %v961
    %v1346 = vmul.bf16 %v1282, %v962
    %v1347 = vmul.bf16 %v1283, %v963
    %v1348 = vmul.bf16 %v1284, %v964
    %v1349 = vmul.bf16 %v1285, %v965
    %v1350 = vmul.bf16 %v1286, %v966
    %v1351 = vmul.bf16 %v1287, %v967
    %v1352 = vmul.bf16 %v1288, %v968
    %v1353 = vmul.bf16 %v1289, %v969
    %v1354 = vmul.bf16 %v1290, %v970
    %v1355 = vmul.bf16 %v1291, %v971
    %v1356 = vmul.bf16 %v1292, %v972
    %v1357 = vmul.bf16 %v1293, %v973
    %v1358 = vmul.bf16 %v1294, %v974
    %v1359 = vmul.bf16 %v1295, %v975
    %v1360 = vmul.bf16 %v1296, %v976
    %v1361 = vmul.bf16 %v1297, %v977
    %v1362 = vmul.bf16 %v1298, %v978
    %v1363 = vmul.bf16 %v1299, %v979
    %v1364 = vmul.bf16 %v1300, %v980
    %v1365 = vmul.bf16 %v1301, %v981
    %v1366 = vmul.bf16 %v1302, %v982
    %v1367 = vmul.bf16 %v1303, %v983
    %v1368 = vmul.bf16 %v1304, %v984
    %v1369 = vmul.bf16 %v1305, %v985
    %v1370 = vmul.bf16 %v1306, %v986
    %v1371 = vmul.bf16 %v1307, %v987
    %v1372 = vmul.bf16 %v1308, %v988
    %v1373 = vmul.bf16 %v1309, %v989
    %v1374 = vmul.bf16 %v1310, %v990
    %v1375 = vmul.bf16 %v1311, %v991
    %v1376 = vmul.bf16 %v1312, %v992
    %v1377 = vmul.bf16 %v1313, %v993
    %v1378 = vmul.bf16 %v1314, %v994
    %v1379 = vmul.bf16 %v1315, %v995
    %v1380 = vmul.bf16 %v1316, %v996
    %v1381 = vmul.bf16 %v1317, %v997
    %v1382 = vmul.bf16 %v1318, %v998
    %v1383 = vmul.bf16 %v1319, %v999
    %v1384 = vmul.bf16 %v1320, %v1000
    %v1385 = vmul.bf16 %v1321, %v1001
    %v1386 = vmul.bf16 %v1322, %v1002
    %v1387 = vmul.bf16 %v1323, %v1003
    %v1388 = vmul.bf16 %v1324, %v1004
    %1389 = vset.pattern.permute.xlu0 4
    %1390 = vperm.xlu0 %1389, %v1069
    %v1391 = vpop.permute.xlu0 %1390
    %1393 = vset.pattern.permute.xlu0 4
    %1394 = vperm.xlu0 %1393, %v1070
    %v1395 = vpop.permute.xlu0 %1394
    %1397 = vset.pattern.permute.xlu0 4
    %1398 = vperm.xlu0 %1397, %v1071
    %v1399 = vpop.permute.xlu0 %1398
    %1401 = vset.pattern.permute.xlu0 4
    %1402 = vperm.xlu0 %1401, %v1072
    %v1403 = vpop.permute.xlu0 %1402
    %1405 = vset.pattern.permute.xlu0 4
    %1406 = vperm.xlu0 %1405, %v1073
    %v1407 = vpop.permute.xlu0 %1406
    %1409 = vset.pattern.permute.xlu0 4
    %1410 = vperm.xlu0 %1409, %v1074
    %v1411 = vpop.permute.xlu0 %1410
    %1413 = vset.pattern.permute.xlu0 4
    %1414 = vperm.xlu0 %1413, %v1075
    %v1415 = vpop.permute.xlu0 %1414
    %1417 = vset.pattern.permute.xlu0 4
    %1418 = vperm.xlu0 %1417, %v1076
    %v1419 = vpop.permute.xlu0 %1418
    %1421 = vset.pattern.permute.xlu0 4
    %1422 = vperm.xlu0 %1421, %v1077
    %v1423 = vpop.permute.xlu0 %1422
    %1425 = vset.pattern.permute.xlu0 4
    %1426 = vperm.xlu0 %1425, %v1078
    %v1427 = vpop.permute.xlu0 %1426
    %1429 = vset.pattern.permute.xlu0 4
    %1430 = vperm.xlu0 %1429, %v1079
    %v1431 = vpop.permute.xlu0 %1430
    %1433 = vset.pattern.permute.xlu0 4
    %1434 = vperm.xlu0 %1433, %v1080
    %v1435 = vpop.permute.xlu0 %1434
    %1437 = vset.pattern.permute.xlu0 4
    %1438 = vperm.xlu0 %1437, %v1081
    %v1439 = vpop.permute.xlu0 %1438
    %1441 = vset.pattern.permute.xlu0 4
    %1442 = vperm.xlu0 %1441, %v1082
    %v1443 = vpop.permute.xlu0 %1442
    %1445 = vset.pattern.permute.xlu0 4
    %1446 = vperm.xlu0 %1445, %v1083
    %v1447 = vpop.permute.xlu0 %1446
    %1449 = vset.pattern.permute.xlu0 4
    %1450 = vperm.xlu0 %1449, %v1084
    %v1451 = vpop.permute.xlu0 %1450
    %1453 = vset.pattern.permute.xlu0 4
    %1454 = vperm.xlu0 %1453, %v1085
    %v1455 = vpop.permute.xlu0 %1454
    %1457 = vset.pattern.permute.xlu0 4
    %1458 = vperm.xlu0 %1457, %v1086
    %v1459 = vpop.permute.xlu0 %1458
    %1461 = vset.pattern.permute.xlu0 4
    %1462 = vperm.xlu0 %1461, %v1087
    %v1463 = vpop.permute.xlu0 %1462
    %1465 = vset.pattern.permute.xlu0 4
    %1466 = vperm.xlu0 %1465, %v1088
    %v1467 = vpop.permute.xlu0 %1466
    %1469 = vset.pattern.permute.xlu0 4
    %1470 = vperm.xlu0 %1469, %v1089
    %v1471 = vpop.permute.xlu0 %1470
    %1473 = vset.pattern.permute.xlu0 4
    %1474 = vperm.xlu0 %1473, %v1090
    %v1475 = vpop.permute.xlu0 %1474
    %1477 = vset.pattern.permute.xlu0 4
    %1478 = vperm.xlu0 %1477, %v1091
    %v1479 = vpop.permute.xlu0 %1478
    %1481 = vset.pattern.permute.xlu0 4
    %1482 = vperm.xlu0 %1481, %v1092
    %v1483 = vpop.permute.xlu0 %1482
    %1485 = vset.pattern.permute.xlu0 4
    %1486 = vperm.xlu0 %1485, %v1093
    %v1487 = vpop.permute.xlu0 %1486
    %1489 = vset.pattern.permute.xlu0 4
    %1490 = vperm.xlu0 %1489, %v1094
    %v1491 = vpop.permute.xlu0 %1490
    %1493 = vset.pattern.permute.xlu0 4
    %1494 = vperm.xlu0 %1493, %v1095
    %v1495 = vpop.permute.xlu0 %1494
    %1497 = vset.pattern.permute.xlu0 4
    %1498 = vperm.xlu0 %1497, %v1096
    %v1499 = vpop.permute.xlu0 %1498
    %1501 = vset.pattern.permute.xlu0 4
    %1502 = vperm.xlu0 %1501, %v1097
    %v1503 = vpop.permute.xlu0 %1502
    %1505 = vset.pattern.permute.xlu0 4
    %1506 = vperm.xlu0 %1505, %v1098
    %v1507 = vpop.permute.xlu0 %1506
    %1509 = vset.pattern.permute.xlu0 4
    %1510 = vperm.xlu0 %1509, %v1099
    %v1511 = vpop.permute.xlu0 %1510
    %1513 = vset.pattern.permute.xlu0 4
    %1514 = vperm.xlu0 %1513, %v1100
    %v1515 = vpop.permute.xlu0 %1514
    %v1517 = vmul.bf16 %v1391, %v1005
    %v1518 = vmul.bf16 %v1391, %v1006
    %v1519 = vmul.bf16 %v1395, %v1007
    %v1520 = vmul.bf16 %v1395, %v1008
    %v1521 = vmul.bf16 %v1399, %v1009
    %v1522 = vmul.bf16 %v1399, %v1010
    %v1523 = vmul.bf16 %v1403, %v1011
    %v1524 = vmul.bf16 %v1403, %v1012
    %v1525 = vmul.bf16 %v1407, %v1013
    %v1526 = vmul.bf16 %v1407, %v1014
    %v1527 = vmul.bf16 %v1411, %v1015
    %v1528 = vmul.bf16 %v1411, %v1016
    %v1529 = vmul.bf16 %v1415, %v1017
    %v1530 = vmul.bf16 %v1415, %v1018
    %v1531 = vmul.bf16 %v1419, %v1019
    %v1532 = vmul.bf16 %v1419, %v1020
    %v1533 = vmul.bf16 %v1423, %v1021
    %v1534 = vmul.bf16 %v1423, %v1022
    %v1535 = vmul.bf16 %v1427, %v1023
    %v1536 = vmul.bf16 %v1427, %v1024
    %v1537 = vmul.bf16 %v1431, %v1025
    %v1538 = vmul.bf16 %v1431, %v1026
    %v1539 = vmul.bf16 %v1435, %v1027
    %v1540 = vmul.bf16 %v1435, %v1028
    %v1541 = vmul.bf16 %v1439, %v1029
    %v1542 = vmul.bf16 %v1439, %v1030
    %v1543 = vmul.bf16 %v1443, %v1031
    %v1544 = vmul.bf16 %v1443, %v1032
    %v1545 = vmul.bf16 %v1447, %v1033
    %v1546 = vmul.bf16 %v1447, %v1034
    %v1547 = vmul.bf16 %v1451, %v1035
    %v1548 = vmul.bf16 %v1451, %v1036
    %v1549 = vmul.bf16 %v1455, %v1037
    %v1550 = vmul.bf16 %v1455, %v1038
    %v1551 = vmul.bf16 %v1459, %v1039
    %v1552 = vmul.bf16 %v1459, %v1040
    %v1553 = vmul.bf16 %v1463, %v1041
    %v1554 = vmul.bf16 %v1463, %v1042
    %v1555 = vmul.bf16 %v1467, %v1043
    %v1556 = vmul.bf16 %v1467, %v1044
    %v1557 = vmul.bf16 %v1471, %v1045
    %v1558 = vmul.bf16 %v1471, %v1046
    %v1559 = vmul.bf16 %v1475, %v1047
    %v1560 = vmul.bf16 %v1475, %v1048
    %v1561 = vmul.bf16 %v1479, %v1049
    %v1562 = vmul.bf16 %v1479, %v1050
    %v1563 = vmul.bf16 %v1483, %v1051
    %v1564 = vmul.bf16 %v1483, %v1052
    %v1565 = vmul.bf16 %v1487, %v1053
    %v1566 = vmul.bf16 %v1487, %v1054
    %v1567 = vmul.bf16 %v1491, %v1055
    %v1568 = vmul.bf16 %v1491, %v1056
    %v1569 = vmul.bf16 %v1495, %v1057
    %v1570 = vmul.bf16 %v1495, %v1058
    %v1571 = vmul.bf16 %v1499, %v1059
    %v1572 = vmul.bf16 %v1499, %v1060
    %v1573 = vmul.bf16 %v1503, %v1061
    %v1574 = vmul.bf16 %v1503, %v1062
    %v1575 = vmul.bf16 %v1507, %v1063
    %v1576 = vmul.bf16 %v1507, %v1064
    %v1577 = vmul.bf16 %v1511, %v1065
    %v1578 = vmul.bf16 %v1511, %v1066
    %v1579 = vmul.bf16 %v1515, %v1067
    %v1580 = vmul.bf16 %v1515, %v1068
    %v1581 = vmul.bf16 %v1517, %v1005
    %v1582 = vmul.bf16 %v1518, %v1006
    %v1583 = vmul.bf16 %v1519, %v1007
    %v1584 = vmul.bf16 %v1520, %v1008
    %v1585 = vmul.bf16 %v1521, %v1009
    %v1586 = vmul.bf16 %v1522, %v1010
    %v1587 = vmul.bf16 %v1523, %v1011
    %v1588 = vmul.bf16 %v1524, %v1012
    %v1589 = vmul.bf16 %v1525, %v1013
    %v1590 = vmul.bf16 %v1526, %v1014
    %v1591 = vmul.bf16 %v1527, %v1015
    %v1592 = vmul.bf16 %v1528, %v1016
    %v1593 = vmul.bf16 %v1529, %v1017
    %v1594 = vmul.bf16 %v1530, %v1018
    %v1595 = vmul.bf16 %v1531, %v1019
    %v1596 = vmul.bf16 %v1532, %v1020
    %v1597 = vmul.bf16 %v1533, %v1021
    %v1598 = vmul.bf16 %v1534, %v1022
    %v1599 = vmul.bf16 %v1535, %v1023
    %v1600 = vmul.bf16 %v1536, %v1024
    %v1601 = vmul.bf16 %v1537, %v1025
    %v1602 = vmul.bf16 %v1538, %v1026
    %v1603 = vmul.bf16 %v1539, %v1027
    %v1604 = vmul.bf16 %v1540, %v1028
    %v1605 = vmul.bf16 %v1541, %v1029
    %v1606 = vmul.bf16 %v1542, %v1030
    %v1607 = vmul.bf16 %v1543, %v1031
    %v1608 = vmul.bf16 %v1544, %v1032
    %v1609 = vmul.bf16 %v1545, %v1033
    %v1610 = vmul.bf16 %v1546, %v1034
    %v1611 = vmul.bf16 %v1547, %v1035
    %v1612 = vmul.bf16 %v1548, %v1036
    %v1613 = vmul.bf16 %v1549, %v1037
    %v1614 = vmul.bf16 %v1550, %v1038
    %v1615 = vmul.bf16 %v1551, %v1039
    %v1616 = vmul.bf16 %v1552, %v1040
    %v1617 = vmul.bf16 %v1553, %v1041
    %v1618 = vmul.bf16 %v1554, %v1042
    %v1619 = vmul.bf16 %v1555, %v1043
    %v1620 = vmul.bf16 %v1556, %v1044
    %v1621 = vmul.bf16 %v1557, %v1045
    %v1622 = vmul.bf16 %v1558, %v1046
    %v1623 = vmul.bf16 %v1559, %v1047
    %v1624 = vmul.bf16 %v1560, %v1048
    %v1625 = vmul.bf16 %v1561, %v1049
    %v1626 = vmul.bf16 %v1562, %v1050
    %v1627 = vmul.bf16 %v1563, %v1051
    %v1628 = vmul.bf16 %v1564, %v1052
    %v1629 = vmul.bf16 %v1565, %v1053
    %v1630 = vmul.bf16 %v1566, %v1054
    %v1631 = vmul.bf16 %v1567, %v1055
    %v1632 = vmul.bf16 %v1568, %v1056
    %v1633 = vmul.bf16 %v1569, %v1057
    %v1634 = vmul.bf16 %v1570, %v1058
    %v1635 = vmul.bf16 %v1571, %v1059
    %v1636 = vmul.bf16 %v1572, %v1060
    %v1637 = vmul.bf16 %v1573, %v1061
    %v1638 = vmul.bf16 %v1574, %v1062
    %v1639 = vmul.bf16 %v1575, %v1063
    %v1640 = vmul.bf16 %v1576, %v1064
    %v1641 = vmul.bf16 %v1577, %v1065
    %v1642 = vmul.bf16 %v1578, %v1066
    %v1643 = vmul.bf16 %v1579, %v1067
    %v1644 = vmul.bf16 %v1580, %v1068
    %v1645 = vadd.bf16 %v1325, %v1581
    %v1646 = vadd.bf16 %v1326, %v1582
    %v1647 = vadd.bf16 %v1327, %v1583
    %v1648 = vadd.bf16 %v1328, %v1584
    %v1649 = vadd.bf16 %v1329, %v1585
    %v1650 = vadd.bf16 %v1330, %v1586
    %v1651 = vadd.bf16 %v1331, %v1587
    %v1652 = vadd.bf16 %v1332, %v1588
    %v1653 = vadd.bf16 %v1333, %v1589
    %v1654 = vadd.bf16 %v1334, %v1590
    %v1655 = vadd.bf16 %v1335, %v1591
    %v1656 = vadd.bf16 %v1336, %v1592
    %v1657 = vadd.bf16 %v1337, %v1593
    %v1658 = vadd.bf16 %v1338, %v1594
    %v1659 = vadd.bf16 %v1339, %v1595
    %v1660 = vadd.bf16 %v1340, %v1596
    %v1661 = vadd.bf16 %v1341, %v1597
    %v1662 = vadd.bf16 %v1342, %v1598
    %v1663 = vadd.bf16 %v1343, %v1599
    %v1664 = vadd.bf16 %v1344, %v1600
    %v1665 = vadd.bf16 %v1345, %v1601
    %v1666 = vadd.bf16 %v1346, %v1602
    %v1667 = vadd.bf16 %v1347, %v1603
    %v1668 = vadd.bf16 %v1348, %v1604
    %v1669 = vadd.bf16 %v1349, %v1605
    %v1670 = vadd.bf16 %v1350, %v1606
    %v1671 = vadd.bf16 %v1351, %v1607
    %v1672 = vadd.bf16 %v1352, %v1608
    %v1673 = vadd.bf16 %v1353, %v1609
    %v1674 = vadd.bf16 %v1354, %v1610
    %v1675 = vadd.bf16 %v1355, %v1611
    %v1676 = vadd.bf16 %v1356, %v1612
    %v1677 = vadd.bf16 %v1357, %v1613
    %v1678 = vadd.bf16 %v1358, %v1614
    %v1679 = vadd.bf16 %v1359, %v1615
    %v1680 = vadd.bf16 %v1360, %v1616
    %v1681 = vadd.bf16 %v1361, %v1617
    %v1682 = vadd.bf16 %v1362, %v1618
    %v1683 = vadd.bf16 %v1363, %v1619
    %v1684 = vadd.bf16 %v1364, %v1620
    %v1685 = vadd.bf16 %v1365, %v1621
    %v1686 = vadd.bf16 %v1366, %v1622
    %v1687 = vadd.bf16 %v1367, %v1623
    %v1688 = vadd.bf16 %v1368, %v1624
    %v1689 = vadd.bf16 %v1369, %v1625
    %v1690 = vadd.bf16 %v1370, %v1626
    %v1691 = vadd.bf16 %v1371, %v1627
    %v1692 = vadd.bf16 %v1372, %v1628
    %v1693 = vadd.bf16 %v1373, %v1629
    %v1694 = vadd.bf16 %v1374, %v1630
    %v1695 = vadd.bf16 %v1375, %v1631
    %v1696 = vadd.bf16 %v1376, %v1632
    %v1697 = vadd.bf16 %v1377, %v1633
    %v1698 = vadd.bf16 %v1378, %v1634
    %v1699 = vadd.bf16 %v1379, %v1635
    %v1700 = vadd.bf16 %v1380, %v1636
    %v1701 = vadd.bf16 %v1381, %v1637
    %v1702 = vadd.bf16 %v1382, %v1638
    %v1703 = vadd.bf16 %v1383, %v1639
    %v1704 = vadd.bf16 %v1384, %v1640
    %v1705 = vadd.bf16 %v1385, %v1641
    %v1706 = vadd.bf16 %v1386, %v1642
    %v1707 = vadd.bf16 %v1387, %v1643
    %v1708 = vadd.bf16 %v1388, %v1644
    %v1709 = vmul.bf16 %v941, %v1005
    %v1710 = vmul.bf16 %v942, %v1006
    %v1711 = vmul.bf16 %v943, %v1007
    %v1712 = vmul.bf16 %v944, %v1008
    %v1713 = vmul.bf16 %v945, %v1009
    %v1714 = vmul.bf16 %v946, %v1010
    %v1715 = vmul.bf16 %v947, %v1011
    %v1716 = vmul.bf16 %v948, %v1012
    %v1717 = vmul.bf16 %v949, %v1013
    %v1718 = vmul.bf16 %v950, %v1014
    %v1719 = vmul.bf16 %v951, %v1015
    %v1720 = vmul.bf16 %v952, %v1016
    %v1721 = vmul.bf16 %v953, %v1017
    %v1722 = vmul.bf16 %v954, %v1018
    %v1723 = vmul.bf16 %v955, %v1019
    %v1724 = vmul.bf16 %v956, %v1020
    %v1725 = vmul.bf16 %v957, %v1021
    %v1726 = vmul.bf16 %v958, %v1022
    %v1727 = vmul.bf16 %v959, %v1023
    %v1728 = vmul.bf16 %v960, %v1024
    %v1729 = vmul.bf16 %v961, %v1025
    %v1730 = vmul.bf16 %v962, %v1026
    %v1731 = vmul.bf16 %v963, %v1027
    %v1732 = vmul.bf16 %v964, %v1028
    %v1733 = vmul.bf16 %v965, %v1029
    %v1734 = vmul.bf16 %v966, %v1030
    %v1735 = vmul.bf16 %v967, %v1031
    %v1736 = vmul.bf16 %v968, %v1032
    %v1737 = vmul.bf16 %v969, %v1033
    %v1738 = vmul.bf16 %v970, %v1034
    %v1739 = vmul.bf16 %v971, %v1035
    %v1740 = vmul.bf16 %v972, %v1036
    %v1741 = vmul.bf16 %v973, %v1037
    %v1742 = vmul.bf16 %v974, %v1038
    %v1743 = vmul.bf16 %v975, %v1039
    %v1744 = vmul.bf16 %v976, %v1040
    %v1745 = vmul.bf16 %v977, %v1041
    %v1746 = vmul.bf16 %v978, %v1042
    %v1747 = vmul.bf16 %v979, %v1043
    %v1748 = vmul.bf16 %v980, %v1044
    %v1749 = vmul.bf16 %v981, %v1045
    %v1750 = vmul.bf16 %v982, %v1046
    %v1751 = vmul.bf16 %v983, %v1047
    %v1752 = vmul.bf16 %v984, %v1048
    %v1753 = vmul.bf16 %v985, %v1049
    %v1754 = vmul.bf16 %v986, %v1050
    %v1755 = vmul.bf16 %v987, %v1051
    %v1756 = vmul.bf16 %v988, %v1052
    %v1757 = vmul.bf16 %v989, %v1053
    %v1758 = vmul.bf16 %v990, %v1054
    %v1759 = vmul.bf16 %v991, %v1055
    %v1760 = vmul.bf16 %v992, %v1056
    %v1761 = vmul.bf16 %v993, %v1057
    %v1762 = vmul.bf16 %v994, %v1058
    %v1763 = vmul.bf16 %v995, %v1059
    %v1764 = vmul.bf16 %v996, %v1060
    %v1765 = vmul.bf16 %v997, %v1061
    %v1766 = vmul.bf16 %v998, %v1062
    %v1767 = vmul.bf16 %v999, %v1063
    %v1768 = vmul.bf16 %v1000, %v1064
    %v1769 = vmul.bf16 %v1001, %v1065
    %v1770 = vmul.bf16 %v1002, %v1066
    %v1771 = vmul.bf16 %v1003, %v1067
    %v1772 = vmul.bf16 %v1004, %v1068
    %1773 = vset.pattern.permute.xlu0 3
    %1774 = vperm.xlu0 %1773, %v1069
    %v1775 = vpop.permute.xlu0 %1774
    %1777 = vset.pattern.permute.xlu0 3
    %1778 = vperm.xlu0 %1777, %v1070
    %v1779 = vpop.permute.xlu0 %1778
    %1781 = vset.pattern.permute.xlu0 3
    %1782 = vperm.xlu0 %1781, %v1071
    %v1783 = vpop.permute.xlu0 %1782
    %1785 = vset.pattern.permute.xlu0 3
    %1786 = vperm.xlu0 %1785, %v1072
    %v1787 = vpop.permute.xlu0 %1786
    %1789 = vset.pattern.permute.xlu0 3
    %1790 = vperm.xlu0 %1789, %v1073
    %v1791 = vpop.permute.xlu0 %1790
    %1793 = vset.pattern.permute.xlu0 3
    %1794 = vperm.xlu0 %1793, %v1074
    %v1795 = vpop.permute.xlu0 %1794
    %1797 = vset.pattern.permute.xlu0 3
    %1798 = vperm.xlu0 %1797, %v1075
    %v1799 = vpop.permute.xlu0 %1798
    %1801 = vset.pattern.permute.xlu0 3
    %1802 = vperm.xlu0 %1801, %v1076
    %v1803 = vpop.permute.xlu0 %1802
    %1805 = vset.pattern.permute.xlu0 3
    %1806 = vperm.xlu0 %1805, %v1077
    %v1807 = vpop.permute.xlu0 %1806
    %1809 = vset.pattern.permute.xlu0 3
    %1810 = vperm.xlu0 %1809, %v1078
    %v1811 = vpop.permute.xlu0 %1810
    %1813 = vset.pattern.permute.xlu0 3
    %1814 = vperm.xlu0 %1813, %v1079
    %v1815 = vpop.permute.xlu0 %1814
    %1817 = vset.pattern.permute.xlu0 3
    %1818 = vperm.xlu0 %1817, %v1080
    %v1819 = vpop.permute.xlu0 %1818
    %1821 = vset.pattern.permute.xlu0 3
    %1822 = vperm.xlu0 %1821, %v1081
    %v1823 = vpop.permute.xlu0 %1822
    %1825 = vset.pattern.permute.xlu0 3
    %1826 = vperm.xlu0 %1825, %v1082
    %v1827 = vpop.permute.xlu0 %1826
    %1829 = vset.pattern.permute.xlu0 3
    %1830 = vperm.xlu0 %1829, %v1083
    %v1831 = vpop.permute.xlu0 %1830
    %1833 = vset.pattern.permute.xlu0 3
    %1834 = vperm.xlu0 %1833, %v1084
    %v1835 = vpop.permute.xlu0 %1834
    %1837 = vset.pattern.permute.xlu0 3
    %1838 = vperm.xlu0 %1837, %v1085
    %v1839 = vpop.permute.xlu0 %1838
    %1841 = vset.pattern.permute.xlu0 3
    %1842 = vperm.xlu0 %1841, %v1086
    %v1843 = vpop.permute.xlu0 %1842
    %1845 = vset.pattern.permute.xlu0 3
    %1846 = vperm.xlu0 %1845, %v1087
    %v1847 = vpop.permute.xlu0 %1846
    %1849 = vset.pattern.permute.xlu0 3
    %1850 = vperm.xlu0 %1849, %v1088
    %v1851 = vpop.permute.xlu0 %1850
    %1853 = vset.pattern.permute.xlu0 3
    %1854 = vperm.xlu0 %1853, %v1089
    %v1855 = vpop.permute.xlu0 %1854
    %1857 = vset.pattern.permute.xlu0 3
    %1858 = vperm.xlu0 %1857, %v1090
    %v1859 = vpop.permute.xlu0 %1858
    %1861 = vset.pattern.permute.xlu0 3
    %1862 = vperm.xlu0 %1861, %v1091
    %v1863 = vpop.permute.xlu0 %1862
    %1865 = vset.pattern.permute.xlu0 3
    %1866 = vperm.xlu0 %1865, %v1092
    %v1867 = vpop.permute.xlu0 %1866
    %1869 = vset.pattern.permute.xlu0 3
    %1870 = vperm.xlu0 %1869, %v1093
    %v1871 = vpop.permute.xlu0 %1870
    %1873 = vset.pattern.permute.xlu0 3
    %1874 = vperm.xlu0 %1873, %v1094
    %v1875 = vpop.permute.xlu0 %1874
    %1877 = vset.pattern.permute.xlu0 3
    %1878 = vperm.xlu0 %1877, %v1095
    %v1879 = vpop.permute.xlu0 %1878
    %1881 = vset.pattern.permute.xlu0 3
    %1882 = vperm.xlu0 %1881, %v1096
    %v1883 = vpop.permute.xlu0 %1882
    %1885 = vset.pattern.permute.xlu0 3
    %1886 = vperm.xlu0 %1885, %v1097
    %v1887 = vpop.permute.xlu0 %1886
    %1889 = vset.pattern.permute.xlu0 3
    %1890 = vperm.xlu0 %1889, %v1098
    %v1891 = vpop.permute.xlu0 %1890
    %1893 = vset.pattern.permute.xlu0 3
    %1894 = vperm.xlu0 %1893, %v1099
    %v1895 = vpop.permute.xlu0 %1894
    %1897 = vset.pattern.permute.xlu0 3
    %1898 = vperm.xlu0 %1897, %v1100
    %v1899 = vpop.permute.xlu0 %1898
    %v1901 = vmul.bf16 %v1775, %v1709
    %v1902 = vmul.bf16 %v1775, %v1710
    %v1903 = vmul.bf16 %v1779, %v1711
    %v1904 = vmul.bf16 %v1779, %v1712
    %v1905 = vmul.bf16 %v1783, %v1713
    %v1906 = vmul.bf16 %v1783, %v1714
    %v1907 = vmul.bf16 %v1787, %v1715
    %v1908 = vmul.bf16 %v1787, %v1716
    %v1909 = vmul.bf16 %v1791, %v1717
    %v1910 = vmul.bf16 %v1791, %v1718
    %v1911 = vmul.bf16 %v1795, %v1719
    %v1912 = vmul.bf16 %v1795, %v1720
    %v1913 = vmul.bf16 %v1799, %v1721
    %v1914 = vmul.bf16 %v1799, %v1722
    %v1915 = vmul.bf16 %v1803, %v1723
    %v1916 = vmul.bf16 %v1803, %v1724
    %v1917 = vmul.bf16 %v1807, %v1725
    %v1918 = vmul.bf16 %v1807, %v1726
    %v1919 = vmul.bf16 %v1811, %v1727
    %v1920 = vmul.bf16 %v1811, %v1728
    %v1921 = vmul.bf16 %v1815, %v1729
    %v1922 = vmul.bf16 %v1815, %v1730
    %v1923 = vmul.bf16 %v1819, %v1731
    %v1924 = vmul.bf16 %v1819, %v1732
    %v1925 = vmul.bf16 %v1823, %v1733
    %v1926 = vmul.bf16 %v1823, %v1734
    %v1927 = vmul.bf16 %v1827, %v1735
    %v1928 = vmul.bf16 %v1827, %v1736
    %v1929 = vmul.bf16 %v1831, %v1737
    %v1930 = vmul.bf16 %v1831, %v1738
    %v1931 = vmul.bf16 %v1835, %v1739
    %v1932 = vmul.bf16 %v1835, %v1740
    %v1933 = vmul.bf16 %v1839, %v1741
    %v1934 = vmul.bf16 %v1839, %v1742
    %v1935 = vmul.bf16 %v1843, %v1743
    %v1936 = vmul.bf16 %v1843, %v1744
    %v1937 = vmul.bf16 %v1847, %v1745
    %v1938 = vmul.bf16 %v1847, %v1746
    %v1939 = vmul.bf16 %v1851, %v1747
    %v1940 = vmul.bf16 %v1851, %v1748
    %v1941 = vmul.bf16 %v1855, %v1749
    %v1942 = vmul.bf16 %v1855, %v1750
    %v1943 = vmul.bf16 %v1859, %v1751
    %v1944 = vmul.bf16 %v1859, %v1752
    %v1945 = vmul.bf16 %v1863, %v1753
    %v1946 = vmul.bf16 %v1863, %v1754
    %v1947 = vmul.bf16 %v1867, %v1755
    %v1948 = vmul.bf16 %v1867, %v1756
    %v1949 = vmul.bf16 %v1871, %v1757
    %v1950 = vmul.bf16 %v1871, %v1758
    %v1951 = vmul.bf16 %v1875, %v1759
    %v1952 = vmul.bf16 %v1875, %v1760
    %v1953 = vmul.bf16 %v1879, %v1761
    %v1954 = vmul.bf16 %v1879, %v1762
    %v1955 = vmul.bf16 %v1883, %v1763
    %v1956 = vmul.bf16 %v1883, %v1764
    %v1957 = vmul.bf16 %v1887, %v1765
    %v1958 = vmul.bf16 %v1887, %v1766
    %v1959 = vmul.bf16 %v1891, %v1767
    %v1960 = vmul.bf16 %v1891, %v1768
    %v1961 = vmul.bf16 %v1895, %v1769
    %v1962 = vmul.bf16 %v1895, %v1770
    %v1963 = vmul.bf16 %v1899, %v1771
    %v1964 = vmul.bf16 %v1899, %v1772
    %v1965 = vadd.bf16 %v1645, %v1901
    %v1966 = vadd.bf16 %v1646, %v1902
    %v1967 = vadd.bf16 %v1647, %v1903
    %v1968 = vadd.bf16 %v1648, %v1904
    %v1969 = vadd.bf16 %v1649, %v1905
    %v1970 = vadd.bf16 %v1650, %v1906
    %v1971 = vadd.bf16 %v1651, %v1907
    %v1972 = vadd.bf16 %v1652, %v1908
    %v1973 = vadd.bf16 %v1653, %v1909
    %v1974 = vadd.bf16 %v1654, %v1910
    %v1975 = vadd.bf16 %v1655, %v1911
    %v1976 = vadd.bf16 %v1656, %v1912
    %v1977 = vadd.bf16 %v1657, %v1913
    %v1978 = vadd.bf16 %v1658, %v1914
    %v1979 = vadd.bf16 %v1659, %v1915
    %v1980 = vadd.bf16 %v1660, %v1916
    %v1981 = vadd.bf16 %v1661, %v1917
    %v1982 = vadd.bf16 %v1662, %v1918
    %v1983 = vadd.bf16 %v1663, %v1919
    %v1984 = vadd.bf16 %v1664, %v1920
    %v1985 = vadd.bf16 %v1665, %v1921
    %v1986 = vadd.bf16 %v1666, %v1922
    %v1987 = vadd.bf16 %v1667, %v1923
    %v1988 = vadd.bf16 %v1668, %v1924
    %v1989 = vadd.bf16 %v1669, %v1925
    %v1990 = vadd.bf16 %v1670, %v1926
    %v1991 = vadd.bf16 %v1671, %v1927
    %v1992 = vadd.bf16 %v1672, %v1928
    %v1993 = vadd.bf16 %v1673, %v1929
    %v1994 = vadd.bf16 %v1674, %v1930
    %v1995 = vadd.bf16 %v1675, %v1931
    %v1996 = vadd.bf16 %v1676, %v1932
    %v1997 = vadd.bf16 %v1677, %v1933
    %v1998 = vadd.bf16 %v1678, %v1934
    %v1999 = vadd.bf16 %v1679, %v1935
    %v2000 = vadd.bf16 %v1680, %v1936
    %v2001 = vadd.bf16 %v1681, %v1937
    %v2002 = vadd.bf16 %v1682, %v1938
    %v2003 = vadd.bf16 %v1683, %v1939
    %v2004 = vadd.bf16 %v1684, %v1940
    %v2005 = vadd.bf16 %v1685, %v1941
    %v2006 = vadd.bf16 %v1686, %v1942
    %v2007 = vadd.bf16 %v1687, %v1943
    %v2008 = vadd.bf16 %v1688, %v1944
    %v2009 = vadd.bf16 %v1689, %v1945
    %v2010 = vadd.bf16 %v1690, %v1946
    %v2011 = vadd.bf16 %v1691, %v1947
    %v2012 = vadd.bf16 %v1692, %v1948
    %v2013 = vadd.bf16 %v1693, %v1949
    %v2014 = vadd.bf16 %v1694, %v1950
    %v2015 = vadd.bf16 %v1695, %v1951
    %v2016 = vadd.bf16 %v1696, %v1952
    %v2017 = vadd.bf16 %v1697, %v1953
    %v2018 = vadd.bf16 %v1698, %v1954
    %v2019 = vadd.bf16 %v1699, %v1955
    %v2020 = vadd.bf16 %v1700, %v1956
    %v2021 = vadd.bf16 %v1701, %v1957
    %v2022 = vadd.bf16 %v1702, %v1958
    %v2023 = vadd.bf16 %v1703, %v1959
    %v2024 = vadd.bf16 %v1704, %v1960
    %v2025 = vadd.bf16 %v1705, %v1961
    %v2026 = vadd.bf16 %v1706, %v1962
    %v2027 = vadd.bf16 %v1707, %v1963
    %v2028 = vadd.bf16 %v1708, %v1964
    %v2029 = vsub.bf16 0, %v1965
    %v2030 = vsub.bf16 0, %v1966
    %v2031 = vsub.bf16 0, %v1967
    %v2032 = vsub.bf16 0, %v1968
    %v2033 = vsub.bf16 0, %v1969
    %v2034 = vsub.bf16 0, %v1970
    %v2035 = vsub.bf16 0, %v1971
    %v2036 = vsub.bf16 0, %v1972
    %v2037 = vsub.bf16 0, %v1973
    %v2038 = vsub.bf16 0, %v1974
    %v2039 = vsub.bf16 0, %v1975
    %v2040 = vsub.bf16 0, %v1976
    %v2041 = vsub.bf16 0, %v1977
    %v2042 = vsub.bf16 0, %v1978
    %v2043 = vsub.bf16 0, %v1979
    %v2044 = vsub.bf16 0, %v1980
    %v2045 = vsub.bf16 0, %v1981
    %v2046 = vsub.bf16 0, %v1982
    %v2047 = vsub.bf16 0, %v1983
    %v2048 = vsub.bf16 0, %v1984
    %v2049 = vsub.bf16 0, %v1985
    %v2050 = vsub.bf16 0, %v1986
    %v2051 = vsub.bf16 0, %v1987
    %v2052 = vsub.bf16 0, %v1988
    %v2053 = vsub.bf16 0, %v1989
    %v2054 = vsub.bf16 0, %v1990
    %v2055 = vsub.bf16 0, %v1991
    %v2056 = vsub.bf16 0, %v1992
    %v2057 = vsub.bf16 0, %v1993
    %v2058 = vsub.bf16 0, %v1994
    %v2059 = vsub.bf16 0, %v1995
    %v2060 = vsub.bf16 0, %v1996
    %v2061 = vsub.bf16 0, %v1997
    %v2062 = vsub.bf16 0, %v1998
    %v2063 = vsub.bf16 0, %v1999
    %v2064 = vsub.bf16 0, %v2000
    %v2065 = vsub.bf16 0, %v2001
    %v2066 = vsub.bf16 0, %v2002
    %v2067 = vsub.bf16 0, %v2003
    %v2068 = vsub.bf16 0, %v2004
    %v2069 = vsub.bf16 0, %v2005
    %v2070 = vsub.bf16 0, %v2006
    %v2071 = vsub.bf16 0, %v2007
    %v2072 = vsub.bf16 0, %v2008
    %v2073 = vsub.bf16 0, %v2009
    %v2074 = vsub.bf16 0, %v2010
    %v2075 = vsub.bf16 0, %v2011
    %v2076 = vsub.bf16 0, %v2012
    %v2077 = vsub.bf16 0, %v2013
    %v2078 = vsub.bf16 0, %v2014
    %v2079 = vsub.bf16 0, %v2015
    %v2080 = vsub.bf16 0, %v2016
    %v2081 = vsub.bf16 0, %v2017
    %v2082 = vsub.bf16 0, %v2018
    %v2083 = vsub.bf16 0, %v2019
    %v2084 = vsub.bf16 0, %v2020
    %v2085 = vsub.bf16 0, %v2021
    %v2086 = vsub.bf16 0, %v2022
    %v2087 = vsub.bf16 0, %v2023
    %v2088 = vsub.bf16 0, %v2024
    %v2089 = vsub.bf16 0, %v2025
    %v2090 = vsub.bf16 0, %v2026
    %v2091 = vsub.bf16 0, %v2027
    %v2092 = vsub.bf16 0, %v2028
    %v2094 = vmul.bf16 %v2029, 1069105081
    %v2095 = vpow.bf16.pop %v2094
    %v2097 = vmul.bf16 %v2030, 1069105081
    %v2098 = vpow.bf16.pop %v2097
    %v2100 = vmul.bf16 %v2031, 1069105081
    %v2101 = vpow.bf16.pop %v2100
    %v2103 = vmul.bf16 %v2032, 1069105081
    %v2104 = vpow.bf16.pop %v2103
    %v2106 = vmul.bf16 %v2033, 1069105081
    %v2107 = vpow.bf16.pop %v2106
    %v2109 = vmul.bf16 %v2034, 1069105081
    %v2110 = vpow.bf16.pop %v2109
    %v2112 = vmul.bf16 %v2035, 1069105081
    %v2113 = vpow.bf16.pop %v2112
    %v2115 = vmul.bf16 %v2036, 1069105081
    %v2116 = vpow.bf16.pop %v2115
    %v2118 = vmul.bf16 %v2037, 1069105081
    %v2119 = vpow.bf16.pop %v2118
    %v2121 = vmul.bf16 %v2038, 1069105081
    %v2122 = vpow.bf16.pop %v2121
    %v2124 = vmul.bf16 %v2039, 1069105081
    %v2125 = vpow.bf16.pop %v2124
    %v2127 = vmul.bf16 %v2040, 1069105081
    %v2128 = vpow.bf16.pop %v2127
    %v2130 = vmul.bf16 %v2041, 1069105081
    %v2131 = vpow.bf16.pop %v2130
    %v2133 = vmul.bf16 %v2042, 1069105081
    %v2134 = vpow.bf16.pop %v2133
    %v2136 = vmul.bf16 %v2043, 1069105081
    %v2137 = vpow.bf16.pop %v2136
    %v2139 = vmul.bf16 %v2044, 1069105081
    %v2140 = vpow.bf16.pop %v2139
    %v2142 = vmul.bf16 %v2045, 1069105081
    %v2143 = vpow.bf16.pop %v2142
    %v2145 = vmul.bf16 %v2046, 1069105081
    %v2146 = vpow.bf16.pop %v2145
    %v2148 = vmul.bf16 %v2047, 1069105081
    %v2149 = vpow.bf16.pop %v2148
    %v2151 = vmul.bf16 %v2048, 1069105081
    %v2152 = vpow.bf16.pop %v2151
    %v2154 = vmul.bf16 %v2049, 1069105081
    %v2155 = vpow.bf16.pop %v2154
    %v2157 = vmul.bf16 %v2050, 1069105081
    %v2158 = vpow.bf16.pop %v2157
    %v2160 = vmul.bf16 %v2051, 1069105081
    %v2161 = vpow.bf16.pop %v2160
    %v2163 = vmul.bf16 %v2052, 1069105081
    %v2164 = vpow.bf16.pop %v2163
    %v2166 = vmul.bf16 %v2053, 1069105081
    %v2167 = vpow.bf16.pop %v2166
    %v2169 = vmul.bf16 %v2054, 1069105081
    %v2170 = vpow.bf16.pop %v2169
    %v2172 = vmul.bf16 %v2055, 1069105081
    %v2173 = vpow.bf16.pop %v2172
    %v2175 = vmul.bf16 %v2056, 1069105081
    %v2176 = vpow.bf16.pop %v2175
    %v2178 = vmul.bf16 %v2057, 1069105081
    %v2179 = vpow.bf16.pop %v2178
    %v2181 = vmul.bf16 %v2058, 1069105081
    %v2182 = vpow.bf16.pop %v2181
    %v2184 = vmul.bf16 %v2059, 1069105081
    %v2185 = vpow.bf16.pop %v2184
    %v2187 = vmul.bf16 %v2060, 1069105081
    %v2188 = vpow.bf16.pop %v2187
    %v2190 = vmul.bf16 %v2061, 1069105081
    %v2191 = vpow.bf16.pop %v2190
    %v2193 = vmul.bf16 %v2062, 1069105081
    %v2194 = vpow.bf16.pop %v2193
    %v2196 = vmul.bf16 %v2063, 1069105081
    %v2197 = vpow.bf16.pop %v2196
    %v2199 = vmul.bf16 %v2064, 1069105081
    %v2200 = vpow.bf16.pop %v2199
    %v2202 = vmul.bf16 %v2065, 1069105081
    %v2203 = vpow.bf16.pop %v2202
    %v2205 = vmul.bf16 %v2066, 1069105081
    %v2206 = vpow.bf16.pop %v2205
    %v2208 = vmul.bf16 %v2067, 1069105081
    %v2209 = vpow.bf16.pop %v2208
    %v2211 = vmul.bf16 %v2068, 1069105081
    %v2212 = vpow.bf16.pop %v2211
    %v2214 = vmul.bf16 %v2069, 1069105081
    %v2215 = vpow.bf16.pop %v2214
    %v2217 = vmul.bf16 %v2070, 1069105081
    %v2218 = vpow.bf16.pop %v2217
    %v2220 = vmul.bf16 %v2071, 1069105081
    %v2221 = vpow.bf16.pop %v2220
    %v2223 = vmul.bf16 %v2072, 1069105081
    %v2224 = vpow.bf16.pop %v2223
    %v2226 = vmul.bf16 %v2073, 1069105081
    %v2227 = vpow.bf16.pop %v2226
    %v2229 = vmul.bf16 %v2074, 1069105081
    %v2230 = vpow.bf16.pop %v2229
    %v2232 = vmul.bf16 %v2075, 1069105081
    %v2233 = vpow.bf16.pop %v2232
    %v2235 = vmul.bf16 %v2076, 1069105081
    %v2236 = vpow.bf16.pop %v2235
    %v2238 = vmul.bf16 %v2077, 1069105081
    %v2239 = vpow.bf16.pop %v2238
    %v2241 = vmul.bf16 %v2078, 1069105081
    %v2242 = vpow.bf16.pop %v2241
    %v2244 = vmul.bf16 %v2079, 1069105081
    %v2245 = vpow.bf16.pop %v2244
    %v2247 = vmul.bf16 %v2080, 1069105081
    %v2248 = vpow.bf16.pop %v2247
    %v2250 = vmul.bf16 %v2081, 1069105081
    %v2251 = vpow.bf16.pop %v2250
    %v2253 = vmul.bf16 %v2082, 1069105081
    %v2254 = vpow.bf16.pop %v2253
    %v2256 = vmul.bf16 %v2083, 1069105081
    %v2257 = vpow.bf16.pop %v2256
    %v2259 = vmul.bf16 %v2084, 1069105081
    %v2260 = vpow.bf16.pop %v2259
    %v2262 = vmul.bf16 %v2085, 1069105081
    %v2263 = vpow.bf16.pop %v2262
    %v2265 = vmul.bf16 %v2086, 1069105081
    %v2266 = vpow.bf16.pop %v2265
    %v2268 = vmul.bf16 %v2087, 1069105081
    %v2269 = vpow.bf16.pop %v2268
    %v2271 = vmul.bf16 %v2088, 1069105081
    %v2272 = vpow.bf16.pop %v2271
    %v2274 = vmul.bf16 %v2089, 1069105081
    %v2275 = vpow.bf16.pop %v2274
    %v2277 = vmul.bf16 %v2090, 1069105081
    %v2278 = vpow.bf16.pop %v2277
    %v2280 = vmul.bf16 %v2091, 1069105081
    %v2281 = vpow.bf16.pop %v2280
    %v2283 = vmul.bf16 %v2092, 1069105081
    %v2284 = vpow.bf16.pop %v2283
    %2285 = vset.pattern.permute.xlu0 5
    %2286 = vperm.xlu0 %2285, %v1069
    %v2287 = vpop.permute.xlu0 %2286
    %2289 = vset.pattern.permute.xlu0 5
    %2290 = vperm.xlu0 %2289, %v1070
    %v2291 = vpop.permute.xlu0 %2290
    %2293 = vset.pattern.permute.xlu0 5
    %2294 = vperm.xlu0 %2293, %v1071
    %v2295 = vpop.permute.xlu0 %2294
    %2297 = vset.pattern.permute.xlu0 5
    %2298 = vperm.xlu0 %2297, %v1072
    %v2299 = vpop.permute.xlu0 %2298
    %2301 = vset.pattern.permute.xlu0 5
    %2302 = vperm.xlu0 %2301, %v1073
    %v2303 = vpop.permute.xlu0 %2302
    %2305 = vset.pattern.permute.xlu0 5
    %2306 = vperm.xlu0 %2305, %v1074
    %v2307 = vpop.permute.xlu0 %2306
    %2309 = vset.pattern.permute.xlu0 5
    %2310 = vperm.xlu0 %2309, %v1075
    %v2311 = vpop.permute.xlu0 %2310
    %2313 = vset.pattern.permute.xlu0 5
    %2314 = vperm.xlu0 %2313, %v1076
    %v2315 = vpop.permute.xlu0 %2314
    %2317 = vset.pattern.permute.xlu0 5
    %2318 = vperm.xlu0 %2317, %v1077
    %v2319 = vpop.permute.xlu0 %2318
    %2321 = vset.pattern.permute.xlu0 5
    %2322 = vperm.xlu0 %2321, %v1078
    %v2323 = vpop.permute.xlu0 %2322
    %2325 = vset.pattern.permute.xlu0 5
    %2326 = vperm.xlu0 %2325, %v1079
    %v2327 = vpop.permute.xlu0 %2326
    %2329 = vset.pattern.permute.xlu0 5
    %2330 = vperm.xlu0 %2329, %v1080
    %v2331 = vpop.permute.xlu0 %2330
    %2333 = vset.pattern.permute.xlu0 5
    %2334 = vperm.xlu0 %2333, %v1081
    %v2335 = vpop.permute.xlu0 %2334
    %2337 = vset.pattern.permute.xlu0 5
    %2338 = vperm.xlu0 %2337, %v1082
    %v2339 = vpop.permute.xlu0 %2338
    %2341 = vset.pattern.permute.xlu0 5
    %2342 = vperm.xlu0 %2341, %v1083
    %v2343 = vpop.permute.xlu0 %2342
    %2345 = vset.pattern.permute.xlu0 5
    %2346 = vperm.xlu0 %2345, %v1084
    %v2347 = vpop.permute.xlu0 %2346
    %2349 = vset.pattern.permute.xlu0 5
    %2350 = vperm.xlu0 %2349, %v1085
    %v2351 = vpop.permute.xlu0 %2350
    %2353 = vset.pattern.permute.xlu0 5
    %2354 = vperm.xlu0 %2353, %v1086
    %v2355 = vpop.permute.xlu0 %2354
    %2357 = vset.pattern.permute.xlu0 5
    %2358 = vperm.xlu0 %2357, %v1087
    %v2359 = vpop.permute.xlu0 %2358
    %2361 = vset.pattern.permute.xlu0 5
    %2362 = vperm.xlu0 %2361, %v1088
    %v2363 = vpop.permute.xlu0 %2362
    %2365 = vset.pattern.permute.xlu0 5
    %2366 = vperm.xlu0 %2365, %v1089
    %v2367 = vpop.permute.xlu0 %2366
    %2369 = vset.pattern.permute.xlu0 5
    %2370 = vperm.xlu0 %2369, %v1090
    %v2371 = vpop.permute.xlu0 %2370
    %2373 = vset.pattern.permute.xlu0 5
    %2374 = vperm.xlu0 %2373, %v1091
    %v2375 = vpop.permute.xlu0 %2374
    %2377 = vset.pattern.permute.xlu0 5
    %2378 = vperm.xlu0 %2377, %v1092
    %v2379 = vpop.permute.xlu0 %2378
    %2381 = vset.pattern.permute.xlu0 5
    %2382 = vperm.xlu0 %2381, %v1093
    %v2383 = vpop.permute.xlu0 %2382
    %2385 = vset.pattern.permute.xlu0 5
    %2386 = vperm.xlu0 %2385, %v1094
    %v2387 = vpop.permute.xlu0 %2386
    %2389 = vset.pattern.permute.xlu0 5
    %2390 = vperm.xlu0 %2389, %v1095
    %v2391 = vpop.permute.xlu0 %2390
    %2393 = vset.pattern.permute.xlu0 5
    %2394 = vperm.xlu0 %2393, %v1096
    %v2395 = vpop.permute.xlu0 %2394
    %2397 = vset.pattern.permute.xlu0 5
    %2398 = vperm.xlu0 %2397, %v1097
    %v2399 = vpop.permute.xlu0 %2398
    %2401 = vset.pattern.permute.xlu0 5
    %2402 = vperm.xlu0 %2401, %v1098
    %v2403 = vpop.permute.xlu0 %2402
    %2405 = vset.pattern.permute.xlu0 5
    %2406 = vperm.xlu0 %2405, %v1099
    %v2407 = vpop.permute.xlu0 %2406
    %2409 = vset.pattern.permute.xlu0 5
    %2410 = vperm.xlu0 %2409, %v1100
    %v2411 = vpop.permute.xlu0 %2410
    %v2413 = vmul.bf16 %v2287, %v2095
    %v2414 = vmul.bf16 %v2287, %v2098
    %v2415 = vmul.bf16 %v2291, %v2101
    %v2416 = vmul.bf16 %v2291, %v2104
    %v2417 = vmul.bf16 %v2295, %v2107
    %v2418 = vmul.bf16 %v2295, %v2110
    %v2419 = vmul.bf16 %v2299, %v2113
    %v2420 = vmul.bf16 %v2299, %v2116
    %v2421 = vmul.bf16 %v2303, %v2119
    %v2422 = vmul.bf16 %v2303, %v2122
    %v2423 = vmul.bf16 %v2307, %v2125
    %v2424 = vmul.bf16 %v2307, %v2128
    %v2425 = vmul.bf16 %v2311, %v2131
    %v2426 = vmul.bf16 %v2311, %v2134
    %v2427 = vmul.bf16 %v2315, %v2137
    %v2428 = vmul.bf16 %v2315, %v2140
    %v2429 = vmul.bf16 %v2319, %v2143
    %v2430 = vmul.bf16 %v2319, %v2146
    %v2431 = vmul.bf16 %v2323, %v2149
    %v2432 = vmul.bf16 %v2323, %v2152
    %v2433 = vmul.bf16 %v2327, %v2155
    %v2434 = vmul.bf16 %v2327, %v2158
    %v2435 = vmul.bf16 %v2331, %v2161
    %v2436 = vmul.bf16 %v2331, %v2164
    %v2437 = vmul.bf16 %v2335, %v2167
    %v2438 = vmul.bf16 %v2335, %v2170
    %v2439 = vmul.bf16 %v2339, %v2173
    %v2440 = vmul.bf16 %v2339, %v2176
    %v2441 = vmul.bf16 %v2343, %v2179
    %v2442 = vmul.bf16 %v2343, %v2182
    %v2443 = vmul.bf16 %v2347, %v2185
    %v2444 = vmul.bf16 %v2347, %v2188
    %v2445 = vmul.bf16 %v2351, %v2191
    %v2446 = vmul.bf16 %v2351, %v2194
    %v2447 = vmul.bf16 %v2355, %v2197
    %v2448 = vmul.bf16 %v2355, %v2200
    %v2449 = vmul.bf16 %v2359, %v2203
    %v2450 = vmul.bf16 %v2359, %v2206
    %v2451 = vmul.bf16 %v2363, %v2209
    %v2452 = vmul.bf16 %v2363, %v2212
    %v2453 = vmul.bf16 %v2367, %v2215
    %v2454 = vmul.bf16 %v2367, %v2218
    %v2455 = vmul.bf16 %v2371, %v2221
    %v2456 = vmul.bf16 %v2371, %v2224
    %v2457 = vmul.bf16 %v2375, %v2227
    %v2458 = vmul.bf16 %v2375, %v2230
    %v2459 = vmul.bf16 %v2379, %v2233
    %v2460 = vmul.bf16 %v2379, %v2236
    %v2461 = vmul.bf16 %v2383, %v2239
    %v2462 = vmul.bf16 %v2383, %v2242
    %v2463 = vmul.bf16 %v2387, %v2245
    %v2464 = vmul.bf16 %v2387, %v2248
    %v2465 = vmul.bf16 %v2391, %v2251
    %v2466 = vmul.bf16 %v2391, %v2254
    %v2467 = vmul.bf16 %v2395, %v2257
    %v2468 = vmul.bf16 %v2395, %v2260
    %v2469 = vmul.bf16 %v2399, %v2263
    %v2470 = vmul.bf16 %v2399, %v2266
    %v2471 = vmul.bf16 %v2403, %v2269
    %v2472 = vmul.bf16 %v2403, %v2272
    %v2473 = vmul.bf16 %v2407, %v2275
    %v2474 = vmul.bf16 %v2407, %v2278
    %v2475 = vmul.bf16 %v2411, %v2281
    %v2476 = vmul.bf16 %v2411, %v2284
    %v2477 = vmin.bf16 %v2413, 1065369472
    %v2478 = vmin.bf16 %v2414, 1065369472
    %v2479 = vmin.bf16 %v2415, 1065369472
    %v2480 = vmin.bf16 %v2416, 1065369472
    %v2481 = vmin.bf16 %v2417, 1065369472
    %v2482 = vmin.bf16 %v2418, 1065369472
    %v2483 = vmin.bf16 %v2419, 1065369472
    %v2484 = vmin.bf16 %v2420, 1065369472
    %v2485 = vmin.bf16 %v2421, 1065369472
    %v2486 = vmin.bf16 %v2422, 1065369472
    %v2487 = vmin.bf16 %v2423, 1065369472
    %v2488 = vmin.bf16 %v2424, 1065369472
    %v2489 = vmin.bf16 %v2425, 1065369472
    %v2490 = vmin.bf16 %v2426, 1065369472
    %v2491 = vmin.bf16 %v2427, 1065369472
    %v2492 = vmin.bf16 %v2428, 1065369472
    %v2493 = vmin.bf16 %v2429, 1065369472
    %v2494 = vmin.bf16 %v2430, 1065369472
    %v2495 = vmin.bf16 %v2431, 1065369472
    %v2496 = vmin.bf16 %v2432, 1065369472
    %v2497 = vmin.bf16 %v2433, 1065369472
    %v2498 = vmin.bf16 %v2434, 1065369472
    %v2499 = vmin.bf16 %v2435, 1065369472
    %v2500 = vmin.bf16 %v2436, 1065369472
    %v2501 = vmin.bf16 %v2437, 1065369472
    %v2502 = vmin.bf16 %v2438, 1065369472
    %v2503 = vmin.bf16 %v2439, 1065369472
    %v2504 = vmin.bf16 %v2440, 1065369472
    %v2505 = vmin.bf16 %v2441, 1065369472
    %v2506 = vmin.bf16 %v2442, 1065369472
    %v2507 = vmin.bf16 %v2443, 1065369472
    %v2508 = vmin.bf16 %v2444, 1065369472
    %v2509 = vmin.bf16 %v2445, 1065369472
    %v2510 = vmin.bf16 %v2446, 1065369472
    %v2511 = vmin.bf16 %v2447, 1065369472
    %v2512 = vmin.bf16 %v2448, 1065369472
    %v2513 = vmin.bf16 %v2449, 1065369472
    %v2514 = vmin.bf16 %v2450, 1065369472
    %v2515 = vmin.bf16 %v2451, 1065369472
    %v2516 = vmin.bf16 %v2452, 1065369472
    %v2517 = vmin.bf16 %v2453, 1065369472
    %v2518 = vmin.bf16 %v2454, 1065369472
    %v2519 = vmin.bf16 %v2455, 1065369472
    %v2520 = vmin.bf16 %v2456, 1065369472
    %v2521 = vmin.bf16 %v2457, 1065369472
    %v2522 = vmin.bf16 %v2458, 1065369472
    %v2523 = vmin.bf16 %v2459, 1065369472
    %v2524 = vmin.bf16 %v2460, 1065369472
    %v2525 = vmin.bf16 %v2461, 1065369472
    %v2526 = vmin.bf16 %v2462, 1065369472
    %v2527 = vmin.bf16 %v2463, 1065369472
    %v2528 = vmin.bf16 %v2464, 1065369472
    %v2529 = vmin.bf16 %v2465, 1065369472
    %v2530 = vmin.bf16 %v2466, 1065369472
    %v2531 = vmin.bf16 %v2467, 1065369472
    %v2532 = vmin.bf16 %v2468, 1065369472
    %v2533 = vmin.bf16 %v2469, 1065369472
    %v2534 = vmin.bf16 %v2470, 1065369472
    %v2535 = vmin.bf16 %v2471, 1065369472
    %v2536 = vmin.bf16 %v2472, 1065369472
    %v2537 = vmin.bf16 %v2473, 1065369472
    %v2538 = vmin.bf16 %v2474, 1065369472
    %v2539 = vmin.bf16 %v2475, 1065369472
    %v2540 = vmin.bf16 %v2476, 1065369472
    %vm2541 = vcmp.ge.bf16.partialorder %v2477, 998325121
    %vm2542 = vcmp.ge.bf16.partialorder %v2478, 998325121
    %vm2543 = vcmp.ge.bf16.partialorder %v2479, 998325121
    %vm2544 = vcmp.ge.bf16.partialorder %v2480, 998325121
    %vm2545 = vcmp.ge.bf16.partialorder %v2481, 998325121
    %vm2546 = vcmp.ge.bf16.partialorder %v2482, 998325121
    %vm2547 = vcmp.ge.bf16.partialorder %v2483, 998325121
    %vm2548 = vcmp.ge.bf16.partialorder %v2484, 998325121
    %vm2549 = vcmp.ge.bf16.partialorder %v2485, 998325121
    %vm2550 = vcmp.ge.bf16.partialorder %v2486, 998325121
    %vm2551 = vcmp.ge.bf16.partialorder %v2487, 998325121
    %vm2552 = vcmp.ge.bf16.partialorder %v2488, 998325121
    %vm2553 = vcmp.ge.bf16.partialorder %v2489, 998325121
    %vm2554 = vcmp.ge.bf16.partialorder %v2490, 998325121
    %vm2555 = vcmp.ge.bf16.partialorder %v2491, 998325121
    %vm2556 = vcmp.ge.bf16.partialorder %v2492, 998325121
    %vm2557 = vcmp.ge.bf16.partialorder %v2493, 998325121
    %vm2558 = vcmp.ge.bf16.partialorder %v2494, 998325121
    %vm2559 = vcmp.ge.bf16.partialorder %v2495, 998325121
    %vm2560 = vcmp.ge.bf16.partialorder %v2496, 998325121
    %vm2561 = vcmp.ge.bf16.partialorder %v2497, 998325121
    %vm2562 = vcmp.ge.bf16.partialorder %v2498, 998325121
    %vm2563 = vcmp.ge.bf16.partialorder %v2499, 998325121
    %vm2564 = vcmp.ge.bf16.partialorder %v2500, 998325121
    %vm2565 = vcmp.ge.bf16.partialorder %v2501, 998325121
    %vm2566 = vcmp.ge.bf16.partialorder %v2502, 998325121
    %vm2567 = vcmp.ge.bf16.partialorder %v2503, 998325121
    %vm2568 = vcmp.ge.bf16.partialorder %v2504, 998325121
    %vm2569 = vcmp.ge.bf16.partialorder %v2505, 998325121
    %vm2570 = vcmp.ge.bf16.partialorder %v2506, 998325121
    %vm2571 = vcmp.ge.bf16.partialorder %v2507, 998325121
    %vm2572 = vcmp.ge.bf16.partialorder %v2508, 998325121
    %vm2573 = vcmp.ge.bf16.partialorder %v2509, 998325121
    %vm2574 = vcmp.ge.bf16.partialorder %v2510, 998325121
    %vm2575 = vcmp.ge.bf16.partialorder %v2511, 998325121
    %vm2576 = vcmp.ge.bf16.partialorder %v2512, 998325121
    %vm2577 = vcmp.ge.bf16.partialorder %v2513, 998325121
    %vm2578 = vcmp.ge.bf16.partialorder %v2514, 998325121
    %vm2579 = vcmp.ge.bf16.partialorder %v2515, 998325121
    %vm2580 = vcmp.ge.bf16.partialorder %v2516, 998325121
    %vm2581 = vcmp.ge.bf16.partialorder %v2517, 998325121
    %vm2582 = vcmp.ge.bf16.partialorder %v2518, 998325121
    %vm2583 = vcmp.ge.bf16.partialorder %v2519, 998325121
    %vm2584 = vcmp.ge.bf16.partialorder %v2520, 998325121
    %vm2585 = vcmp.ge.bf16.partialorder %v2521, 998325121
    %vm2586 = vcmp.ge.bf16.partialorder %v2522, 998325121
    %vm2587 = vcmp.ge.bf16.partialorder %v2523, 998325121
    %vm2588 = vcmp.ge.bf16.partialorder %v2524, 998325121
    %vm2589 = vcmp.ge.bf16.partialorder %v2525, 998325121
    %vm2590 = vcmp.ge.bf16.partialorder %v2526, 998325121
    %vm2591 = vcmp.ge.bf16.partialorder %v2527, 998325121
    %vm2592 = vcmp.ge.bf16.partialorder %v2528, 998325121
    %vm2593 = vcmp.ge.bf16.partialorder %v2529, 998325121
    %vm2594 = vcmp.ge.bf16.partialorder %v2530, 998325121
    %vm2595 = vcmp.ge.bf16.partialorder %v2531, 998325121
    %vm2596 = vcmp.ge.bf16.partialorder %v2532, 998325121
    %vm2597 = vcmp.ge.bf16.partialorder %v2533, 998325121
    %vm2598 = vcmp.ge.bf16.partialorder %v2534, 998325121
    %vm2599 = vcmp.ge.bf16.partialorder %v2535, 998325121
    %vm2600 = vcmp.ge.bf16.partialorder %v2536, 998325121
    %vm2601 = vcmp.ge.bf16.partialorder %v2537, 998325121
    %vm2602 = vcmp.ge.bf16.partialorder %v2538, 998325121
    %vm2603 = vcmp.ge.bf16.partialorder %v2539, 998325121
    %vm2604 = vcmp.ge.bf16.partialorder %v2540, 998325121
    %v2605 = vsel %vm2541, %v2477, 0
    %v2606 = vsel %vm2542, %v2478, 0
    %v2607 = vsel %vm2543, %v2479, 0
    %v2608 = vsel %vm2544, %v2480, 0
    %v2609 = vsel %vm2545, %v2481, 0
    %v2610 = vsel %vm2546, %v2482, 0
    %v2611 = vsel %vm2547, %v2483, 0
    %v2612 = vsel %vm2548, %v2484, 0
    %v2613 = vsel %vm2549, %v2485, 0
    %v2614 = vsel %vm2550, %v2486, 0
    %v2615 = vsel %vm2551, %v2487, 0
    %v2616 = vsel %vm2552, %v2488, 0
    %v2617 = vsel %vm2553, %v2489, 0
    %v2618 = vsel %vm2554, %v2490, 0
    %v2619 = vsel %vm2555, %v2491, 0
    %v2620 = vsel %vm2556, %v2492, 0
    %v2621 = vsel %vm2557, %v2493, 0
    %v2622 = vsel %vm2558, %v2494, 0
    %v2623 = vsel %vm2559, %v2495, 0
    %v2624 = vsel %vm2560, %v2496, 0
    %v2625 = vsel %vm2561, %v2497, 0
    %v2626 = vsel %vm2562, %v2498, 0
    %v2627 = vsel %vm2563, %v2499, 0
    %v2628 = vsel %vm2564, %v2500, 0
    %v2629 = vsel %vm2565, %v2501, 0
    %v2630 = vsel %vm2566, %v2502, 0
    %v2631 = vsel %vm2567, %v2503, 0
    %v2632 = vsel %vm2568, %v2504, 0
    %v2633 = vsel %vm2569, %v2505, 0
    %v2634 = vsel %vm2570, %v2506, 0
    %v2635 = vsel %vm2571, %v2507, 0
    %v2636 = vsel %vm2572, %v2508, 0
    %v2637 = vsel %vm2573, %v2509, 0
    %v2638 = vsel %vm2574, %v2510, 0
    %v2639 = vsel %vm2575, %v2511, 0
    %v2640 = vsel %vm2576, %v2512, 0
    %v2641 = vsel %vm2577, %v2513, 0
    %v2642 = vsel %vm2578, %v2514, 0
    %v2643 = vsel %vm2579, %v2515, 0
    %v2644 = vsel %vm2580, %v2516, 0
    %v2645 = vsel %vm2581, %v2517, 0
    %v2646 = vsel %vm2582, %v2518, 0
    %v2647 = vsel %vm2583, %v2519, 0
    %v2648 = vsel %vm2584, %v2520, 0
    %v2649 = vsel %vm2585, %v2521, 0
    %v2650 = vsel %vm2586, %v2522, 0
    %v2651 = vsel %vm2587, %v2523, 0
    %v2652 = vsel %vm2588, %v2524, 0
    %v2653 = vsel %vm2589, %v2525, 0
    %v2654 = vsel %vm2590, %v2526, 0
    %v2655 = vsel %vm2591, %v2527, 0
    %v2656 = vsel %vm2592, %v2528, 0
    %v2657 = vsel %vm2593, %v2529, 0
    %v2658 = vsel %vm2594, %v2530, 0
    %v2659 = vsel %vm2595, %v2531, 0
    %v2660 = vsel %vm2596, %v2532, 0
    %v2661 = vsel %vm2597, %v2533, 0
    %v2662 = vsel %vm2598, %v2534, 0
    %v2663 = vsel %vm2599, %v2535, 0
    %v2664 = vsel %vm2600, %v2536, 0
    %v2665 = vsel %vm2601, %v2537, 0
    %v2666 = vsel %vm2602, %v2538, 0
    %v2667 = vsel %vm2603, %v2539, 0
    %v2668 = vsel %vm2604, %v2540, 0
    %v2671 = vunpack.c.l.b16 %v85
    %v2672 = vunpack.c.h.b16 %v85
    %v2673 = vunpack.c.l.b16 %v86
    %v2674 = vunpack.c.h.b16 %v86
    %v2675 = vpack.c.b16 %v2671, %v2671
    %v2676 = vpack.c.b16 %v2672, %v2672
    %v2677 = vpack.c.b16 %v2673, %v2673
    %v2678 = vpack.c.b16 %v2674, %v2674
    %2683 = vmatprep.subr.bf16.mxu0 %v2620
    %2684 = vmatpush1.bf16.msra.mxu0 %v2619
    %2685 = vmatprep.subr.bf16.mxu0 %v2618
    %2686 = vmatpush1.bf16.msra.mxu0 %v2617
    %2687 = vmatprep.subr.bf16.mxu0 %v2616
    %2688 = vmatpush1.bf16.msra.mxu0 %v2615
    %2689 = vmatprep.subr.bf16.mxu0 %v2614
    %2690 = vmatpush1.bf16.msra.mxu0 %v2613
    %2691 = vmatprep.subr.bf16.mxu0 %v2612
    %2692 = vmatpush1.bf16.msra.mxu0 %v2611
    %2693 = vmatprep.subr.bf16.mxu0 %v2610
    %2694 = vmatpush1.bf16.msra.mxu0 %v2609
    %2695 = vmatprep.subr.bf16.mxu0 %v2608
    %2696 = vmatpush1.bf16.msra.mxu0 %v2607
    %2697 = vmatprep.subr.bf16.mxu0 %v2606
    %2698 = vmatpush1.bf16.msra.mxu0 %v2605
    %2699 = vmatprep.subr.bf16.mxu0 %v2636
    %2700 = vmatpush2.bf16.msra.mxu0 %v2635
    %2701 = vmatprep.subr.bf16.mxu0 %v2634
    %2702 = vmatpush2.bf16.msra.mxu0 %v2633
    %2703 = vmatprep.subr.bf16.mxu0 %v2632
    %2704 = vmatpush2.bf16.msra.mxu0 %v2631
    %2705 = vmatprep.subr.bf16.mxu0 %v2630
    %2706 = vmatpush2.bf16.msra.mxu0 %v2629
    %2707 = vmatprep.subr.bf16.mxu0 %v2628
    %2708 = vmatpush2.bf16.msra.mxu0 %v2627
    %2709 = vmatprep.subr.bf16.mxu0 %v2626
    %2710 = vmatpush2.bf16.msra.mxu0 %v2625
    %2711 = vmatprep.subr.bf16.mxu0 %v2624
    %2712 = vmatpush2.bf16.msra.mxu0 %v2623
    %2713 = vmatprep.subr.bf16.mxu0 %v2622
    %2714 = vmatpush2.bf16.msra.mxu0 %v2621
    %2715 = vmatprep.mubr.bf16.mxu0 %v2676
    %2716 = vmatmul.mubr.bf16.gmra.mxu0 %v2675
    %v2717 = vpop.f32.mrf.mxu0
    %v2718 = vadd.f32 0.0, %v2717
    %v2719 = vpop.f32.mrf.mxu0
    %v2720 = vadd.f32 0.0, %v2719
    %v2721 = vpop.f32.mrf.mxu0
    %v2722 = vpop.f32.mrf.mxu0
    %2723 = vdwg.mxu0
    %2724 = vmatprep.subr.bf16.mxu0 %v2652
    %2725 = vmatpush1.bf16.msra.mxu0 %v2651
    %2726 = vmatprep.subr.bf16.mxu0 %v2650
    %2727 = vmatpush1.bf16.msra.mxu0 %v2649
    %2728 = vmatprep.subr.bf16.mxu0 %v2648
    %2729 = vmatpush1.bf16.msra.mxu0 %v2647
    %2730 = vmatprep.subr.bf16.mxu0 %v2646
    %2731 = vmatpush1.bf16.msra.mxu0 %v2645
    %2732 = vmatprep.subr.bf16.mxu0 %v2644
    %2733 = vmatpush1.bf16.msra.mxu0 %v2643
    %2734 = vmatprep.subr.bf16.mxu0 %v2642
    %2735 = vmatpush1.bf16.msra.mxu0 %v2641
    %2736 = vmatprep.subr.bf16.mxu0 %v2640
    %2737 = vmatpush1.bf16.msra.mxu0 %v2639
    %2738 = vmatprep.subr.bf16.mxu0 %v2638
    %2739 = vmatpush1.bf16.msra.mxu0 %v2637
    %2740 = vmatprep.subr.bf16.mxu0 %v2668
    %2741 = vmatpush2.bf16.msra.mxu0 %v2667
    %2742 = vmatprep.subr.bf16.mxu0 %v2666
    %2743 = vmatpush2.bf16.msra.mxu0 %v2665
    %2744 = vmatprep.subr.bf16.mxu0 %v2664
    %2745 = vmatpush2.bf16.msra.mxu0 %v2663
    %2746 = vmatprep.subr.bf16.mxu0 %v2662
    %2747 = vmatpush2.bf16.msra.mxu0 %v2661
    %2748 = vmatprep.subr.bf16.mxu0 %v2660
    %2749 = vmatpush2.bf16.msra.mxu0 %v2659
    %2750 = vmatprep.subr.bf16.mxu0 %v2658
    %2751 = vmatpush2.bf16.msra.mxu0 %v2657
    %2752 = vmatprep.subr.bf16.mxu0 %v2656
    %2753 = vmatpush2.bf16.msra.mxu0 %v2655
    %2754 = vmatprep.subr.bf16.mxu0 %v2654
    %2755 = vmatpush2.bf16.msra.mxu0 %v2653
    %2756 = vmatprep.mubr.bf16.mxu0 %v2678
    %2757 = vmatmul.mubr.bf16.gmra.mxu0 %v2677
    %v2758 = vpop.f32.mrf.mxu0
    %v2759 = vadd.f32 %v2718, %v2758
    %v2760 = vpop.f32.mrf.mxu0
    %v2761 = vadd.f32 %v2720, %v2760
    %v2762 = vpop.f32.mrf.mxu0
    %v2763 = vpop.f32.mrf.mxu0
    %2764 = vdwg.mxu0
    %2765 = vst [vmem:[#allocation2] sm:$0x3f] %v2759
    %2766 = vst [vmem:[#allocation2 + $0x8] sm:$0x3f] %v2761
    // Predicated region
    $region14: #{tpu_custom_call.1} parent=1 // pred_check
      _
    $region15: #{tpu_custom_call.1} parent=1 // pred_check_branch
      %2768 = sbr.rel (0) target = $region17
    $region16: #{tpu_custom_call.1} parent=1 // pred_region
      %s2770 = ssub.s32 256, 256
      %2771 = vsyncadd [#allocation3], %s2770
      %s2773 = sshll.u32 [#allocation2], 4
      %s2774 = int_to_ptr.vmem [resolvable:$true] %s2773
      %2776 = dma.vmem_to_hbm [thread:$0]  %s2774, 256, %s3, [#allocation3]
    $region17: #{tpu_custom_call.1} parent=1 // pred_fallthru
      _
    // Predicated region
    $region18: #{tpu_custom_call.1} parent=1 // pred_check
      _
    $region19: #{tpu_custom_call.1} parent=1 // pred_check_branch
      %2778 = sbr.rel (0) target = $region21
    $region20: #{tpu_custom_call.1} parent=1 // pred_region
      %2779 = dma.done [#allocation3], 256
    $region21: #{tpu_custom_call.1} parent=1 // pred_fallthru
      _
    %2780 = vsyncpa [#allocation3], 1

// kernel: tpu_custom_call.1
$region0: #{tpu_custom_call.1}
  #allocation0 [shape = 'u32[]', space=smem, size = 0x4, offset = 0x4, fixed_abs, tag = 'smem constant byte address 0x4 - core index']
  #allocation1 [shape = 'u32[144,128]{1,0:T(1,128)}', space=vmem, size = 0x12000, scoped, tag = 'internal scratch']
  %s0 = inlined_call_operand.vmem [shape: f32[2,256], index: 0, kind: input, shape index: {}]
  %s1 = inlined_call_operand.vmem [shape: f32[512,8], index: 1, kind: input, shape index: {}]
  %s2 = inlined_call_operand.vmem [shape: bf16[6,512], index: 2, kind: input, shape index: {}]
  %s3 = inlined_call_operand.hbm [shape: f32[6,256], index: 3, kind: output, shape index: {}]
  %s4 = sld [smem:[#allocation0]]
  $region22: #{tpu_custom_call.1} parent=0
    _
  %s6 = ssub.s32 1, %s4
  %s7 = scalar_select 0, %s6, %s4
  $region1: #{tpu_custom_call.1} parent=0
    #allocation2 [shape = 'u8[8192]{0}', space=vmem, size = 0x2000, scoped, tag = 'output window, operand 0, single buffered']
    #allocation3 [shape = 's32[1]{0}', space=sflag, size = 0x4, scoped, tag = 'scoped memory for tpu_custom_call.1']
    %8 = vsyncpa [#allocation3], 0
    // Predicated region
    $region2: #{tpu_custom_call.1} parent=1 // pred_check
      _
    $region3: #{tpu_custom_call.1} parent=1 // pred_check_branch
      %10 = sbr.rel (0) target = $region5
    $region4: #{tpu_custom_call.1} parent=1 // pred_region
      _
    $region5: #{tpu_custom_call.1} parent=1 // pred_fallthru
      _
    // Predicated region
    $region6: #{tpu_custom_call.1} parent=1 // pred_check
      _
    $region7: #{tpu_custom_call.1} parent=1 // pred_check_branch
      %12 = sbr.rel (0) target = $region9
    $region8: #{tpu_custom_call.1} parent=1 // pred_region
      _
    $region9: #{tpu_custom_call.1} parent=1 // pred_fallthru
      _
    // Predicated region
    $region10: #{tpu_custom_call.1} parent=1 // pred_check
      _
    $region11: #{tpu_custom_call.1} parent=1 // pred_check_branch
      %14 = sbr.rel (0) target = $region13
    $region12: #{tpu_custom_call.1} parent=1 // pred_region
      _
    $region13: #{tpu_custom_call.1} parent=1 // pred_fallthru
      _
    %v18 = vld [vmem:[%s0] ss:$2 sm:$0x3]
    %s19 = scalar_lea.vmem %s0, 1
    %v20 = vld [vmem:[%s19] ss:$2 sm:$0x3]
    %v21 = vld [vmem:[%s1] sm:$0xff]
    %v22 = vld [vmem:[%s1 + $0x8] sm:$0xff]
    %v23 = vld [vmem:[%s1 + $0x10] sm:$0xff]
    %v24 = vld [vmem:[%s1 + $0x18] sm:$0xff]
    %v25 = vld [vmem:[%s1 + $0x20] sm:$0xff]
    %v26 = vld [vmem:[%s1 + $0x28] sm:$0xff]
    %v27 = vld [vmem:[%s1 + $0x30] sm:$0xff]
    %v28 = vld [vmem:[%s1 + $0x38] sm:$0xff]
    %v29 = vld [vmem:[%s1 + $0x40] sm:$0xff]
    %v30 = vld [vmem:[%s1 + $0x48] sm:$0xff]
    %v31 = vld [vmem:[%s1 + $0x50] sm:$0xff]
    %v32 = vld [vmem:[%s1 + $0x58] sm:$0xff]
    %v33 = vld [vmem:[%s1 + $0x60] sm:$0xff]
    %v34 = vld [vmem:[%s1 + $0x68] sm:$0xff]
    %v35 = vld [vmem:[%s1 + $0x70] sm:$0xff]
    %v36 = vld [vmem:[%s1 + $0x78] sm:$0xff]
    %v37 = vld [vmem:[%s1 + $0x80] sm:$0xff]
    %v38 = vld [vmem:[%s1 + $0x88] sm:$0xff]
    %v39 = vld [vmem:[%s1 + $0x90] sm:$0xff]
    %v40 = vld [vmem:[%s1 + $0x98] sm:$0xff]
    %v41 = vld [vmem:[%s1 + $0xa0] sm:$0xff]
    %v42 = vld [vmem:[%s1 + $0xa8] sm:$0xff]
    %v43 = vld [vmem:[%s1 + $0xb0] sm:$0xff]
    %v44 = vld [vmem:[%s1 + $0xb8] sm:$0xff]
    %v45 = vld [vmem:[%s1 + $0xc0] sm:$0xff]
    %v46 = vld [vmem:[%s1 + $0xc8] sm:$0xff]
    %v47 = vld [vmem:[%s1 + $0xd0] sm:$0xff]
    %v48 = vld [vmem:[%s1 + $0xd8] sm:$0xff]
    %v49 = vld [vmem:[%s1 + $0xe0] sm:$0xff]
    %v50 = vld [vmem:[%s1 + $0xe8] sm:$0xff]
    %v51 = vld [vmem:[%s1 + $0xf0] sm:$0xff]
    %v52 = vld [vmem:[%s1 + $0xf8] sm:$0xff]
    %v53 = vld [vmem:[%s1 + $0x100] sm:$0xff]
    %v54 = vld [vmem:[%s1 + $0x108] sm:$0xff]
    %v55 = vld [vmem:[%s1 + $0x110] sm:$0xff]
    %v56 = vld [vmem:[%s1 + $0x118] sm:$0xff]
    %v57 = vld [vmem:[%s1 + $0x120] sm:$0xff]
    %v58 = vld [vmem:[%s1 + $0x128] sm:$0xff]
    %v59 = vld [vmem:[%s1 + $0x130] sm:$0xff]
    %v60 = vld [vmem:[%s1 + $0x138] sm:$0xff]
    %v61 = vld [vmem:[%s1 + $0x140] sm:$0xff]
    %v62 = vld [vmem:[%s1 + $0x148] sm:$0xff]
    %v63 = vld [vmem:[%s1 + $0x150] sm:$0xff]
    %v64 = vld [vmem:[%s1 + $0x158] sm:$0xff]
    %v65 = vld [vmem:[%s1 + $0x160] sm:$0xff]
    %v66 = vld [vmem:[%s1 + $0x168] sm:$0xff]
    %v67 = vld [vmem:[%s1 + $0x170] sm:$0xff]
    %v68 = vld [vmem:[%s1 + $0x178] sm:$0xff]
    %v69 = vld [vmem:[%s1 + $0x180] sm:$0xff]
    %v70 = vld [vmem:[%s1 + $0x188] sm:$0xff]
    %v71 = vld [vmem:[%s1 + $0x190] sm:$0xff]
    %v72 = vld [vmem:[%s1 + $0x198] sm:$0xff]
    %v73 = vld [vmem:[%s1 + $0x1a0] sm:$0xff]
    %v74 = vld [vmem:[%s1 + $0x1a8] sm:$0xff]
    %v75 = vld [vmem:[%s1 + $0x1b0] sm:$0xff]
    %v76 = vld [vmem:[%s1 + $0x1b8] sm:$0xff]
    %v77 = vld [vmem:[%s1 + $0x1c0] sm:$0xff]
    %v78 = vld [vmem:[%s1 + $0x1c8] sm:$0xff]
    %v79 = vld [vmem:[%s1 + $0x1d0] sm:$0xff]
    %v80 = vld [vmem:[%s1 + $0x1d8] sm:$0xff]
    %v81 = vld [vmem:[%s1 + $0x1e0] sm:$0xff]
    %v82 = vld [vmem:[%s1 + $0x1e8] sm:$0xff]
    %v83 = vld [vmem:[%s1 + $0x1f0] sm:$0xff]
    %v84 = vld [vmem:[%s1 + $0x1f8] sm:$0xff]
    %v85 = vld [vmem:[%s2] sm:$0x77]
    %v86 = vld [vmem:[%s2 + $0x8] sm:$0x77]
    %88 = vset.pattern.permute.xlu0 0
    %89 = vperm.xlu0 %88, %v21
    %v90 = vpop.permute.xlu0 %89
    %93 = vset.pattern.permute.xlu0 0
    %94 = vperm.xlu0 %93, %v22
    %v95 = vpop.permute.xlu0 %94
    %98 = vset.pattern.permute.xlu0 0
    %99 = vperm.xlu0 %98, %v23
    %v100 = vpop.permute.xlu0 %99
    %103 = vset.pattern.permute.xlu0 0
    %104 = vperm.xlu0 %103, %v24
    %v105 = vpop.permute.xlu0 %104
    %108 = vset.pattern.permute.xlu0 0
    %109 = vperm.xlu0 %108, %v25
    %v110 = vpop.permute.xlu0 %109
    %113 = vset.pattern.permute.xlu0 0
    %114 = vperm.xlu0 %113, %v26
    %v115 = vpop.permute.xlu0 %114
    %118 = vset.pattern.permute.xlu0 0
    %119 = vperm.xlu0 %118, %v27
    %v120 = vpop.permute.xlu0 %119
    %123 = vset.pattern.permute.xlu0 0
    %124 = vperm.xlu0 %123, %v28
    %v125 = vpop.permute.xlu0 %124
    %128 = vset.pattern.permute.xlu0 0
    %129 = vperm.xlu0 %128, %v29
    %v130 = vpop.permute.xlu0 %129
    %133 = vset.pattern.permute.xlu0 0
    %134 = vperm.xlu0 %133, %v30
    %v135 = vpop.permute.xlu0 %134
    %138 = vset.pattern.permute.xlu0 0
    %139 = vperm.xlu0 %138, %v31
    %v140 = vpop.permute.xlu0 %139
    %143 = vset.pattern.permute.xlu0 0
    %144 = vperm.xlu0 %143, %v32
    %v145 = vpop.permute.xlu0 %144
    %148 = vset.pattern.permute.xlu0 0
    %149 = vperm.xlu0 %148, %v33
    %v150 = vpop.permute.xlu0 %149
    %153 = vset.pattern.permute.xlu0 0
    %154 = vperm.xlu0 %153, %v34
    %v155 = vpop.permute.xlu0 %154
    %158 = vset.pattern.permute.xlu0 0
    %159 = vperm.xlu0 %158, %v35
    %v160 = vpop.permute.xlu0 %159
    %163 = vset.pattern.permute.xlu0 0
    %164 = vperm.xlu0 %163, %v36
    %v165 = vpop.permute.xlu0 %164
    %168 = vset.pattern.permute.xlu0 0
    %169 = vperm.xlu0 %168, %v37
    %v170 = vpop.permute.xlu0 %169
    %173 = vset.pattern.permute.xlu0 0
    %174 = vperm.xlu0 %173, %v38
    %v175 = vpop.permute.xlu0 %174
    %178 = vset.pattern.permute.xlu0 0
    %179 = vperm.xlu0 %178, %v39
    %v180 = vpop.permute.xlu0 %179
    %183 = vset.pattern.permute.xlu0 0
    %184 = vperm.xlu0 %183, %v40
    %v185 = vpop.permute.xlu0 %184
    %188 = vset.pattern.permute.xlu0 0
    %189 = vperm.xlu0 %188, %v41
    %v190 = vpop.permute.xlu0 %189
    %193 = vset.pattern.permute.xlu0 0
    %194 = vperm.xlu0 %193, %v42
    %v195 = vpop.permute.xlu0 %194
    %198 = vset.pattern.permute.xlu0 0
    %199 = vperm.xlu0 %198, %v43
    %v200 = vpop.permute.xlu0 %199
    %203 = vset.pattern.permute.xlu0 0
    %204 = vperm.xlu0 %203, %v44
    %v205 = vpop.permute.xlu0 %204
    %208 = vset.pattern.permute.xlu0 0
    %209 = vperm.xlu0 %208, %v45
    %v210 = vpop.permute.xlu0 %209
    %213 = vset.pattern.permute.xlu0 0
    %214 = vperm.xlu0 %213, %v46
    %v215 = vpop.permute.xlu0 %214
    %218 = vset.pattern.permute.xlu0 0
    %219 = vperm.xlu0 %218, %v47
    %v220 = vpop.permute.xlu0 %219
    %223 = vset.pattern.permute.xlu0 0
    %224 = vperm.xlu0 %223, %v48
    %v225 = vpop.permute.xlu0 %224
    %228 = vset.pattern.permute.xlu0 0
    %229 = vperm.xlu0 %228, %v49
    %v230 = vpop.permute.xlu0 %229
    %233 = vset.pattern.permute.xlu0 0
    %234 = vperm.xlu0 %233, %v50
    %v235 = vpop.permute.xlu0 %234
    %238 = vset.pattern.permute.xlu0 0
    %239 = vperm.xlu0 %238, %v51
    %v240 = vpop.permute.xlu0 %239
    %243 = vset.pattern.permute.xlu0 0
    %244 = vperm.xlu0 %243, %v52
    %v245 = vpop.permute.xlu0 %244
    %248 = vset.pattern.permute.xlu0 0
    %249 = vperm.xlu0 %248, %v53
    %v250 = vpop.permute.xlu0 %249
    %253 = vset.pattern.permute.xlu0 0
    %254 = vperm.xlu0 %253, %v54
    %v255 = vpop.permute.xlu0 %254
    %258 = vset.pattern.permute.xlu0 0
    %259 = vperm.xlu0 %258, %v55
    %v260 = vpop.permute.xlu0 %259
    %263 = vset.pattern.permute.xlu0 0
    %264 = vperm.xlu0 %263, %v56
    %v265 = vpop.permute.xlu0 %264
    %268 = vset.pattern.permute.xlu0 0
    %269 = vperm.xlu0 %268, %v57
    %v270 = vpop.permute.xlu0 %269
    %273 = vset.pattern.permute.xlu0 0
    %274 = vperm.xlu0 %273, %v58
    %v275 = vpop.permute.xlu0 %274
    %278 = vset.pattern.permute.xlu0 0
    %279 = vperm.xlu0 %278, %v59
    %v280 = vpop.permute.xlu0 %279
    %283 = vset.pattern.permute.xlu0 0
    %284 = vperm.xlu0 %283, %v60
    %v285 = vpop.permute.xlu0 %284
    %288 = vset.pattern.permute.xlu0 0
    %289 = vperm.xlu0 %288, %v61
    %v290 = vpop.permute.xlu0 %289
    %293 = vset.pattern.permute.xlu0 0
    %294 = vperm.xlu0 %293, %v62
    %v295 = vpop.permute.xlu0 %294
    %298 = vset.pattern.permute.xlu0 0
    %299 = vperm.xlu0 %298, %v63
    %v300 = vpop.permute.xlu0 %299
    %303 = vset.pattern.permute.xlu0 0
    %304 = vperm.xlu0 %303, %v64
    %v305 = vpop.permute.xlu0 %304
    %308 = vset.pattern.permute.xlu0 0
    %309 = vperm.xlu0 %308, %v65
    %v310 = vpop.permute.xlu0 %309
    %313 = vset.pattern.permute.xlu0 0
    %314 = vperm.xlu0 %313, %v66
    %v315 = vpop.permute.xlu0 %314
    %318 = vset.pattern.permute.xlu0 0
    %319 = vperm.xlu0 %318, %v67
    %v320 = vpop.permute.xlu0 %319
    %323 = vset.pattern.permute.xlu0 0
    %324 = vperm.xlu0 %323, %v68
    %v325 = vpop.permute.xlu0 %324
    %328 = vset.pattern.permute.xlu0 0
    %329 = vperm.xlu0 %328, %v69
    %v330 = vpop.permute.xlu0 %329
    %333 = vset.pattern.permute.xlu0 0
    %334 = vperm.xlu0 %333, %v70
    %v335 = vpop.permute.xlu0 %334
    %338 = vset.pattern.permute.xlu0 0
    %339 = vperm.xlu0 %338, %v71
    %v340 = vpop.permute.xlu0 %339
    %343 = vset.pattern.permute.xlu0 0
    %344 = vperm.xlu0 %343, %v72
    %v345 = vpop.permute.xlu0 %344
    %348 = vset.pattern.permute.xlu0 0
    %349 = vperm.xlu0 %348, %v73
    %v350 = vpop.permute.xlu0 %349
    %353 = vset.pattern.permute.xlu0 0
    %354 = vperm.xlu0 %353, %v74
    %v355 = vpop.permute.xlu0 %354
    %358 = vset.pattern.permute.xlu0 0
    %359 = vperm.xlu0 %358, %v75
    %v360 = vpop.permute.xlu0 %359
    %363 = vset.pattern.permute.xlu0 0
    %364 = vperm.xlu0 %363, %v76
    %v365 = vpop.permute.xlu0 %364
    %368 = vset.pattern.permute.xlu0 0
    %369 = vperm.xlu0 %368, %v77
    %v370 = vpop.permute.xlu0 %369
    %373 = vset.pattern.permute.xlu0 0
    %374 = vperm.xlu0 %373, %v78
    %v375 = vpop.permute.xlu0 %374
    %378 = vset.pattern.permute.xlu0 0
    %379 = vperm.xlu0 %378, %v79
    %v380 = vpop.permute.xlu0 %379
    %383 = vset.pattern.permute.xlu0 0
    %384 = vperm.xlu0 %383, %v80
    %v385 = vpop.permute.xlu0 %384
    %388 = vset.pattern.permute.xlu0 0
    %389 = vperm.xlu0 %388, %v81
    %v390 = vpop.permute.xlu0 %389
    %393 = vset.pattern.permute.xlu0 0
    %394 = vperm.xlu0 %393, %v82
    %v395 = vpop.permute.xlu0 %394
    %398 = vset.pattern.permute.xlu0 0
    %399 = vperm.xlu0 %398, %v83
    %v400 = vpop.permute.xlu0 %399
    %403 = vset.pattern.permute.xlu0 0
    %404 = vperm.xlu0 %403, %v84
    %v405 = vpop.permute.xlu0 %404
    %v408 = vlaneseq
    %v409 = vshrl.u32 %v408, 7
    %v410 = vsub.s32 0, %v409
    %v411 = vrot.slane %v18, %v410
    %v412 = vlaneseq
    %v413 = vshrl.u32 %v412, 7
    %v414 = vsub.s32 1, %v413
    %v415 = vrot.slane %v18, %v414
    %v418 = vsub.f32 %v90, %v411
    %v419 = vsub.f32 %v90, %v415
    %v420 = vsub.f32 %v95, %v411
    %v421 = vsub.f32 %v95, %v415
    %v422 = vsub.f32 %v100, %v411
    %v423 = vsub.f32 %v100, %v415
    %v424 = vsub.f32 %v105, %v411
    %v425 = vsub.f32 %v105, %v415
    %v426 = vsub.f32 %v110, %v411
    %v427 = vsub.f32 %v110, %v415
    %v428 = vsub.f32 %v115, %v411
    %v429 = vsub.f32 %v115, %v415
    %v430 = vsub.f32 %v120, %v411
    %v431 = vsub.f32 %v120, %v415
    %v432 = vsub.f32 %v125, %v411
    %v433 = vsub.f32 %v125, %v415
    %v434 = vsub.f32 %v130, %v411
    %v435 = vsub.f32 %v130, %v415
    %v436 = vsub.f32 %v135, %v411
    %v437 = vsub.f32 %v135, %v415
    %v438 = vsub.f32 %v140, %v411
    %v439 = vsub.f32 %v140, %v415
    %v440 = vsub.f32 %v145, %v411
    %v441 = vsub.f32 %v145, %v415
    %v442 = vsub.f32 %v150, %v411
    %v443 = vsub.f32 %v150, %v415
    %v444 = vsub.f32 %v155, %v411
    %v445 = vsub.f32 %v155, %v415
    %v446 = vsub.f32 %v160, %v411
    %v447 = vsub.f32 %v160, %v415
    %v448 = vsub.f32 %v165, %v411
    %v449 = vsub.f32 %v165, %v415
    %v450 = vsub.f32 %v170, %v411
    %v451 = vsub.f32 %v170, %v415
    %v452 = vsub.f32 %v175, %v411
    %v453 = vsub.f32 %v175, %v415
    %v454 = vsub.f32 %v180, %v411
    %v455 = vsub.f32 %v180, %v415
    %v456 = vsub.f32 %v185, %v411
    %v457 = vsub.f32 %v185, %v415
    %v458 = vsub.f32 %v190, %v411
    %v459 = vsub.f32 %v190, %v415
    %v460 = vsub.f32 %v195, %v411
    %v461 = vsub.f32 %v195, %v415
    %v462 = vsub.f32 %v200, %v411
    %v463 = vsub.f32 %v200, %v415
    %v464 = vsub.f32 %v205, %v411
    %v465 = vsub.f32 %v205, %v415
    %v466 = vsub.f32 %v210, %v411
    %v467 = vsub.f32 %v210, %v415
    %v468 = vsub.f32 %v215, %v411
    %v469 = vsub.f32 %v215, %v415
    %v470 = vsub.f32 %v220, %v411
    %v471 = vsub.f32 %v220, %v415
    %v472 = vsub.f32 %v225, %v411
    %v473 = vsub.f32 %v225, %v415
    %v474 = vsub.f32 %v230, %v411
    %v475 = vsub.f32 %v230, %v415
    %v476 = vsub.f32 %v235, %v411
    %v477 = vsub.f32 %v235, %v415
    %v478 = vsub.f32 %v240, %v411
    %v479 = vsub.f32 %v240, %v415
    %v480 = vsub.f32 %v245, %v411
    %v481 = vsub.f32 %v245, %v415
    %v482 = vsub.f32 %v250, %v411
    %v483 = vsub.f32 %v250, %v415
    %v484 = vsub.f32 %v255, %v411
    %v485 = vsub.f32 %v255, %v415
    %v486 = vsub.f32 %v260, %v411
    %v487 = vsub.f32 %v260, %v415
    %v488 = vsub.f32 %v265, %v411
    %v489 = vsub.f32 %v265, %v415
    %v490 = vsub.f32 %v270, %v411
    %v491 = vsub.f32 %v270, %v415
    %v492 = vsub.f32 %v275, %v411
    %v493 = vsub.f32 %v275, %v415
    %v494 = vsub.f32 %v280, %v411
    %v495 = vsub.f32 %v280, %v415
    %v496 = vsub.f32 %v285, %v411
    %v497 = vsub.f32 %v285, %v415
    %v498 = vsub.f32 %v290, %v411
    %v499 = vsub.f32 %v290, %v415
    %v500 = vsub.f32 %v295, %v411
    %v501 = vsub.f32 %v295, %v415
    %v502 = vsub.f32 %v300, %v411
    %v503 = vsub.f32 %v300, %v415
    %v504 = vsub.f32 %v305, %v411
    %v505 = vsub.f32 %v305, %v415
    %v506 = vsub.f32 %v310, %v411
    %v507 = vsub.f32 %v310, %v415
    %v508 = vsub.f32 %v315, %v411
    %v509 = vsub.f32 %v315, %v415
    %v510 = vsub.f32 %v320, %v411
    %v511 = vsub.f32 %v320, %v415
    %v512 = vsub.f32 %v325, %v411
    %v513 = vsub.f32 %v325, %v415
    %v514 = vsub.f32 %v330, %v411
    %v515 = vsub.f32 %v330, %v415
    %v516 = vsub.f32 %v335, %v411
    %v517 = vsub.f32 %v335, %v415
    %v518 = vsub.f32 %v340, %v411
    %v519 = vsub.f32 %v340, %v415
    %v520 = vsub.f32 %v345, %v411
    %v521 = vsub.f32 %v345, %v415
    %v522 = vsub.f32 %v350, %v411
    %v523 = vsub.f32 %v350, %v415
    %v524 = vsub.f32 %v355, %v411
    %v525 = vsub.f32 %v355, %v415
    %v526 = vsub.f32 %v360, %v411
    %v527 = vsub.f32 %v360, %v415
    %v528 = vsub.f32 %v365, %v411
    %v529 = vsub.f32 %v365, %v415
    %v530 = vsub.f32 %v370, %v411
    %v531 = vsub.f32 %v370, %v415
    %v532 = vsub.f32 %v375, %v411
    %v533 = vsub.f32 %v375, %v415
    %v534 = vsub.f32 %v380, %v411
    %v535 = vsub.f32 %v380, %v415
    %v536 = vsub.f32 %v385, %v411
    %v537 = vsub.f32 %v385, %v415
    %v538 = vsub.f32 %v390, %v411
    %v539 = vsub.f32 %v390, %v415
    %v540 = vsub.f32 %v395, %v411
    %v541 = vsub.f32 %v395, %v415
    %v542 = vsub.f32 %v400, %v411
    %v543 = vsub.f32 %v400, %v415
    %v544 = vsub.f32 %v405, %v411
    %v545 = vsub.f32 %v405, %v415
    %546 = vset.pattern.permute.xlu0 1
    %547 = vperm.xlu0 %546, %v21
    %v548 = vpop.permute.xlu0 %547
    %550 = vset.pattern.permute.xlu0 1
    %551 = vperm.xlu0 %550, %v22
    %v552 = vpop.permute.xlu0 %551
    %554 = vset.pattern.permute.xlu0 1
    %555 = vperm.xlu0 %554, %v23
    %v556 = vpop.permute.xlu0 %555
    %558 = vset.pattern.permute.xlu0 1
    %559 = vperm.xlu0 %558, %v24
    %v560 = vpop.permute.xlu0 %559
    %562 = vset.pattern.permute.xlu0 1
    %563 = vperm.xlu0 %562, %v25
    %v564 = vpop.permute.xlu0 %563
    %566 = vset.pattern.permute.xlu0 1
    %567 = vperm.xlu0 %566, %v26
    %v568 = vpop.permute.xlu0 %567
    %570 = vset.pattern.permute.xlu0 1
    %571 = vperm.xlu0 %570, %v27
    %v572 = vpop.permute.xlu0 %571
    %574 = vset.pattern.permute.xlu0 1
    %575 = vperm.xlu0 %574, %v28
    %v576 = vpop.permute.xlu0 %575
    %578 = vset.pattern.permute.xlu0 1
    %579 = vperm.xlu0 %578, %v29
    %v580 = vpop.permute.xlu0 %579
    %582 = vset.pattern.permute.xlu0 1
    %583 = vperm.xlu0 %582, %v30
    %v584 = vpop.permute.xlu0 %583
    %586 = vset.pattern.permute.xlu0 1
    %587 = vperm.xlu0 %586, %v31
    %v588 = vpop.permute.xlu0 %587
    %590 = vset.pattern.permute.xlu0 1
    %591 = vperm.xlu0 %590, %v32
    %v592 = vpop.permute.xlu0 %591
    %594 = vset.pattern.permute.xlu0 1
    %595 = vperm.xlu0 %594, %v33
    %v596 = vpop.permute.xlu0 %595
    %598 = vset.pattern.permute.xlu0 1
    %599 = vperm.xlu0 %598, %v34
    %v600 = vpop.permute.xlu0 %599
    %602 = vset.pattern.permute.xlu0 1
    %603 = vperm.xlu0 %602, %v35
    %v604 = vpop.permute.xlu0 %603
    %606 = vset.pattern.permute.xlu0 1
    %607 = vperm.xlu0 %606, %v36
    %v608 = vpop.permute.xlu0 %607
    %610 = vset.pattern.permute.xlu0 1
    %611 = vperm.xlu0 %610, %v37
    %v612 = vpop.permute.xlu0 %611
    %614 = vset.pattern.permute.xlu0 1
    %615 = vperm.xlu0 %614, %v38
    %v616 = vpop.permute.xlu0 %615
    %618 = vset.pattern.permute.xlu0 1
    %619 = vperm.xlu0 %618, %v39
    %v620 = vpop.permute.xlu0 %619
    %622 = vset.pattern.permute.xlu0 1
    %623 = vperm.xlu0 %622, %v40
    %v624 = vpop.permute.xlu0 %623
    %626 = vset.pattern.permute.xlu0 1
    %627 = vperm.xlu0 %626, %v41
    %v628 = vpop.permute.xlu0 %627
    %630 = vset.pattern.permute.xlu0 1
    %631 = vperm.xlu0 %630, %v42
    %v632 = vpop.permute.xlu0 %631
    %634 = vset.pattern.permute.xlu0 1
    %635 = vperm.xlu0 %634, %v43
    %v636 = vpop.permute.xlu0 %635
    %638 = vset.pattern.permute.xlu0 1
    %639 = vperm.xlu0 %638, %v44
    %v640 = vpop.permute.xlu0 %639
    %642 = vset.pattern.permute.xlu0 1
    %643 = vperm.xlu0 %642, %v45
    %v644 = vpop.permute.xlu0 %643
    %646 = vset.pattern.permute.xlu0 1
    %647 = vperm.xlu0 %646, %v46
    %v648 = vpop.permute.xlu0 %647
    %650 = vset.pattern.permute.xlu0 1
    %651 = vperm.xlu0 %650, %v47
    %v652 = vpop.permute.xlu0 %651
    %654 = vset.pattern.permute.xlu0 1
    %655 = vperm.xlu0 %654, %v48
    %v656 = vpop.permute.xlu0 %655
    %658 = vset.pattern.permute.xlu0 1
    %659 = vperm.xlu0 %658, %v49
    %v660 = vpop.permute.xlu0 %659
    %662 = vset.pattern.permute.xlu0 1
    %663 = vperm.xlu0 %662, %v50
    %v664 = vpop.permute.xlu0 %663
    %666 = vset.pattern.permute.xlu0 1
    %667 = vperm.xlu0 %666, %v51
    %v668 = vpop.permute.xlu0 %667
    %670 = vset.pattern.permute.xlu0 1
    %671 = vperm.xlu0 %670, %v52
    %v672 = vpop.permute.xlu0 %671
    %674 = vset.pattern.permute.xlu0 1
    %675 = vperm.xlu0 %674, %v53
    %v676 = vpop.permute.xlu0 %675
    %678 = vset.pattern.permute.xlu0 1
    %679 = vperm.xlu0 %678, %v54
    %v680 = vpop.permute.xlu0 %679
    %682 = vset.pattern.permute.xlu0 1
    %683 = vperm.xlu0 %682, %v55
    %v684 = vpop.permute.xlu0 %683
    %686 = vset.pattern.permute.xlu0 1
    %687 = vperm.xlu0 %686, %v56
    %v688 = vpop.permute.xlu0 %687
    %690 = vset.pattern.permute.xlu0 1
    %691 = vperm.xlu0 %690, %v57
    %v692 = vpop.permute.xlu0 %691
    %694 = vset.pattern.permute.xlu0 1
    %695 = vperm.xlu0 %694, %v58
    %v696 = vpop.permute.xlu0 %695
    %698 = vset.pattern.permute.xlu0 1
    %699 = vperm.xlu0 %698, %v59
    %v700 = vpop.permute.xlu0 %699
    %702 = vset.pattern.permute.xlu0 1
    %703 = vperm.xlu0 %702, %v60
    %v704 = vpop.permute.xlu0 %703
    %706 = vset.pattern.permute.xlu0 1
    %707 = vperm.xlu0 %706, %v61
    %v708 = vpop.permute.xlu0 %707
    %710 = vset.pattern.permute.xlu0 1
    %711 = vperm.xlu0 %710, %v62
    %v712 = vpop.permute.xlu0 %711
    %714 = vset.pattern.permute.xlu0 1
    %715 = vperm.xlu0 %714, %v63
    %v716 = vpop.permute.xlu0 %715
    %718 = vset.pattern.permute.xlu0 1
    %719 = vperm.xlu0 %718, %v64
    %v720 = vpop.permute.xlu0 %719
    %722 = vset.pattern.permute.xlu0 1
    %723 = vperm.xlu0 %722, %v65
    %v724 = vpop.permute.xlu0 %723
    %726 = vset.pattern.permute.xlu0 1
    %727 = vperm.xlu0 %726, %v66
    %v728 = vpop.permute.xlu0 %727
    %730 = vset.pattern.permute.xlu0 1
    %731 = vperm.xlu0 %730, %v67
    %v732 = vpop.permute.xlu0 %731
    %734 = vset.pattern.permute.xlu0 1
    %735 = vperm.xlu0 %734, %v68
    %v736 = vpop.permute.xlu0 %735
    %738 = vset.pattern.permute.xlu0 1
    %739 = vperm.xlu0 %738, %v69
    %v740 = vpop.permute.xlu0 %739
    %742 = vset.pattern.permute.xlu0 1
    %743 = vperm.xlu0 %742, %v70
    %v744 = vpop.permute.xlu0 %743
    %746 = vset.pattern.permute.xlu0 1
    %747 = vperm.xlu0 %746, %v71
    %v748 = vpop.permute.xlu0 %747
    %750 = vset.pattern.permute.xlu0 1
    %751 = vperm.xlu0 %750, %v72
    %v752 = vpop.permute.xlu0 %751
    %754 = vset.pattern.permute.xlu0 1
    %755 = vperm.xlu0 %754, %v73
    %v756 = vpop.permute.xlu0 %755
    %758 = vset.pattern.permute.xlu0 1
    %759 = vperm.xlu0 %758, %v74
    %v760 = vpop.permute.xlu0 %759
    %762 = vset.pattern.permute.xlu0 1
    %763 = vperm.xlu0 %762, %v75
    %v764 = vpop.permute.xlu0 %763
    %766 = vset.pattern.permute.xlu0 1
    %767 = vperm.xlu0 %766, %v76
    %v768 = vpop.permute.xlu0 %767
    %770 = vset.pattern.permute.xlu0 1
    %771 = vperm.xlu0 %770, %v77
    %v772 = vpop.permute.xlu0 %771
    %774 = vset.pattern.permute.xlu0 1
    %775 = vperm.xlu0 %774, %v78
    %v776 = vpop.permute.xlu0 %775
    %778 = vset.pattern.permute.xlu0 1
    %779 = vperm.xlu0 %778, %v79
    %v780 = vpop.permute.xlu0 %779
    %782 = vset.pattern.permute.xlu0 1
    %783 = vperm.xlu0 %782, %v80
    %v784 = vpop.permute.xlu0 %783
    %786 = vset.pattern.permute.xlu0 1
    %787 = vperm.xlu0 %786, %v81
    %v788 = vpop.permute.xlu0 %787
    %790 = vset.pattern.permute.xlu0 1
    %791 = vperm.xlu0 %790, %v82
    %v792 = vpop.permute.xlu0 %791
    %794 = vset.pattern.permute.xlu0 1
    %795 = vperm.xlu0 %794, %v83
    %v796 = vpop.permute.xlu0 %795
    %798 = vset.pattern.permute.xlu0 1
    %799 = vperm.xlu0 %798, %v84
    %v800 = vpop.permute.xlu0 %799
    %v803 = vlaneseq
    %v804 = vshrl.u32 %v803, 7
    %v805 = vsub.s32 0, %v804
    %v806 = vrot.slane %v20, %v805
    %v807 = vlaneseq
    %v808 = vshrl.u32 %v807, 7
    %v809 = vsub.s32 1, %v808
    %v810 = vrot.slane %v20, %v809
    %v813 = vsub.f32 %v548, %v806
    %v814 = vsub.f32 %v548, %v810
    %v815 = vsub.f32 %v552, %v806
    %v816 = vsub.f32 %v552, %v810
    %v817 = vsub.f32 %v556, %v806
    %v818 = vsub.f32 %v556, %v810
    %v819 = vsub.f32 %v560, %v806
    %v820 = vsub.f32 %v560, %v810
    %v821 = vsub.f32 %v564, %v806
    %v822 = vsub.f32 %v564, %v810
    %v823 = vsub.f32 %v568, %v806
    %v824 = vsub.f32 %v568, %v810
    %v825 = vsub.f32 %v572, %v806
    %v826 = vsub.f32 %v572, %v810
    %v827 = vsub.f32 %v576, %v806
    %v828 = vsub.f32 %v576, %v810
    %v829 = vsub.f32 %v580, %v806
    %v830 = vsub.f32 %v580, %v810
    %v831 = vsub.f32 %v584, %v806
    %v832 = vsub.f32 %v584, %v810
    %v833 = vsub.f32 %v588, %v806
    %v834 = vsub.f32 %v588, %v810
    %v835 = vsub.f32 %v592, %v806
    %v836 = vsub.f32 %v592, %v810
    %v837 = vsub.f32 %v596, %v806
    %v838 = vsub.f32 %v596, %v810
    %v839 = vsub.f32 %v600, %v806
    %v840 = vsub.f32 %v600, %v810
    %v841 = vsub.f32 %v604, %v806
    %v842 = vsub.f32 %v604, %v810
    %v843 = vsub.f32 %v608, %v806
    %v844 = vsub.f32 %v608, %v810
    %v845 = vsub.f32 %v612, %v806
    %v846 = vsub.f32 %v612, %v810
    %v847 = vsub.f32 %v616, %v806
    %v848 = vsub.f32 %v616, %v810
    %v849 = vsub.f32 %v620, %v806
    %v850 = vsub.f32 %v620, %v810
    %v851 = vsub.f32 %v624, %v806
    %v852 = vsub.f32 %v624, %v810
    %v853 = vsub.f32 %v628, %v806
    %v854 = vsub.f32 %v628, %v810
    %v855 = vsub.f32 %v632, %v806
    %v856 = vsub.f32 %v632, %v810
    %v857 = vsub.f32 %v636, %v806
    %v858 = vsub.f32 %v636, %v810
    %v859 = vsub.f32 %v640, %v806
    %v860 = vsub.f32 %v640, %v810
    %v861 = vsub.f32 %v644, %v806
    %v862 = vsub.f32 %v644, %v810
    %v863 = vsub.f32 %v648, %v806
    %v864 = vsub.f32 %v648, %v810
    %v865 = vsub.f32 %v652, %v806
    %v866 = vsub.f32 %v652, %v810
    %v867 = vsub.f32 %v656, %v806
    %v868 = vsub.f32 %v656, %v810
    %v869 = vsub.f32 %v660, %v806
    %v870 = vsub.f32 %v660, %v810
    %v871 = vsub.f32 %v664, %v806
    %v872 = vsub.f32 %v664, %v810
    %v873 = vsub.f32 %v668, %v806
    %v874 = vsub.f32 %v668, %v810
    %v875 = vsub.f32 %v672, %v806
    %v876 = vsub.f32 %v672, %v810
    %v877 = vsub.f32 %v676, %v806
    %v878 = vsub.f32 %v676, %v810
    %v879 = vsub.f32 %v680, %v806
    %v880 = vsub.f32 %v680, %v810
    %v881 = vsub.f32 %v684, %v806
    %v882 = vsub.f32 %v684, %v810
    %v883 = vsub.f32 %v688, %v806
    %v884 = vsub.f32 %v688, %v810
    %v885 = vsub.f32 %v692, %v806
    %v886 = vsub.f32 %v692, %v810
    %v887 = vsub.f32 %v696, %v806
    %v888 = vsub.f32 %v696, %v810
    %v889 = vsub.f32 %v700, %v806
    %v890 = vsub.f32 %v700, %v810
    %v891 = vsub.f32 %v704, %v806
    %v892 = vsub.f32 %v704, %v810
    %v893 = vsub.f32 %v708, %v806
    %v894 = vsub.f32 %v708, %v810
    %v895 = vsub.f32 %v712, %v806
    %v896 = vsub.f32 %v712, %v810
    %v897 = vsub.f32 %v716, %v806
    %v898 = vsub.f32 %v716, %v810
    %v899 = vsub.f32 %v720, %v806
    %v900 = vsub.f32 %v720, %v810
    %v901 = vsub.f32 %v724, %v806
    %v902 = vsub.f32 %v724, %v810
    %v903 = vsub.f32 %v728, %v806
    %v904 = vsub.f32 %v728, %v810
    %v905 = vsub.f32 %v732, %v806
    %v906 = vsub.f32 %v732, %v810
    %v907 = vsub.f32 %v736, %v806
    %v908 = vsub.f32 %v736, %v810
    %v909 = vsub.f32 %v740, %v806
    %v910 = vsub.f32 %v740, %v810
    %v911 = vsub.f32 %v744, %v806
    %v912 = vsub.f32 %v744, %v810
    %v913 = vsub.f32 %v748, %v806
    %v914 = vsub.f32 %v748, %v810
    %v915 = vsub.f32 %v752, %v806
    %v916 = vsub.f32 %v752, %v810
    %v917 = vsub.f32 %v756, %v806
    %v918 = vsub.f32 %v756, %v810
    %v919 = vsub.f32 %v760, %v806
    %v920 = vsub.f32 %v760, %v810
    %v921 = vsub.f32 %v764, %v806
    %v922 = vsub.f32 %v764, %v810
    %v923 = vsub.f32 %v768, %v806
    %v924 = vsub.f32 %v768, %v810
    %v925 = vsub.f32 %v772, %v806
    %v926 = vsub.f32 %v772, %v810
    %v927 = vsub.f32 %v776, %v806
    %v928 = vsub.f32 %v776, %v810
    %v929 = vsub.f32 %v780, %v806
    %v930 = vsub.f32 %v780, %v810
    %v931 = vsub.f32 %v784, %v806
    %v932 = vsub.f32 %v784, %v810
    %v933 = vsub.f32 %v788, %v806
    %v934 = vsub.f32 %v788, %v810
    %v935 = vsub.f32 %v792, %v806
    %v936 = vsub.f32 %v792, %v810
    %v937 = vsub.f32 %v796, %v806
    %v938 = vsub.f32 %v796, %v810
    %v939 = vsub.f32 %v800, %v806
    %v940 = vsub.f32 %v800, %v810
    %v941 = vpack.c.bf16 %v420, %v418
    %v942 = vpack.c.bf16 %v421, %v419
    %v943 = vpack.c.bf16 %v424, %v422
    %v944 = vpack.c.bf16 %v425, %v423
    %v945 = vpack.c.bf16 %v428, %v426
    %v946 = vpack.c.bf16 %v429, %v427
    %v947 = vpack.c.bf16 %v432, %v430
    %v948 = vpack.c.bf16 %v433, %v431
    %v949 = vpack.c.bf16 %v436, %v434
    %v950 = vpack.c.bf16 %v437, %v435
    %v951 = vpack.c.bf16 %v440, %v438
    %v952 = vpack.c.bf16 %v441, %v439
    %v953 = vpack.c.bf16 %v444, %v442
    %v954 = vpack.c.bf16 %v445, %v443
    %v955 = vpack.c.bf16 %v448, %v446
    %v956 = vpack.c.bf16 %v449, %v447
    %v957 = vpack.c.bf16 %v452, %v450
    %v958 = vpack.c.bf16 %v453, %v451
    %v959 = vpack.c.bf16 %v456, %v454
    %v960 = vpack.c.bf16 %v457, %v455
    %v961 = vpack.c.bf16 %v460, %v458
    %v962 = vpack.c.bf16 %v461, %v459
    %v963 = vpack.c.bf16 %v464, %v462
    %v964 = vpack.c.bf16 %v465, %v463
    %v965 = vpack.c.bf16 %v468, %v466
    %v966 = vpack.c.bf16 %v469, %v467
    %v967 = vpack.c.bf16 %v472, %v470
    %v968 = vpack.c.bf16 %v473, %v471
    %v969 = vpack.c.bf16 %v476, %v474
    %v970 = vpack.c.bf16 %v477, %v475
    %v971 = vpack.c.bf16 %v480, %v478
    %v972 = vpack.c.bf16 %v481, %v479
    %v973 = vpack.c.bf16 %v484, %v482
    %v974 = vpack.c.bf16 %v485, %v483
    %v975 = vpack.c.bf16 %v488, %v486
    %v976 = vpack.c.bf16 %v489, %v487
    %v977 = vpack.c.bf16 %v492, %v490
    %v978 = vpack.c.bf16 %v493, %v491
    %v979 = vpack.c.bf16 %v496, %v494
    %v980 = vpack.c.bf16 %v497, %v495
    %v981 = vpack.c.bf16 %v500, %v498
    %v982 = vpack.c.bf16 %v501, %v499
    %v983 = vpack.c.bf16 %v504, %v502
    %v984 = vpack.c.bf16 %v505, %v503
    %v985 = vpack.c.bf16 %v508, %v506
    %v986 = vpack.c.bf16 %v509, %v507
    %v987 = vpack.c.bf16 %v512, %v510
    %v988 = vpack.c.bf16 %v513, %v511
    %v989 = vpack.c.bf16 %v516, %v514
    %v990 = vpack.c.bf16 %v517, %v515
    %v991 = vpack.c.bf16 %v520, %v518
    %v992 = vpack.c.bf16 %v521, %v519
    %v993 = vpack.c.bf16 %v524, %v522
    %v994 = vpack.c.bf16 %v525, %v523
    %v995 = vpack.c.bf16 %v528, %v526
    %v996 = vpack.c.bf16 %v529, %v527
    %v997 = vpack.c.bf16 %v532, %v530
    %v998 = vpack.c.bf16 %v533, %v531
    %v999 = vpack.c.bf16 %v536, %v534
    %v1000 = vpack.c.bf16 %v537, %v535
    %v1001 = vpack.c.bf16 %v540, %v538
    %v1002 = vpack.c.bf16 %v541, %v539
    %v1003 = vpack.c.bf16 %v544, %v542
    %v1004 = vpack.c.bf16 %v545, %v543
    %v1005 = vpack.c.bf16 %v815, %v813
    %v1006 = vpack.c.bf16 %v816, %v814
    %v1007 = vpack.c.bf16 %v819, %v817
    %v1008 = vpack.c.bf16 %v820, %v818
    %v1009 = vpack.c.bf16 %v823, %v821
    %v1010 = vpack.c.bf16 %v824, %v822
    %v1011 = vpack.c.bf16 %v827, %v825
    %v1012 = vpack.c.bf16 %v828, %v826
    %v1013 = vpack.c.bf16 %v831, %v829
    %v1014 = vpack.c.bf16 %v832, %v830
    %v1015 = vpack.c.bf16 %v835, %v833
    %v1016 = vpack.c.bf16 %v836, %v834
    %v1017 = vpack.c.bf16 %v839, %v837
    %v1018 = vpack.c.bf16 %v840, %v838
    %v1019 = vpack.c.bf16 %v843, %v841
    %v1020 = vpack.c.bf16 %v844, %v842
    %v1021 = vpack.c.bf16 %v847, %v845
    %v1022 = vpack.c.bf16 %v848, %v846
    %v1023 = vpack.c.bf16 %v851, %v849
    %v1024 = vpack.c.bf16 %v852, %v850
    %v1025 = vpack.c.bf16 %v855, %v853
    %v1026 = vpack.c.bf16 %v856, %v854
    %v1027 = vpack.c.bf16 %v859, %v857
    %v1028 = vpack.c.bf16 %v860, %v858
    %v1029 = vpack.c.bf16 %v863, %v861
    %v1030 = vpack.c.bf16 %v864, %v862
    %v1031 = vpack.c.bf16 %v867, %v865
    %v1032 = vpack.c.bf16 %v868, %v866
    %v1033 = vpack.c.bf16 %v871, %v869
    %v1034 = vpack.c.bf16 %v872, %v870
    %v1035 = vpack.c.bf16 %v875, %v873
    %v1036 = vpack.c.bf16 %v876, %v874
    %v1037 = vpack.c.bf16 %v879, %v877
    %v1038 = vpack.c.bf16 %v880, %v878
    %v1039 = vpack.c.bf16 %v883, %v881
    %v1040 = vpack.c.bf16 %v884, %v882
    %v1041 = vpack.c.bf16 %v887, %v885
    %v1042 = vpack.c.bf16 %v888, %v886
    %v1043 = vpack.c.bf16 %v891, %v889
    %v1044 = vpack.c.bf16 %v892, %v890
    %v1045 = vpack.c.bf16 %v895, %v893
    %v1046 = vpack.c.bf16 %v896, %v894
    %v1047 = vpack.c.bf16 %v899, %v897
    %v1048 = vpack.c.bf16 %v900, %v898
    %v1049 = vpack.c.bf16 %v903, %v901
    %v1050 = vpack.c.bf16 %v904, %v902
    %v1051 = vpack.c.bf16 %v907, %v905
    %v1052 = vpack.c.bf16 %v908, %v906
    %v1053 = vpack.c.bf16 %v911, %v909
    %v1054 = vpack.c.bf16 %v912, %v910
    %v1055 = vpack.c.bf16 %v915, %v913
    %v1056 = vpack.c.bf16 %v916, %v914
    %v1057 = vpack.c.bf16 %v919, %v917
    %v1058 = vpack.c.bf16 %v920, %v918
    %v1059 = vpack.c.bf16 %v923, %v921
    %v1060 = vpack.c.bf16 %v924, %v922
    %v1061 = vpack.c.bf16 %v927, %v925
    %v1062 = vpack.c.bf16 %v928, %v926
    %v1063 = vpack.c.bf16 %v931, %v929
    %v1064 = vpack.c.bf16 %v932, %v930
    %v1065 = vpack.c.bf16 %v935, %v933
    %v1066 = vpack.c.bf16 %v936, %v934
    %v1067 = vpack.c.bf16 %v939, %v937
    %v1068 = vpack.c.bf16 %v940, %v938
    %v1069 = vpack.c.bf16 %v22, %v21
    %v1070 = vpack.c.bf16 %v24, %v23
    %v1071 = vpack.c.bf16 %v26, %v25
    %v1072 = vpack.c.bf16 %v28, %v27
    %v1073 = vpack.c.bf16 %v30, %v29
    %v1074 = vpack.c.bf16 %v32, %v31
    %v1075 = vpack.c.bf16 %v34, %v33
    %v1076 = vpack.c.bf16 %v36, %v35
    %v1077 = vpack.c.bf16 %v38, %v37
    %v1078 = vpack.c.bf16 %v40, %v39
    %v1079 = vpack.c.bf16 %v42, %v41
    %v1080 = vpack.c.bf16 %v44, %v43
    %v1081 = vpack.c.bf16 %v46, %v45
    %v1082 = vpack.c.bf16 %v48, %v47
    %v1083 = vpack.c.bf16 %v50, %v49
    %v1084 = vpack.c.bf16 %v52, %v51
    %v1085 = vpack.c.bf16 %v54, %v53
    %v1086 = vpack.c.bf16 %v56, %v55
    %v1087 = vpack.c.bf16 %v58, %v57
    %v1088 = vpack.c.bf16 %v60, %v59
    %v1089 = vpack.c.bf16 %v62, %v61
    %v1090 = vpack.c.bf16 %v64, %v63
    %v1091 = vpack.c.bf16 %v66, %v65
    %v1092 = vpack.c.bf16 %v68, %v67
    %v1093 = vpack.c.bf16 %v70, %v69
    %v1094 = vpack.c.bf16 %v72, %v71
    %v1095 = vpack.c.bf16 %v74, %v73
    %v1096 = vpack.c.bf16 %v76, %v75
    %v1097 = vpack.c.bf16 %v78, %v77
    %v1098 = vpack.c.bf16 %v80, %v79
    %v1099 = vpack.c.bf16 %v82, %v81
    %v1100 = vpack.c.bf16 %v84, %v83
    %1102 = vset.pattern.permute.xlu0 2
    %1103 = vperm.xlu0 %1102, %v1069
    %v1104 = vpop.permute.xlu0 %1103
    %1107 = vset.pattern.permute.xlu0 2
    %1108 = vperm.xlu0 %1107, %v1070
    %v1109 = vpop.permute.xlu0 %1108
    %1112 = vset.pattern.permute.xlu0 2
    %1113 = vperm.xlu0 %1112, %v1071
    %v1114 = vpop.permute.xlu0 %1113
    %1117 = vset.pattern.permute.xlu0 2
    %1118 = vperm.xlu0 %1117, %v1072
    %v1119 = vpop.permute.xlu0 %1118
    %1122 = vset.pattern.permute.xlu0 2
    %1123 = vperm.xlu0 %1122, %v1073
    %v1124 = vpop.permute.xlu0 %1123
    %1127 = vset.pattern.permute.xlu0 2
    %1128 = vperm.xlu0 %1127, %v1074
    %v1129 = vpop.permute.xlu0 %1128
    %1132 = vset.pattern.permute.xlu0 2
    %1133 = vperm.xlu0 %1132, %v1075
    %v1134 = vpop.permute.xlu0 %1133
    %1137 = vset.pattern.permute.xlu0 2
    %1138 = vperm.xlu0 %1137, %v1076
    %v1139 = vpop.permute.xlu0 %1138
    %1142 = vset.pattern.permute.xlu0 2
    %1143 = vperm.xlu0 %1142, %v1077
    %v1144 = vpop.permute.xlu0 %1143
    %1147 = vset.pattern.permute.xlu0 2
    %1148 = vperm.xlu0 %1147, %v1078
    %v1149 = vpop.permute.xlu0 %1148
    %1152 = vset.pattern.permute.xlu0 2
    %1153 = vperm.xlu0 %1152, %v1079
    %v1154 = vpop.permute.xlu0 %1153
    %1157 = vset.pattern.permute.xlu0 2
    %1158 = vperm.xlu0 %1157, %v1080
    %v1159 = vpop.permute.xlu0 %1158
    %1162 = vset.pattern.permute.xlu0 2
    %1163 = vperm.xlu0 %1162, %v1081
    %v1164 = vpop.permute.xlu0 %1163
    %1167 = vset.pattern.permute.xlu0 2
    %1168 = vperm.xlu0 %1167, %v1082
    %v1169 = vpop.permute.xlu0 %1168
    %1172 = vset.pattern.permute.xlu0 2
    %1173 = vperm.xlu0 %1172, %v1083
    %v1174 = vpop.permute.xlu0 %1173
    %1177 = vset.pattern.permute.xlu0 2
    %1178 = vperm.xlu0 %1177, %v1084
    %v1179 = vpop.permute.xlu0 %1178
    %1182 = vset.pattern.permute.xlu0 2
    %1183 = vperm.xlu0 %1182, %v1085
    %v1184 = vpop.permute.xlu0 %1183
    %1187 = vset.pattern.permute.xlu0 2
    %1188 = vperm.xlu0 %1187, %v1086
    %v1189 = vpop.permute.xlu0 %1188
    %1192 = vset.pattern.permute.xlu0 2
    %1193 = vperm.xlu0 %1192, %v1087
    %v1194 = vpop.permute.xlu0 %1193
    %1197 = vset.pattern.permute.xlu0 2
    %1198 = vperm.xlu0 %1197, %v1088
    %v1199 = vpop.permute.xlu0 %1198
    %1202 = vset.pattern.permute.xlu0 2
    %1203 = vperm.xlu0 %1202, %v1089
    %v1204 = vpop.permute.xlu0 %1203
    %1207 = vset.pattern.permute.xlu0 2
    %1208 = vperm.xlu0 %1207, %v1090
    %v1209 = vpop.permute.xlu0 %1208
    %1212 = vset.pattern.permute.xlu0 2
    %1213 = vperm.xlu0 %1212, %v1091
    %v1214 = vpop.permute.xlu0 %1213
    %1217 = vset.pattern.permute.xlu0 2
    %1218 = vperm.xlu0 %1217, %v1092
    %v1219 = vpop.permute.xlu0 %1218
    %1222 = vset.pattern.permute.xlu0 2
    %1223 = vperm.xlu0 %1222, %v1093
    %v1224 = vpop.permute.xlu0 %1223
    %1227 = vset.pattern.permute.xlu0 2
    %1228 = vperm.xlu0 %1227, %v1094
    %v1229 = vpop.permute.xlu0 %1228
    %1232 = vset.pattern.permute.xlu0 2
    %1233 = vperm.xlu0 %1232, %v1095
    %v1234 = vpop.permute.xlu0 %1233
    %1237 = vset.pattern.permute.xlu0 2
    %1238 = vperm.xlu0 %1237, %v1096
    %v1239 = vpop.permute.xlu0 %1238
    %1242 = vset.pattern.permute.xlu0 2
    %1243 = vperm.xlu0 %1242, %v1097
    %v1244 = vpop.permute.xlu0 %1243
    %1247 = vset.pattern.permute.xlu0 2
    %1248 = vperm.xlu0 %1247, %v1098
    %v1249 = vpop.permute.xlu0 %1248
    %1252 = vset.pattern.permute.xlu0 2
    %1253 = vperm.xlu0 %1252, %v1099
    %v1254 = vpop.permute.xlu0 %1253
    %1257 = vset.pattern.permute.xlu0 2
    %1258 = vperm.xlu0 %1257, %v1100
    %v1259 = vpop.permute.xlu0 %1258
    %v1261 = vmul.bf16 %v1104, %v941
    %v1262 = vmul.bf16 %v1104, %v942
    %v1263 = vmul.bf16 %v1109, %v943
    %v1264 = vmul.bf16 %v1109, %v944
    %v1265 = vmul.bf16 %v1114, %v945
    %v1266 = vmul.bf16 %v1114, %v946
    %v1267 = vmul.bf16 %v1119, %v947
    %v1268 = vmul.bf16 %v1119, %v948
    %v1269 = vmul.bf16 %v1124, %v949
    %v1270 = vmul.bf16 %v1124, %v950
    %v1271 = vmul.bf16 %v1129, %v951
    %v1272 = vmul.bf16 %v1129, %v952
    %v1273 = vmul.bf16 %v1134, %v953
    %v1274 = vmul.bf16 %v1134, %v954
    %v1275 = vmul.bf16 %v1139, %v955
    %v1276 = vmul.bf16 %v1139, %v956
    %v1277 = vmul.bf16 %v1144, %v957
    %v1278 = vmul.bf16 %v1144, %v958
    %v1279 = vmul.bf16 %v1149, %v959
    %v1280 = vmul.bf16 %v1149, %v960
    %v1281 = vmul.bf16 %v1154, %v961
    %v1282 = vmul.bf16 %v1154, %v962
    %v1283 = vmul.bf16 %v1159, %v963
    %v1284 = vmul.bf16 %v1159, %v964
    %v1285 = vmul.bf16 %v1164, %v965
    %v1286 = vmul.bf16 %v1164, %v966
    %v1287 = vmul.bf16 %v1169, %v967
    %v1288 = vmul.bf16 %v1169, %v968
    %v1289 = vmul.bf16 %v1174, %v969
    %v1290 = vmul.bf16 %v1174, %v970
    %v1291 = vmul.bf16 %v1179, %v971
    %v1292 = vmul.bf16 %v1179, %v972
    %v1293 = vmul.bf16 %v1184, %v973
    %v1294 = vmul.bf16 %v1184, %v974
    %v1295 = vmul.bf16 %v1189, %v975
    %v1296 = vmul.bf16 %v1189, %v976
    %v1297 = vmul.bf16 %v1194, %v977
    %v1298 = vmul.bf16 %v1194, %v978
    %v1299 = vmul.bf16 %v1199, %v979
    %v1300 = vmul.bf16 %v1199, %v980
    %v1301 = vmul.bf16 %v1204, %v981
    %v1302 = vmul.bf16 %v1204, %v982
    %v1303 = vmul.bf16 %v1209, %v983
    %v1304 = vmul.bf16 %v1209, %v984
    %v1305 = vmul.bf16 %v1214, %v985
    %v1306 = vmul.bf16 %v1214, %v986
    %v1307 = vmul.bf16 %v1219, %v987
    %v1308 = vmul.bf16 %v1219, %v988
    %v1309 = vmul.bf16 %v1224, %v989
    %v1310 = vmul.bf16 %v1224, %v990
    %v1311 = vmul.bf16 %v1229, %v991
    %v1312 = vmul.bf16 %v1229, %v992
    %v1313 = vmul.bf16 %v1234, %v993
    %v1314 = vmul.bf16 %v1234, %v994
    %v1315 = vmul.bf16 %v1239, %v995
    %v1316 = vmul.bf16 %v1239, %v996
    %v1317 = vmul.bf16 %v1244, %v997
    %v1318 = vmul.bf16 %v1244, %v998
    %v1319 = vmul.bf16 %v1249, %v999
    %v1320 = vmul.bf16 %v1249, %v1000
    %v1321 = vmul.bf16 %v1254, %v1001
    %v1322 = vmul.bf16 %v1254, %v1002
    %v1323 = vmul.bf16 %v1259, %v1003
    %v1324 = vmul.bf16 %v1259, %v1004
    %v1325 = vmul.bf16 %v1261, %v941
    %v1326 = vmul.bf16 %v1262, %v942
    %v1327 = vmul.bf16 %v1263, %v943
    %v1328 = vmul.bf16 %v1264, %v944
    %v1329 = vmul.bf16 %v1265, %v945
    %v1330 = vmul.bf16 %v1266, %v946
    %v1331 = vmul.bf16 %v1267, %v947
    %v1332 = vmul.bf16 %v1268, %v948
    %v1333 = vmul.bf16 %v1269, %v949
    %v1334 = vmul.bf16 %v1270, %v950
    %v1335 = vmul.bf16 %v1271, %v951
    %v1336 = vmul.bf16 %v1272, %v952
    %v1337 = vmul.bf16 %v1273, %v953
    %v1338 = vmul.bf16 %v1274, %v954
    %v1339 = vmul.bf16 %v1275, %v955
    %v1340 = vmul.bf16 %v1276, %v956
    %v1341 = vmul.bf16 %v1277, %v957
    %v1342 = vmul.bf16 %v1278, %v958
    %v1343 = vmul.bf16 %v1279, %v959
    %v1344 = vmul.bf16 %v1280, %v960
    %v1345 = vmul.bf16 %v1281, %v961
    %v1346 = vmul.bf16 %v1282, %v962
    %v1347 = vmul.bf16 %v1283, %v963
    %v1348 = vmul.bf16 %v1284, %v964
    %v1349 = vmul.bf16 %v1285, %v965
    %v1350 = vmul.bf16 %v1286, %v966
    %v1351 = vmul.bf16 %v1287, %v967
    %v1352 = vmul.bf16 %v1288, %v968
    %v1353 = vmul.bf16 %v1289, %v969
    %v1354 = vmul.bf16 %v1290, %v970
    %v1355 = vmul.bf16 %v1291, %v971
    %v1356 = vmul.bf16 %v1292, %v972
    %v1357 = vmul.bf16 %v1293, %v973
    %v1358 = vmul.bf16 %v1294, %v974
    %v1359 = vmul.bf16 %v1295, %v975
    %v1360 = vmul.bf16 %v1296, %v976
    %v1361 = vmul.bf16 %v1297, %v977
    %v1362 = vmul.bf16 %v1298, %v978
    %v1363 = vmul.bf16 %v1299, %v979
    %v1364 = vmul.bf16 %v1300, %v980
    %v1365 = vmul.bf16 %v1301, %v981
    %v1366 = vmul.bf16 %v1302, %v982
    %v1367 = vmul.bf16 %v1303, %v983
    %v1368 = vmul.bf16 %v1304, %v984
    %v1369 = vmul.bf16 %v1305, %v985
    %v1370 = vmul.bf16 %v1306, %v986
    %v1371 = vmul.bf16 %v1307, %v987
    %v1372 = vmul.bf16 %v1308, %v988
    %v1373 = vmul.bf16 %v1309, %v989
    %v1374 = vmul.bf16 %v1310, %v990
    %v1375 = vmul.bf16 %v1311, %v991
    %v1376 = vmul.bf16 %v1312, %v992
    %v1377 = vmul.bf16 %v1313, %v993
    %v1378 = vmul.bf16 %v1314, %v994
    %v1379 = vmul.bf16 %v1315, %v995
    %v1380 = vmul.bf16 %v1316, %v996
    %v1381 = vmul.bf16 %v1317, %v997
    %v1382 = vmul.bf16 %v1318, %v998
    %v1383 = vmul.bf16 %v1319, %v999
    %v1384 = vmul.bf16 %v1320, %v1000
    %v1385 = vmul.bf16 %v1321, %v1001
    %v1386 = vmul.bf16 %v1322, %v1002
    %v1387 = vmul.bf16 %v1323, %v1003
    %v1388 = vmul.bf16 %v1324, %v1004
    %1389 = vset.pattern.permute.xlu0 4
    %1390 = vperm.xlu0 %1389, %v1069
    %v1391 = vpop.permute.xlu0 %1390
    %1393 = vset.pattern.permute.xlu0 4
    %1394 = vperm.xlu0 %1393, %v1070
    %v1395 = vpop.permute.xlu0 %1394
    %1397 = vset.pattern.permute.xlu0 4
    %1398 = vperm.xlu0 %1397, %v1071
    %v1399 = vpop.permute.xlu0 %1398
    %1401 = vset.pattern.permute.xlu0 4
    %1402 = vperm.xlu0 %1401, %v1072
    %v1403 = vpop.permute.xlu0 %1402
    %1405 = vset.pattern.permute.xlu0 4
    %1406 = vperm.xlu0 %1405, %v1073
    %v1407 = vpop.permute.xlu0 %1406
    %1409 = vset.pattern.permute.xlu0 4
    %1410 = vperm.xlu0 %1409, %v1074
    %v1411 = vpop.permute.xlu0 %1410
    %1413 = vset.pattern.permute.xlu0 4
    %1414 = vperm.xlu0 %1413, %v1075
    %v1415 = vpop.permute.xlu0 %1414
    %1417 = vset.pattern.permute.xlu0 4
    %1418 = vperm.xlu0 %1417, %v1076
    %v1419 = vpop.permute.xlu0 %1418
    %1421 = vset.pattern.permute.xlu0 4
    %1422 = vperm.xlu0 %1421, %v1077
    %v1423 = vpop.permute.xlu0 %1422
    %1425 = vset.pattern.permute.xlu0 4
    %1426 = vperm.xlu0 %1425, %v1078
    %v1427 = vpop.permute.xlu0 %1426
    %1429 = vset.pattern.permute.xlu0 4
    %1430 = vperm.xlu0 %1429, %v1079
    %v1431 = vpop.permute.xlu0 %1430
    %1433 = vset.pattern.permute.xlu0 4
    %1434 = vperm.xlu0 %1433, %v1080
    %v1435 = vpop.permute.xlu0 %1434
    %1437 = vset.pattern.permute.xlu0 4
    %1438 = vperm.xlu0 %1437, %v1081
    %v1439 = vpop.permute.xlu0 %1438
    %1441 = vset.pattern.permute.xlu0 4
    %1442 = vperm.xlu0 %1441, %v1082
    %v1443 = vpop.permute.xlu0 %1442
    %1445 = vset.pattern.permute.xlu0 4
    %1446 = vperm.xlu0 %1445, %v1083
    %v1447 = vpop.permute.xlu0 %1446
    %1449 = vset.pattern.permute.xlu0 4
    %1450 = vperm.xlu0 %1449, %v1084
    %v1451 = vpop.permute.xlu0 %1450
    %1453 = vset.pattern.permute.xlu0 4
    %1454 = vperm.xlu0 %1453, %v1085
    %v1455 = vpop.permute.xlu0 %1454
    %1457 = vset.pattern.permute.xlu0 4
    %1458 = vperm.xlu0 %1457, %v1086
    %v1459 = vpop.permute.xlu0 %1458
    %1461 = vset.pattern.permute.xlu0 4
    %1462 = vperm.xlu0 %1461, %v1087
    %v1463 = vpop.permute.xlu0 %1462
    %1465 = vset.pattern.permute.xlu0 4
    %1466 = vperm.xlu0 %1465, %v1088
    %v1467 = vpop.permute.xlu0 %1466
    %1469 = vset.pattern.permute.xlu0 4
    %1470 = vperm.xlu0 %1469, %v1089
    %v1471 = vpop.permute.xlu0 %1470
    %1473 = vset.pattern.permute.xlu0 4
    %1474 = vperm.xlu0 %1473, %v1090
    %v1475 = vpop.permute.xlu0 %1474
    %1477 = vset.pattern.permute.xlu0 4
    %1478 = vperm.xlu0 %1477, %v1091
    %v1479 = vpop.permute.xlu0 %1478
    %1481 = vset.pattern.permute.xlu0 4
    %1482 = vperm.xlu0 %1481, %v1092
    %v1483 = vpop.permute.xlu0 %1482
    %1485 = vset.pattern.permute.xlu0 4
    %1486 = vperm.xlu0 %1485, %v1093
    %v1487 = vpop.permute.xlu0 %1486
    %1489 = vset.pattern.permute.xlu0 4
    %1490 = vperm.xlu0 %1489, %v1094
    %v1491 = vpop.permute.xlu0 %1490
    %1493 = vset.pattern.permute.xlu0 4
    %1494 = vperm.xlu0 %1493, %v1095
    %v1495 = vpop.permute.xlu0 %1494
    %1497 = vset.pattern.permute.xlu0 4
    %1498 = vperm.xlu0 %1497, %v1096
    %v1499 = vpop.permute.xlu0 %1498
    %1501 = vset.pattern.permute.xlu0 4
    %1502 = vperm.xlu0 %1501, %v1097
    %v1503 = vpop.permute.xlu0 %1502
    %1505 = vset.pattern.permute.xlu0 4
    %1506 = vperm.xlu0 %1505, %v1098
    %v1507 = vpop.permute.xlu0 %1506
    %1509 = vset.pattern.permute.xlu0 4
    %1510 = vperm.xlu0 %1509, %v1099
    %v1511 = vpop.permute.xlu0 %1510
    %1513 = vset.pattern.permute.xlu0 4
    %1514 = vperm.xlu0 %1513, %v1100
    %v1515 = vpop.permute.xlu0 %1514
    %v1517 = vmul.bf16 %v1391, %v1005
    %v1518 = vmul.bf16 %v1391, %v1006
    %v1519 = vmul.bf16 %v1395, %v1007
    %v1520 = vmul.bf16 %v1395, %v1008
    %v1521 = vmul.bf16 %v1399, %v1009
    %v1522 = vmul.bf16 %v1399, %v1010
    %v1523 = vmul.bf16 %v1403, %v1011
    %v1524 = vmul.bf16 %v1403, %v1012
    %v1525 = vmul.bf16 %v1407, %v1013
    %v1526 = vmul.bf16 %v1407, %v1014
    %v1527 = vmul.bf16 %v1411, %v1015
    %v1528 = vmul.bf16 %v1411, %v1016
    %v1529 = vmul.bf16 %v1415, %v1017
    %v1530 = vmul.bf16 %v1415, %v1018
    %v1531 = vmul.bf16 %v1419, %v1019
    %v1532 = vmul.bf16 %v1419, %v1020
    %v1533 = vmul.bf16 %v1423, %v1021
    %v1534 = vmul.bf16 %v1423, %v1022
    %v1535 = vmul.bf16 %v1427, %v1023
    %v1536 = vmul.bf16 %v1427, %v1024
    %v1537 = vmul.bf16 %v1431, %v1025
    %v1538 = vmul.bf16 %v1431, %v1026
    %v1539 = vmul.bf16 %v1435, %v1027
    %v1540 = vmul.bf16 %v1435, %v1028
    %v1541 = vmul.bf16 %v1439, %v1029
    %v1542 = vmul.bf16 %v1439, %v1030
    %v1543 = vmul.bf16 %v1443, %v1031
    %v1544 = vmul.bf16 %v1443, %v1032
    %v1545 = vmul.bf16 %v1447, %v1033
    %v1546 = vmul.bf16 %v1447, %v1034
    %v1547 = vmul.bf16 %v1451, %v1035
    %v1548 = vmul.bf16 %v1451, %v1036
    %v1549 = vmul.bf16 %v1455, %v1037
    %v1550 = vmul.bf16 %v1455, %v1038
    %v1551 = vmul.bf16 %v1459, %v1039
    %v1552 = vmul.bf16 %v1459, %v1040
    %v1553 = vmul.bf16 %v1463, %v1041
    %v1554 = vmul.bf16 %v1463, %v1042
    %v1555 = vmul.bf16 %v1467, %v1043
    %v1556 = vmul.bf16 %v1467, %v1044
    %v1557 = vmul.bf16 %v1471, %v1045
    %v1558 = vmul.bf16 %v1471, %v1046
    %v1559 = vmul.bf16 %v1475, %v1047
    %v1560 = vmul.bf16 %v1475, %v1048
    %v1561 = vmul.bf16 %v1479, %v1049
    %v1562 = vmul.bf16 %v1479, %v1050
    %v1563 = vmul.bf16 %v1483, %v1051
    %v1564 = vmul.bf16 %v1483, %v1052
    %v1565 = vmul.bf16 %v1487, %v1053
    %v1566 = vmul.bf16 %v1487, %v1054
    %v1567 = vmul.bf16 %v1491, %v1055
    %v1568 = vmul.bf16 %v1491, %v1056
    %v1569 = vmul.bf16 %v1495, %v1057
    %v1570 = vmul.bf16 %v1495, %v1058
    %v1571 = vmul.bf16 %v1499, %v1059
    %v1572 = vmul.bf16 %v1499, %v1060
    %v1573 = vmul.bf16 %v1503, %v1061
    %v1574 = vmul.bf16 %v1503, %v1062
    %v1575 = vmul.bf16 %v1507, %v1063
    %v1576 = vmul.bf16 %v1507, %v1064
    %v1577 = vmul.bf16 %v1511, %v1065
    %v1578 = vmul.bf16 %v1511, %v1066
    %v1579 = vmul.bf16 %v1515, %v1067
    %v1580 = vmul.bf16 %v1515, %v1068
    %v1581 = vmul.bf16 %v1517, %v1005
    %v1582 = vmul.bf16 %v1518, %v1006
    %v1583 = vmul.bf16 %v1519, %v1007
    %v1584 = vmul.bf16 %v1520, %v1008
    %v1585 = vmul.bf16 %v1521, %v1009
    %v1586 = vmul.bf16 %v1522, %v1010
    %v1587 = vmul.bf16 %v1523, %v1011
    %v1588 = vmul.bf16 %v1524, %v1012
    %v1589 = vmul.bf16 %v1525, %v1013
    %v1590 = vmul.bf16 %v1526, %v1014
    %v1591 = vmul.bf16 %v1527, %v1015
    %v1592 = vmul.bf16 %v1528, %v1016
    %v1593 = vmul.bf16 %v1529, %v1017
    %v1594 = vmul.bf16 %v1530, %v1018
    %v1595 = vmul.bf16 %v1531, %v1019
    %v1596 = vmul.bf16 %v1532, %v1020
    %v1597 = vmul.bf16 %v1533, %v1021
    %v1598 = vmul.bf16 %v1534, %v1022
    %v1599 = vmul.bf16 %v1535, %v1023
    %v1600 = vmul.bf16 %v1536, %v1024
    %v1601 = vmul.bf16 %v1537, %v1025
    %v1602 = vmul.bf16 %v1538, %v1026
    %v1603 = vmul.bf16 %v1539, %v1027
    %v1604 = vmul.bf16 %v1540, %v1028
    %v1605 = vmul.bf16 %v1541, %v1029
    %v1606 = vmul.bf16 %v1542, %v1030
    %v1607 = vmul.bf16 %v1543, %v1031
    %v1608 = vmul.bf16 %v1544, %v1032
    %v1609 = vmul.bf16 %v1545, %v1033
    %v1610 = vmul.bf16 %v1546, %v1034
    %v1611 = vmul.bf16 %v1547, %v1035
    %v1612 = vmul.bf16 %v1548, %v1036
    %v1613 = vmul.bf16 %v1549, %v1037
    %v1614 = vmul.bf16 %v1550, %v1038
    %v1615 = vmul.bf16 %v1551, %v1039
    %v1616 = vmul.bf16 %v1552, %v1040
    %v1617 = vmul.bf16 %v1553, %v1041
    %v1618 = vmul.bf16 %v1554, %v1042
    %v1619 = vmul.bf16 %v1555, %v1043
    %v1620 = vmul.bf16 %v1556, %v1044
    %v1621 = vmul.bf16 %v1557, %v1045
    %v1622 = vmul.bf16 %v1558, %v1046
    %v1623 = vmul.bf16 %v1559, %v1047
    %v1624 = vmul.bf16 %v1560, %v1048
    %v1625 = vmul.bf16 %v1561, %v1049
    %v1626 = vmul.bf16 %v1562, %v1050
    %v1627 = vmul.bf16 %v1563, %v1051
    %v1628 = vmul.bf16 %v1564, %v1052
    %v1629 = vmul.bf16 %v1565, %v1053
    %v1630 = vmul.bf16 %v1566, %v1054
    %v1631 = vmul.bf16 %v1567, %v1055
    %v1632 = vmul.bf16 %v1568, %v1056
    %v1633 = vmul.bf16 %v1569, %v1057
    %v1634 = vmul.bf16 %v1570, %v1058
    %v1635 = vmul.bf16 %v1571, %v1059
    %v1636 = vmul.bf16 %v1572, %v1060
    %v1637 = vmul.bf16 %v1573, %v1061
    %v1638 = vmul.bf16 %v1574, %v1062
    %v1639 = vmul.bf16 %v1575, %v1063
    %v1640 = vmul.bf16 %v1576, %v1064
    %v1641 = vmul.bf16 %v1577, %v1065
    %v1642 = vmul.bf16 %v1578, %v1066
    %v1643 = vmul.bf16 %v1579, %v1067
    %v1644 = vmul.bf16 %v1580, %v1068
    %v1645 = vadd.bf16 %v1325, %v1581
    %v1646 = vadd.bf16 %v1326, %v1582
    %v1647 = vadd.bf16 %v1327, %v1583
    %v1648 = vadd.bf16 %v1328, %v1584
    %v1649 = vadd.bf16 %v1329, %v1585
    %v1650 = vadd.bf16 %v1330, %v1586
    %v1651 = vadd.bf16 %v1331, %v1587
    %v1652 = vadd.bf16 %v1332, %v1588
    %v1653 = vadd.bf16 %v1333, %v1589
    %v1654 = vadd.bf16 %v1334, %v1590
    %v1655 = vadd.bf16 %v1335, %v1591
    %v1656 = vadd.bf16 %v1336, %v1592
    %v1657 = vadd.bf16 %v1337, %v1593
    %v1658 = vadd.bf16 %v1338, %v1594
    %v1659 = vadd.bf16 %v1339, %v1595
    %v1660 = vadd.bf16 %v1340, %v1596
    %v1661 = vadd.bf16 %v1341, %v1597
    %v1662 = vadd.bf16 %v1342, %v1598
    %v1663 = vadd.bf16 %v1343, %v1599
    %v1664 = vadd.bf16 %v1344, %v1600
    %v1665 = vadd.bf16 %v1345, %v1601
    %v1666 = vadd.bf16 %v1346, %v1602
    %v1667 = vadd.bf16 %v1347, %v1603
    %v1668 = vadd.bf16 %v1348, %v1604
    %v1669 = vadd.bf16 %v1349, %v1605
    %v1670 = vadd.bf16 %v1350, %v1606
    %v1671 = vadd.bf16 %v1351, %v1607
    %v1672 = vadd.bf16 %v1352, %v1608
    %v1673 = vadd.bf16 %v1353, %v1609
    %v1674 = vadd.bf16 %v1354, %v1610
    %v1675 = vadd.bf16 %v1355, %v1611
    %v1676 = vadd.bf16 %v1356, %v1612
    %v1677 = vadd.bf16 %v1357, %v1613
    %v1678 = vadd.bf16 %v1358, %v1614
    %v1679 = vadd.bf16 %v1359, %v1615
    %v1680 = vadd.bf16 %v1360, %v1616
    %v1681 = vadd.bf16 %v1361, %v1617
    %v1682 = vadd.bf16 %v1362, %v1618
    %v1683 = vadd.bf16 %v1363, %v1619
    %v1684 = vadd.bf16 %v1364, %v1620
    %v1685 = vadd.bf16 %v1365, %v1621
    %v1686 = vadd.bf16 %v1366, %v1622
    %v1687 = vadd.bf16 %v1367, %v1623
    %v1688 = vadd.bf16 %v1368, %v1624
    %v1689 = vadd.bf16 %v1369, %v1625
    %v1690 = vadd.bf16 %v1370, %v1626
    %v1691 = vadd.bf16 %v1371, %v1627
    %v1692 = vadd.bf16 %v1372, %v1628
    %v1693 = vadd.bf16 %v1373, %v1629
    %v1694 = vadd.bf16 %v1374, %v1630
    %v1695 = vadd.bf16 %v1375, %v1631
    %v1696 = vadd.bf16 %v1376, %v1632
    %v1697 = vadd.bf16 %v1377, %v1633
    %v1698 = vadd.bf16 %v1378, %v1634
    %v1699 = vadd.bf16 %v1379, %v1635
    %v1700 = vadd.bf16 %v1380, %v1636
    %v1701 = vadd.bf16 %v1381, %v1637
    %v1702 = vadd.bf16 %v1382, %v1638
    %v1703 = vadd.bf16 %v1383, %v1639
    %v1704 = vadd.bf16 %v1384, %v1640
    %v1705 = vadd.bf16 %v1385, %v1641
    %v1706 = vadd.bf16 %v1386, %v1642
    %v1707 = vadd.bf16 %v1387, %v1643
    %v1708 = vadd.bf16 %v1388, %v1644
    %v1709 = vmul.bf16 %v941, %v1005
    %v1710 = vmul.bf16 %v942, %v1006
    %v1711 = vmul.bf16 %v943, %v1007
    %v1712 = vmul.bf16 %v944, %v1008
    %v1713 = vmul.bf16 %v945, %v1009
    %v1714 = vmul.bf16 %v946, %v1010
    %v1715 = vmul.bf16 %v947, %v1011
    %v1716 = vmul.bf16 %v948, %v1012
    %v1717 = vmul.bf16 %v949, %v1013
    %v1718 = vmul.bf16 %v950, %v1014
    %v1719 = vmul.bf16 %v951, %v1015
    %v1720 = vmul.bf16 %v952, %v1016
    %v1721 = vmul.bf16 %v953, %v1017
    %v1722 = vmul.bf16 %v954, %v1018
    %v1723 = vmul.bf16 %v955, %v1019
    %v1724 = vmul.bf16 %v956, %v1020
    %v1725 = vmul.bf16 %v957, %v1021
    %v1726 = vmul.bf16 %v958, %v1022
    %v1727 = vmul.bf16 %v959, %v1023
    %v1728 = vmul.bf16 %v960, %v1024
    %v1729 = vmul.bf16 %v961, %v1025
    %v1730 = vmul.bf16 %v962, %v1026
    %v1731 = vmul.bf16 %v963, %v1027
    %v1732 = vmul.bf16 %v964, %v1028
    %v1733 = vmul.bf16 %v965, %v1029
    %v1734 = vmul.bf16 %v966, %v1030
    %v1735 = vmul.bf16 %v967, %v1031
    %v1736 = vmul.bf16 %v968, %v1032
    %v1737 = vmul.bf16 %v969, %v1033
    %v1738 = vmul.bf16 %v970, %v1034
    %v1739 = vmul.bf16 %v971, %v1035
    %v1740 = vmul.bf16 %v972, %v1036
    %v1741 = vmul.bf16 %v973, %v1037
    %v1742 = vmul.bf16 %v974, %v1038
    %v1743 = vmul.bf16 %v975, %v1039
    %v1744 = vmul.bf16 %v976, %v1040
    %v1745 = vmul.bf16 %v977, %v1041
    %v1746 = vmul.bf16 %v978, %v1042
    %v1747 = vmul.bf16 %v979, %v1043
    %v1748 = vmul.bf16 %v980, %v1044
    %v1749 = vmul.bf16 %v981, %v1045
    %v1750 = vmul.bf16 %v982, %v1046
    %v1751 = vmul.bf16 %v983, %v1047
    %v1752 = vmul.bf16 %v984, %v1048
    %v1753 = vmul.bf16 %v985, %v1049
    %v1754 = vmul.bf16 %v986, %v1050
    %v1755 = vmul.bf16 %v987, %v1051
    %v1756 = vmul.bf16 %v988, %v1052
    %v1757 = vmul.bf16 %v989, %v1053
    %v1758 = vmul.bf16 %v990, %v1054
    %v1759 = vmul.bf16 %v991, %v1055
    %v1760 = vmul.bf16 %v992, %v1056
    %v1761 = vmul.bf16 %v993, %v1057
    %v1762 = vmul.bf16 %v994, %v1058
    %v1763 = vmul.bf16 %v995, %v1059
    %v1764 = vmul.bf16 %v996, %v1060
    %v1765 = vmul.bf16 %v997, %v1061
    %v1766 = vmul.bf16 %v998, %v1062
    %v1767 = vmul.bf16 %v999, %v1063
    %v1768 = vmul.bf16 %v1000, %v1064
    %v1769 = vmul.bf16 %v1001, %v1065
    %v1770 = vmul.bf16 %v1002, %v1066
    %v1771 = vmul.bf16 %v1003, %v1067
    %v1772 = vmul.bf16 %v1004, %v1068
    %1773 = vset.pattern.permute.xlu0 3
    %1774 = vperm.xlu0 %1773, %v1069
    %v1775 = vpop.permute.xlu0 %1774
    %1777 = vset.pattern.permute.xlu0 3
    %1778 = vperm.xlu0 %1777, %v1070
    %v1779 = vpop.permute.xlu0 %1778
    %1781 = vset.pattern.permute.xlu0 3
    %1782 = vperm.xlu0 %1781, %v1071
    %v1783 = vpop.permute.xlu0 %1782
    %1785 = vset.pattern.permute.xlu0 3
    %1786 = vperm.xlu0 %1785, %v1072
    %v1787 = vpop.permute.xlu0 %1786
    %1789 = vset.pattern.permute.xlu0 3
    %1790 = vperm.xlu0 %1789, %v1073
    %v1791 = vpop.permute.xlu0 %1790
    %1793 = vset.pattern.permute.xlu0 3
    %1794 = vperm.xlu0 %1793, %v1074
    %v1795 = vpop.permute.xlu0 %1794
    %1797 = vset.pattern.permute.xlu0 3
    %1798 = vperm.xlu0 %1797, %v1075
    %v1799 = vpop.permute.xlu0 %1798
    %1801 = vset.pattern.permute.xlu0 3
    %1802 = vperm.xlu0 %1801, %v1076
    %v1803 = vpop.permute.xlu0 %1802
    %1805 = vset.pattern.permute.xlu0 3
    %1806 = vperm.xlu0 %1805, %v1077
    %v1807 = vpop.permute.xlu0 %1806
    %1809 = vset.pattern.permute.xlu0 3
    %1810 = vperm.xlu0 %1809, %v1078
    %v1811 = vpop.permute.xlu0 %1810
    %1813 = vset.pattern.permute.xlu0 3
    %1814 = vperm.xlu0 %1813, %v1079
    %v1815 = vpop.permute.xlu0 %1814
    %1817 = vset.pattern.permute.xlu0 3
    %1818 = vperm.xlu0 %1817, %v1080
    %v1819 = vpop.permute.xlu0 %1818
    %1821 = vset.pattern.permute.xlu0 3
    %1822 = vperm.xlu0 %1821, %v1081
    %v1823 = vpop.permute.xlu0 %1822
    %1825 = vset.pattern.permute.xlu0 3
    %1826 = vperm.xlu0 %1825, %v1082
    %v1827 = vpop.permute.xlu0 %1826
    %1829 = vset.pattern.permute.xlu0 3
    %1830 = vperm.xlu0 %1829, %v1083
    %v1831 = vpop.permute.xlu0 %1830
    %1833 = vset.pattern.permute.xlu0 3
    %1834 = vperm.xlu0 %1833, %v1084
    %v1835 = vpop.permute.xlu0 %1834
    %1837 = vset.pattern.permute.xlu0 3
    %1838 = vperm.xlu0 %1837, %v1085
    %v1839 = vpop.permute.xlu0 %1838
    %1841 = vset.pattern.permute.xlu0 3
    %1842 = vperm.xlu0 %1841, %v1086
    %v1843 = vpop.permute.xlu0 %1842
    %1845 = vset.pattern.permute.xlu0 3
    %1846 = vperm.xlu0 %1845, %v1087
    %v1847 = vpop.permute.xlu0 %1846
    %1849 = vset.pattern.permute.xlu0 3
    %1850 = vperm.xlu0 %1849, %v1088
    %v1851 = vpop.permute.xlu0 %1850
    %1853 = vset.pattern.permute.xlu0 3
    %1854 = vperm.xlu0 %1853, %v1089
    %v1855 = vpop.permute.xlu0 %1854
    %1857 = vset.pattern.permute.xlu0 3
    %1858 = vperm.xlu0 %1857, %v1090
    %v1859 = vpop.permute.xlu0 %1858
    %1861 = vset.pattern.permute.xlu0 3
    %1862 = vperm.xlu0 %1861, %v1091
    %v1863 = vpop.permute.xlu0 %1862
    %1865 = vset.pattern.permute.xlu0 3
    %1866 = vperm.xlu0 %1865, %v1092
    %v1867 = vpop.permute.xlu0 %1866
    %1869 = vset.pattern.permute.xlu0 3
    %1870 = vperm.xlu0 %1869, %v1093
    %v1871 = vpop.permute.xlu0 %1870
    %1873 = vset.pattern.permute.xlu0 3
    %1874 = vperm.xlu0 %1873, %v1094
    %v1875 = vpop.permute.xlu0 %1874
    %1877 = vset.pattern.permute.xlu0 3
    %1878 = vperm.xlu0 %1877, %v1095
    %v1879 = vpop.permute.xlu0 %1878
    %1881 = vset.pattern.permute.xlu0 3
    %1882 = vperm.xlu0 %1881, %v1096
    %v1883 = vpop.permute.xlu0 %1882
    %1885 = vset.pattern.permute.xlu0 3
    %1886 = vperm.xlu0 %1885, %v1097
    %v1887 = vpop.permute.xlu0 %1886
    %1889 = vset.pattern.permute.xlu0 3
    %1890 = vperm.xlu0 %1889, %v1098
    %v1891 = vpop.permute.xlu0 %1890
    %1893 = vset.pattern.permute.xlu0 3
    %1894 = vperm.xlu0 %1893, %v1099
    %v1895 = vpop.permute.xlu0 %1894
    %1897 = vset.pattern.permute.xlu0 3
    %1898 = vperm.xlu0 %1897, %v1100
    %v1899 = vpop.permute.xlu0 %1898
    %v1901 = vmul.bf16 %v1775, %v1709
    %v1902 = vmul.bf16 %v1775, %v1710
    %v1903 = vmul.bf16 %v1779, %v1711
    %v1904 = vmul.bf16 %v1779, %v1712
    %v1905 = vmul.bf16 %v1783, %v1713
    %v1906 = vmul.bf16 %v1783, %v1714
    %v1907 = vmul.bf16 %v1787, %v1715
    %v1908 = vmul.bf16 %v1787, %v1716
    %v1909 = vmul.bf16 %v1791, %v1717
    %v1910 = vmul.bf16 %v1791, %v1718
    %v1911 = vmul.bf16 %v1795, %v1719
    %v1912 = vmul.bf16 %v1795, %v1720
    %v1913 = vmul.bf16 %v1799, %v1721
    %v1914 = vmul.bf16 %v1799, %v1722
    %v1915 = vmul.bf16 %v1803, %v1723
    %v1916 = vmul.bf16 %v1803, %v1724
    %v1917 = vmul.bf16 %v1807, %v1725
    %v1918 = vmul.bf16 %v1807, %v1726
    %v1919 = vmul.bf16 %v1811, %v1727
    %v1920 = vmul.bf16 %v1811, %v1728
    %v1921 = vmul.bf16 %v1815, %v1729
    %v1922 = vmul.bf16 %v1815, %v1730
    %v1923 = vmul.bf16 %v1819, %v1731
    %v1924 = vmul.bf16 %v1819, %v1732
    %v1925 = vmul.bf16 %v1823, %v1733
    %v1926 = vmul.bf16 %v1823, %v1734
    %v1927 = vmul.bf16 %v1827, %v1735
    %v1928 = vmul.bf16 %v1827, %v1736
    %v1929 = vmul.bf16 %v1831, %v1737
    %v1930 = vmul.bf16 %v1831, %v1738
    %v1931 = vmul.bf16 %v1835, %v1739
    %v1932 = vmul.bf16 %v1835, %v1740
    %v1933 = vmul.bf16 %v1839, %v1741
    %v1934 = vmul.bf16 %v1839, %v1742
    %v1935 = vmul.bf16 %v1843, %v1743
    %v1936 = vmul.bf16 %v1843, %v1744
    %v1937 = vmul.bf16 %v1847, %v1745
    %v1938 = vmul.bf16 %v1847, %v1746
    %v1939 = vmul.bf16 %v1851, %v1747
    %v1940 = vmul.bf16 %v1851, %v1748
    %v1941 = vmul.bf16 %v1855, %v1749
    %v1942 = vmul.bf16 %v1855, %v1750
    %v1943 = vmul.bf16 %v1859, %v1751
    %v1944 = vmul.bf16 %v1859, %v1752
    %v1945 = vmul.bf16 %v1863, %v1753
    %v1946 = vmul.bf16 %v1863, %v1754
    %v1947 = vmul.bf16 %v1867, %v1755
    %v1948 = vmul.bf16 %v1867, %v1756
    %v1949 = vmul.bf16 %v1871, %v1757
    %v1950 = vmul.bf16 %v1871, %v1758
    %v1951 = vmul.bf16 %v1875, %v1759
    %v1952 = vmul.bf16 %v1875, %v1760
    %v1953 = vmul.bf16 %v1879, %v1761
    %v1954 = vmul.bf16 %v1879, %v1762
    %v1955 = vmul.bf16 %v1883, %v1763
    %v1956 = vmul.bf16 %v1883, %v1764
    %v1957 = vmul.bf16 %v1887, %v1765
    %v1958 = vmul.bf16 %v1887, %v1766
    %v1959 = vmul.bf16 %v1891, %v1767
    %v1960 = vmul.bf16 %v1891, %v1768
    %v1961 = vmul.bf16 %v1895, %v1769
    %v1962 = vmul.bf16 %v1895, %v1770
    %v1963 = vmul.bf16 %v1899, %v1771
    %v1964 = vmul.bf16 %v1899, %v1772
    %v1965 = vadd.bf16 %v1645, %v1901
    %v1966 = vadd.bf16 %v1646, %v1902
    %v1967 = vadd.bf16 %v1647, %v1903
    %v1968 = vadd.bf16 %v1648, %v1904
    %v1969 = vadd.bf16 %v1649, %v1905
    %v1970 = vadd.bf16 %v1650, %v1906
    %v1971 = vadd.bf16 %v1651, %v1907
    %v1972 = vadd.bf16 %v1652, %v1908
    %v1973 = vadd.bf16 %v1653, %v1909
    %v1974 = vadd.bf16 %v1654, %v1910
    %v1975 = vadd.bf16 %v1655, %v1911
    %v1976 = vadd.bf16 %v1656, %v1912
    %v1977 = vadd.bf16 %v1657, %v1913
    %v1978 = vadd.bf16 %v1658, %v1914
    %v1979 = vadd.bf16 %v1659, %v1915
    %v1980 = vadd.bf16 %v1660, %v1916
    %v1981 = vadd.bf16 %v1661, %v1917
    %v1982 = vadd.bf16 %v1662, %v1918
    %v1983 = vadd.bf16 %v1663, %v1919
    %v1984 = vadd.bf16 %v1664, %v1920
    %v1985 = vadd.bf16 %v1665, %v1921
    %v1986 = vadd.bf16 %v1666, %v1922
    %v1987 = vadd.bf16 %v1667, %v1923
    %v1988 = vadd.bf16 %v1668, %v1924
    %v1989 = vadd.bf16 %v1669, %v1925
    %v1990 = vadd.bf16 %v1670, %v1926
    %v1991 = vadd.bf16 %v1671, %v1927
    %v1992 = vadd.bf16 %v1672, %v1928
    %v1993 = vadd.bf16 %v1673, %v1929
    %v1994 = vadd.bf16 %v1674, %v1930
    %v1995 = vadd.bf16 %v1675, %v1931
    %v1996 = vadd.bf16 %v1676, %v1932
    %v1997 = vadd.bf16 %v1677, %v1933
    %v1998 = vadd.bf16 %v1678, %v1934
    %v1999 = vadd.bf16 %v1679, %v1935
    %v2000 = vadd.bf16 %v1680, %v1936
    %v2001 = vadd.bf16 %v1681, %v1937
    %v2002 = vadd.bf16 %v1682, %v1938
    %v2003 = vadd.bf16 %v1683, %v1939
    %v2004 = vadd.bf16 %v1684, %v1940
    %v2005 = vadd.bf16 %v1685, %v1941
    %v2006 = vadd.bf16 %v1686, %v1942
    %v2007 = vadd.bf16 %v1687, %v1943
    %v2008 = vadd.bf16 %v1688, %v1944
    %v2009 = vadd.bf16 %v1689, %v1945
    %v2010 = vadd.bf16 %v1690, %v1946
    %v2011 = vadd.bf16 %v1691, %v1947
    %v2012 = vadd.bf16 %v1692, %v1948
    %v2013 = vadd.bf16 %v1693, %v1949
    %v2014 = vadd.bf16 %v1694, %v1950
    %v2015 = vadd.bf16 %v1695, %v1951
    %v2016 = vadd.bf16 %v1696, %v1952
    %v2017 = vadd.bf16 %v1697, %v1953
    %v2018 = vadd.bf16 %v1698, %v1954
    %v2019 = vadd.bf16 %v1699, %v1955
    %v2020 = vadd.bf16 %v1700, %v1956
    %v2021 = vadd.bf16 %v1701, %v1957
    %v2022 = vadd.bf16 %v1702, %v1958
    %v2023 = vadd.bf16 %v1703, %v1959
    %v2024 = vadd.bf16 %v1704, %v1960
    %v2025 = vadd.bf16 %v1705, %v1961
    %v2026 = vadd.bf16 %v1706, %v1962
    %v2027 = vadd.bf16 %v1707, %v1963
    %v2028 = vadd.bf16 %v1708, %v1964
    %v2029 = vsub.bf16 0, %v1965
    %v2030 = vsub.bf16 0, %v1966
    %v2031 = vsub.bf16 0, %v1967
    %v2032 = vsub.bf16 0, %v1968
    %v2033 = vsub.bf16 0, %v1969
    %v2034 = vsub.bf16 0, %v1970
    %v2035 = vsub.bf16 0, %v1971
    %v2036 = vsub.bf16 0, %v1972
    %v2037 = vsub.bf16 0, %v1973
    %v2038 = vsub.bf16 0, %v1974
    %v2039 = vsub.bf16 0, %v1975
    %v2040 = vsub.bf16 0, %v1976
    %v2041 = vsub.bf16 0, %v1977
    %v2042 = vsub.bf16 0, %v1978
    %v2043 = vsub.bf16 0, %v1979
    %v2044 = vsub.bf16 0, %v1980
    %v2045 = vsub.bf16 0, %v1981
    %v2046 = vsub.bf16 0, %v1982
    %v2047 = vsub.bf16 0, %v1983
    %v2048 = vsub.bf16 0, %v1984
    %v2049 = vsub.bf16 0, %v1985
    %v2050 = vsub.bf16 0, %v1986
    %v2051 = vsub.bf16 0, %v1987
    %v2052 = vsub.bf16 0, %v1988
    %v2053 = vsub.bf16 0, %v1989
    %v2054 = vsub.bf16 0, %v1990
    %v2055 = vsub.bf16 0, %v1991
    %v2056 = vsub.bf16 0, %v1992
    %v2057 = vsub.bf16 0, %v1993
    %v2058 = vsub.bf16 0, %v1994
    %v2059 = vsub.bf16 0, %v1995
    %v2060 = vsub.bf16 0, %v1996
    %v2061 = vsub.bf16 0, %v1997
    %v2062 = vsub.bf16 0, %v1998
    %v2063 = vsub.bf16 0, %v1999
    %v2064 = vsub.bf16 0, %v2000
    %v2065 = vsub.bf16 0, %v2001
    %v2066 = vsub.bf16 0, %v2002
    %v2067 = vsub.bf16 0, %v2003
    %v2068 = vsub.bf16 0, %v2004
    %v2069 = vsub.bf16 0, %v2005
    %v2070 = vsub.bf16 0, %v2006
    %v2071 = vsub.bf16 0, %v2007
    %v2072 = vsub.bf16 0, %v2008
    %v2073 = vsub.bf16 0, %v2009
    %v2074 = vsub.bf16 0, %v2010
    %v2075 = vsub.bf16 0, %v2011
    %v2076 = vsub.bf16 0, %v2012
    %v2077 = vsub.bf16 0, %v2013
    %v2078 = vsub.bf16 0, %v2014
    %v2079 = vsub.bf16 0, %v2015
    %v2080 = vsub.bf16 0, %v2016
    %v2081 = vsub.bf16 0, %v2017
    %v2082 = vsub.bf16 0, %v2018
    %v2083 = vsub.bf16 0, %v2019
    %v2084 = vsub.bf16 0, %v2020
    %v2085 = vsub.bf16 0, %v2021
    %v2086 = vsub.bf16 0, %v2022
    %v2087 = vsub.bf16 0, %v2023
    %v2088 = vsub.bf16 0, %v2024
    %v2089 = vsub.bf16 0, %v2025
    %v2090 = vsub.bf16 0, %v2026
    %v2091 = vsub.bf16 0, %v2027
    %v2092 = vsub.bf16 0, %v2028
    %v2094 = vmul.bf16 %v2029, 1069105081
    %v2095 = vpow.bf16.pop %v2094
    %v2097 = vmul.bf16 %v2030, 1069105081
    %v2098 = vpow.bf16.pop %v2097
    %v2100 = vmul.bf16 %v2031, 1069105081
    %v2101 = vpow.bf16.pop %v2100
    %v2103 = vmul.bf16 %v2032, 1069105081
    %v2104 = vpow.bf16.pop %v2103
    %v2106 = vmul.bf16 %v2033, 1069105081
    %v2107 = vpow.bf16.pop %v2106
    %v2109 = vmul.bf16 %v2034, 1069105081
    %v2110 = vpow.bf16.pop %v2109
    %v2112 = vmul.bf16 %v2035, 1069105081
    %v2113 = vpow.bf16.pop %v2112
    %v2115 = vmul.bf16 %v2036, 1069105081
    %v2116 = vpow.bf16.pop %v2115
    %v2118 = vmul.bf16 %v2037, 1069105081
    %v2119 = vpow.bf16.pop %v2118
    %v2121 = vmul.bf16 %v2038, 1069105081
    %v2122 = vpow.bf16.pop %v2121
    %v2124 = vmul.bf16 %v2039, 1069105081
    %v2125 = vpow.bf16.pop %v2124
    %v2127 = vmul.bf16 %v2040, 1069105081
    %v2128 = vpow.bf16.pop %v2127
    %v2130 = vmul.bf16 %v2041, 1069105081
    %v2131 = vpow.bf16.pop %v2130
    %v2133 = vmul.bf16 %v2042, 1069105081
    %v2134 = vpow.bf16.pop %v2133
    %v2136 = vmul.bf16 %v2043, 1069105081
    %v2137 = vpow.bf16.pop %v2136
    %v2139 = vmul.bf16 %v2044, 1069105081
    %v2140 = vpow.bf16.pop %v2139
    %v2142 = vmul.bf16 %v2045, 1069105081
    %v2143 = vpow.bf16.pop %v2142
    %v2145 = vmul.bf16 %v2046, 1069105081
    %v2146 = vpow.bf16.pop %v2145
    %v2148 = vmul.bf16 %v2047, 1069105081
    %v2149 = vpow.bf16.pop %v2148
    %v2151 = vmul.bf16 %v2048, 1069105081
    %v2152 = vpow.bf16.pop %v2151
    %v2154 = vmul.bf16 %v2049, 1069105081
    %v2155 = vpow.bf16.pop %v2154
    %v2157 = vmul.bf16 %v2050, 1069105081
    %v2158 = vpow.bf16.pop %v2157
    %v2160 = vmul.bf16 %v2051, 1069105081
    %v2161 = vpow.bf16.pop %v2160
    %v2163 = vmul.bf16 %v2052, 1069105081
    %v2164 = vpow.bf16.pop %v2163
    %v2166 = vmul.bf16 %v2053, 1069105081
    %v2167 = vpow.bf16.pop %v2166
    %v2169 = vmul.bf16 %v2054, 1069105081
    %v2170 = vpow.bf16.pop %v2169
    %v2172 = vmul.bf16 %v2055, 1069105081
    %v2173 = vpow.bf16.pop %v2172
    %v2175 = vmul.bf16 %v2056, 1069105081
    %v2176 = vpow.bf16.pop %v2175
    %v2178 = vmul.bf16 %v2057, 1069105081
    %v2179 = vpow.bf16.pop %v2178
    %v2181 = vmul.bf16 %v2058, 1069105081
    %v2182 = vpow.bf16.pop %v2181
    %v2184 = vmul.bf16 %v2059, 1069105081
    %v2185 = vpow.bf16.pop %v2184
    %v2187 = vmul.bf16 %v2060, 1069105081
    %v2188 = vpow.bf16.pop %v2187
    %v2190 = vmul.bf16 %v2061, 1069105081
    %v2191 = vpow.bf16.pop %v2190
    %v2193 = vmul.bf16 %v2062, 1069105081
    %v2194 = vpow.bf16.pop %v2193
    %v2196 = vmul.bf16 %v2063, 1069105081
    %v2197 = vpow.bf16.pop %v2196
    %v2199 = vmul.bf16 %v2064, 1069105081
    %v2200 = vpow.bf16.pop %v2199
    %v2202 = vmul.bf16 %v2065, 1069105081
    %v2203 = vpow.bf16.pop %v2202
    %v2205 = vmul.bf16 %v2066, 1069105081
    %v2206 = vpow.bf16.pop %v2205
    %v2208 = vmul.bf16 %v2067, 1069105081
    %v2209 = vpow.bf16.pop %v2208
    %v2211 = vmul.bf16 %v2068, 1069105081
    %v2212 = vpow.bf16.pop %v2211
    %v2214 = vmul.bf16 %v2069, 1069105081
    %v2215 = vpow.bf16.pop %v2214
    %v2217 = vmul.bf16 %v2070, 1069105081
    %v2218 = vpow.bf16.pop %v2217
    %v2220 = vmul.bf16 %v2071, 1069105081
    %v2221 = vpow.bf16.pop %v2220
    %v2223 = vmul.bf16 %v2072, 1069105081
    %v2224 = vpow.bf16.pop %v2223
    %v2226 = vmul.bf16 %v2073, 1069105081
    %v2227 = vpow.bf16.pop %v2226
    %v2229 = vmul.bf16 %v2074, 1069105081
    %v2230 = vpow.bf16.pop %v2229
    %v2232 = vmul.bf16 %v2075, 1069105081
    %v2233 = vpow.bf16.pop %v2232
    %v2235 = vmul.bf16 %v2076, 1069105081
    %v2236 = vpow.bf16.pop %v2235
    %v2238 = vmul.bf16 %v2077, 1069105081
    %v2239 = vpow.bf16.pop %v2238
    %v2241 = vmul.bf16 %v2078, 1069105081
    %v2242 = vpow.bf16.pop %v2241
    %v2244 = vmul.bf16 %v2079, 1069105081
    %v2245 = vpow.bf16.pop %v2244
    %v2247 = vmul.bf16 %v2080, 1069105081
    %v2248 = vpow.bf16.pop %v2247
    %v2250 = vmul.bf16 %v2081, 1069105081
    %v2251 = vpow.bf16.pop %v2250
    %v2253 = vmul.bf16 %v2082, 1069105081
    %v2254 = vpow.bf16.pop %v2253
    %v2256 = vmul.bf16 %v2083, 1069105081
    %v2257 = vpow.bf16.pop %v2256
    %v2259 = vmul.bf16 %v2084, 1069105081
    %v2260 = vpow.bf16.pop %v2259
    %v2262 = vmul.bf16 %v2085, 1069105081
    %v2263 = vpow.bf16.pop %v2262
    %v2265 = vmul.bf16 %v2086, 1069105081
    %v2266 = vpow.bf16.pop %v2265
    %v2268 = vmul.bf16 %v2087, 1069105081
    %v2269 = vpow.bf16.pop %v2268
    %v2271 = vmul.bf16 %v2088, 1069105081
    %v2272 = vpow.bf16.pop %v2271
    %v2274 = vmul.bf16 %v2089, 1069105081
    %v2275 = vpow.bf16.pop %v2274
    %v2277 = vmul.bf16 %v2090, 1069105081
    %v2278 = vpow.bf16.pop %v2277
    %v2280 = vmul.bf16 %v2091, 1069105081
    %v2281 = vpow.bf16.pop %v2280
    %v2283 = vmul.bf16 %v2092, 1069105081
    %v2284 = vpow.bf16.pop %v2283
    %2285 = vset.pattern.permute.xlu0 5
    %2286 = vperm.xlu0 %2285, %v1069
    %v2287 = vpop.permute.xlu0 %2286
    %2289 = vset.pattern.permute.xlu0 5
    %2290 = vperm.xlu0 %2289, %v1070
    %v2291 = vpop.permute.xlu0 %2290
    %2293 = vset.pattern.permute.xlu0 5
    %2294 = vperm.xlu0 %2293, %v1071
    %v2295 = vpop.permute.xlu0 %2294
    %2297 = vset.pattern.permute.xlu0 5
    %2298 = vperm.xlu0 %2297, %v1072
    %v2299 = vpop.permute.xlu0 %2298
    %2301 = vset.pattern.permute.xlu0 5
    %2302 = vperm.xlu0 %2301, %v1073
    %v2303 = vpop.permute.xlu0 %2302
    %2305 = vset.pattern.permute.xlu0 5
    %2306 = vperm.xlu0 %2305, %v1074
    %v2307 = vpop.permute.xlu0 %2306
    %2309 = vset.pattern.permute.xlu0 5
    %2310 = vperm.xlu0 %2309, %v1075
    %v2311 = vpop.permute.xlu0 %2310
    %2313 = vset.pattern.permute.xlu0 5
    %2314 = vperm.xlu0 %2313, %v1076
    %v2315 = vpop.permute.xlu0 %2314
    %2317 = vset.pattern.permute.xlu0 5
    %2318 = vperm.xlu0 %2317, %v1077
    %v2319 = vpop.permute.xlu0 %2318
    %2321 = vset.pattern.permute.xlu0 5
    %2322 = vperm.xlu0 %2321, %v1078
    %v2323 = vpop.permute.xlu0 %2322
    %2325 = vset.pattern.permute.xlu0 5
    %2326 = vperm.xlu0 %2325, %v1079
    %v2327 = vpop.permute.xlu0 %2326
    %2329 = vset.pattern.permute.xlu0 5
    %2330 = vperm.xlu0 %2329, %v1080
    %v2331 = vpop.permute.xlu0 %2330
    %2333 = vset.pattern.permute.xlu0 5
    %2334 = vperm.xlu0 %2333, %v1081
    %v2335 = vpop.permute.xlu0 %2334
    %2337 = vset.pattern.permute.xlu0 5
    %2338 = vperm.xlu0 %2337, %v1082
    %v2339 = vpop.permute.xlu0 %2338
    %2341 = vset.pattern.permute.xlu0 5
    %2342 = vperm.xlu0 %2341, %v1083
    %v2343 = vpop.permute.xlu0 %2342
    %2345 = vset.pattern.permute.xlu0 5
    %2346 = vperm.xlu0 %2345, %v1084
    %v2347 = vpop.permute.xlu0 %2346
    %2349 = vset.pattern.permute.xlu0 5
    %2350 = vperm.xlu0 %2349, %v1085
    %v2351 = vpop.permute.xlu0 %2350
    %2353 = vset.pattern.permute.xlu0 5
    %2354 = vperm.xlu0 %2353, %v1086
    %v2355 = vpop.permute.xlu0 %2354
    %2357 = vset.pattern.permute.xlu0 5
    %2358 = vperm.xlu0 %2357, %v1087
    %v2359 = vpop.permute.xlu0 %2358
    %2361 = vset.pattern.permute.xlu0 5
    %2362 = vperm.xlu0 %2361, %v1088
    %v2363 = vpop.permute.xlu0 %2362
    %2365 = vset.pattern.permute.xlu0 5
    %2366 = vperm.xlu0 %2365, %v1089
    %v2367 = vpop.permute.xlu0 %2366
    %2369 = vset.pattern.permute.xlu0 5
    %2370 = vperm.xlu0 %2369, %v1090
    %v2371 = vpop.permute.xlu0 %2370
    %2373 = vset.pattern.permute.xlu0 5
    %2374 = vperm.xlu0 %2373, %v1091
    %v2375 = vpop.permute.xlu0 %2374
    %2377 = vset.pattern.permute.xlu0 5
    %2378 = vperm.xlu0 %2377, %v1092
    %v2379 = vpop.permute.xlu0 %2378
    %2381 = vset.pattern.permute.xlu0 5
    %2382 = vperm.xlu0 %2381, %v1093
    %v2383 = vpop.permute.xlu0 %2382
    %2385 = vset.pattern.permute.xlu0 5
    %2386 = vperm.xlu0 %2385, %v1094
    %v2387 = vpop.permute.xlu0 %2386
    %2389 = vset.pattern.permute.xlu0 5
    %2390 = vperm.xlu0 %2389, %v1095
    %v2391 = vpop.permute.xlu0 %2390
    %2393 = vset.pattern.permute.xlu0 5
    %2394 = vperm.xlu0 %2393, %v1096
    %v2395 = vpop.permute.xlu0 %2394
    %2397 = vset.pattern.permute.xlu0 5
    %2398 = vperm.xlu0 %2397, %v1097
    %v2399 = vpop.permute.xlu0 %2398
    %2401 = vset.pattern.permute.xlu0 5
    %2402 = vperm.xlu0 %2401, %v1098
    %v2403 = vpop.permute.xlu0 %2402
    %2405 = vset.pattern.permute.xlu0 5
    %2406 = vperm.xlu0 %2405, %v1099
    %v2407 = vpop.permute.xlu0 %2406
    %2409 = vset.pattern.permute.xlu0 5
    %2410 = vperm.xlu0 %2409, %v1100
    %v2411 = vpop.permute.xlu0 %2410
    %v2413 = vmul.bf16 %v2287, %v2095
    %v2414 = vmul.bf16 %v2287, %v2098
    %v2415 = vmul.bf16 %v2291, %v2101
    %v2416 = vmul.bf16 %v2291, %v2104
    %v2417 = vmul.bf16 %v2295, %v2107
    %v2418 = vmul.bf16 %v2295, %v2110
    %v2419 = vmul.bf16 %v2299, %v2113
    %v2420 = vmul.bf16 %v2299, %v2116
    %v2421 = vmul.bf16 %v2303, %v2119
    %v2422 = vmul.bf16 %v2303, %v2122
    %v2423 = vmul.bf16 %v2307, %v2125
    %v2424 = vmul.bf16 %v2307, %v2128
    %v2425 = vmul.bf16 %v2311, %v2131
    %v2426 = vmul.bf16 %v2311, %v2134
    %v2427 = vmul.bf16 %v2315, %v2137
    %v2428 = vmul.bf16 %v2315, %v2140
    %v2429 = vmul.bf16 %v2319, %v2143
    %v2430 = vmul.bf16 %v2319, %v2146
    %v2431 = vmul.bf16 %v2323, %v2149
    %v2432 = vmul.bf16 %v2323, %v2152
    %v2433 = vmul.bf16 %v2327, %v2155
    %v2434 = vmul.bf16 %v2327, %v2158
    %v2435 = vmul.bf16 %v2331, %v2161
    %v2436 = vmul.bf16 %v2331, %v2164
    %v2437 = vmul.bf16 %v2335, %v2167
    %v2438 = vmul.bf16 %v2335, %v2170
    %v2439 = vmul.bf16 %v2339, %v2173
    %v2440 = vmul.bf16 %v2339, %v2176
    %v2441 = vmul.bf16 %v2343, %v2179
    %v2442 = vmul.bf16 %v2343, %v2182
    %v2443 = vmul.bf16 %v2347, %v2185
    %v2444 = vmul.bf16 %v2347, %v2188
    %v2445 = vmul.bf16 %v2351, %v2191
    %v2446 = vmul.bf16 %v2351, %v2194
    %v2447 = vmul.bf16 %v2355, %v2197
    %v2448 = vmul.bf16 %v2355, %v2200
    %v2449 = vmul.bf16 %v2359, %v2203
    %v2450 = vmul.bf16 %v2359, %v2206
    %v2451 = vmul.bf16 %v2363, %v2209
    %v2452 = vmul.bf16 %v2363, %v2212
    %v2453 = vmul.bf16 %v2367, %v2215
    %v2454 = vmul.bf16 %v2367, %v2218
    %v2455 = vmul.bf16 %v2371, %v2221
    %v2456 = vmul.bf16 %v2371, %v2224
    %v2457 = vmul.bf16 %v2375, %v2227
    %v2458 = vmul.bf16 %v2375, %v2230
    %v2459 = vmul.bf16 %v2379, %v2233
    %v2460 = vmul.bf16 %v2379, %v2236
    %v2461 = vmul.bf16 %v2383, %v2239
    %v2462 = vmul.bf16 %v2383, %v2242
    %v2463 = vmul.bf16 %v2387, %v2245
    %v2464 = vmul.bf16 %v2387, %v2248
    %v2465 = vmul.bf16 %v2391, %v2251
    %v2466 = vmul.bf16 %v2391, %v2254
    %v2467 = vmul.bf16 %v2395, %v2257
    %v2468 = vmul.bf16 %v2395, %v2260
    %v2469 = vmul.bf16 %v2399, %v2263
    %v2470 = vmul.bf16 %v2399, %v2266
    %v2471 = vmul.bf16 %v2403, %v2269
    %v2472 = vmul.bf16 %v2403, %v2272
    %v2473 = vmul.bf16 %v2407, %v2275
    %v2474 = vmul.bf16 %v2407, %v2278
    %v2475 = vmul.bf16 %v2411, %v2281
    %v2476 = vmul.bf16 %v2411, %v2284
    %v2477 = vmin.bf16 %v2413, 1065369472
    %v2478 = vmin.bf16 %v2414, 1065369472
    %v2479 = vmin.bf16 %v2415, 1065369472
    %v2480 = vmin.bf16 %v2416, 1065369472
    %v2481 = vmin.bf16 %v2417, 1065369472
    %v2482 = vmin.bf16 %v2418, 1065369472
    %v2483 = vmin.bf16 %v2419, 1065369472
    %v2484 = vmin.bf16 %v2420, 1065369472
    %v2485 = vmin.bf16 %v2421, 1065369472
    %v2486 = vmin.bf16 %v2422, 1065369472
    %v2487 = vmin.bf16 %v2423, 1065369472
    %v2488 = vmin.bf16 %v2424, 1065369472
    %v2489 = vmin.bf16 %v2425, 1065369472
    %v2490 = vmin.bf16 %v2426, 1065369472
    %v2491 = vmin.bf16 %v2427, 1065369472
    %v2492 = vmin.bf16 %v2428, 1065369472
    %v2493 = vmin.bf16 %v2429, 1065369472
    %v2494 = vmin.bf16 %v2430, 1065369472
    %v2495 = vmin.bf16 %v2431, 1065369472
    %v2496 = vmin.bf16 %v2432, 1065369472
    %v2497 = vmin.bf16 %v2433, 1065369472
    %v2498 = vmin.bf16 %v2434, 1065369472
    %v2499 = vmin.bf16 %v2435, 1065369472
    %v2500 = vmin.bf16 %v2436, 1065369472
    %v2501 = vmin.bf16 %v2437, 1065369472
    %v2502 = vmin.bf16 %v2438, 1065369472
    %v2503 = vmin.bf16 %v2439, 1065369472
    %v2504 = vmin.bf16 %v2440, 1065369472
    %v2505 = vmin.bf16 %v2441, 1065369472
    %v2506 = vmin.bf16 %v2442, 1065369472
    %v2507 = vmin.bf16 %v2443, 1065369472
    %v2508 = vmin.bf16 %v2444, 1065369472
    %v2509 = vmin.bf16 %v2445, 1065369472
    %v2510 = vmin.bf16 %v2446, 1065369472
    %v2511 = vmin.bf16 %v2447, 1065369472
    %v2512 = vmin.bf16 %v2448, 1065369472
    %v2513 = vmin.bf16 %v2449, 1065369472
    %v2514 = vmin.bf16 %v2450, 1065369472
    %v2515 = vmin.bf16 %v2451, 1065369472
    %v2516 = vmin.bf16 %v2452, 1065369472
    %v2517 = vmin.bf16 %v2453, 1065369472
    %v2518 = vmin.bf16 %v2454, 1065369472
    %v2519 = vmin.bf16 %v2455, 1065369472
    %v2520 = vmin.bf16 %v2456, 1065369472
    %v2521 = vmin.bf16 %v2457, 1065369472
    %v2522 = vmin.bf16 %v2458, 1065369472
    %v2523 = vmin.bf16 %v2459, 1065369472
    %v2524 = vmin.bf16 %v2460, 1065369472
    %v2525 = vmin.bf16 %v2461, 1065369472
    %v2526 = vmin.bf16 %v2462, 1065369472
    %v2527 = vmin.bf16 %v2463, 1065369472
    %v2528 = vmin.bf16 %v2464, 1065369472
    %v2529 = vmin.bf16 %v2465, 1065369472
    %v2530 = vmin.bf16 %v2466, 1065369472
    %v2531 = vmin.bf16 %v2467, 1065369472
    %v2532 = vmin.bf16 %v2468, 1065369472
    %v2533 = vmin.bf16 %v2469, 1065369472
    %v2534 = vmin.bf16 %v2470, 1065369472
    %v2535 = vmin.bf16 %v2471, 1065369472
    %v2536 = vmin.bf16 %v2472, 1065369472
    %v2537 = vmin.bf16 %v2473, 1065369472
    %v2538 = vmin.bf16 %v2474, 1065369472
    %v2539 = vmin.bf16 %v2475, 1065369472
    %v2540 = vmin.bf16 %v2476, 1065369472
    %vm2541 = vcmp.ge.bf16.partialorder %v2477, 998325121
    %vm2542 = vcmp.ge.bf16.partialorder %v2478, 998325121
    %vm2543 = vcmp.ge.bf16.partialorder %v2479, 998325121
    %vm2544 = vcmp.ge.bf16.partialorder %v2480, 998325121
    %vm2545 = vcmp.ge.bf16.partialorder %v2481, 998325121
    %vm2546 = vcmp.ge.bf16.partialorder %v2482, 998325121
    %vm2547 = vcmp.ge.bf16.partialorder %v2483, 998325121
    %vm2548 = vcmp.ge.bf16.partialorder %v2484, 998325121
    %vm2549 = vcmp.ge.bf16.partialorder %v2485, 998325121
    %vm2550 = vcmp.ge.bf16.partialorder %v2486, 998325121
    %vm2551 = vcmp.ge.bf16.partialorder %v2487, 998325121
    %vm2552 = vcmp.ge.bf16.partialorder %v2488, 998325121
    %vm2553 = vcmp.ge.bf16.partialorder %v2489, 998325121
    %vm2554 = vcmp.ge.bf16.partialorder %v2490, 998325121
    %vm2555 = vcmp.ge.bf16.partialorder %v2491, 998325121
    %vm2556 = vcmp.ge.bf16.partialorder %v2492, 998325121
    %vm2557 = vcmp.ge.bf16.partialorder %v2493, 998325121
    %vm2558 = vcmp.ge.bf16.partialorder %v2494, 998325121
    %vm2559 = vcmp.ge.bf16.partialorder %v2495, 998325121
    %vm2560 = vcmp.ge.bf16.partialorder %v2496, 998325121
    %vm2561 = vcmp.ge.bf16.partialorder %v2497, 998325121
    %vm2562 = vcmp.ge.bf16.partialorder %v2498, 998325121
    %vm2563 = vcmp.ge.bf16.partialorder %v2499, 998325121
    %vm2564 = vcmp.ge.bf16.partialorder %v2500, 998325121
    %vm2565 = vcmp.ge.bf16.partialorder %v2501, 998325121
    %vm2566 = vcmp.ge.bf16.partialorder %v2502, 998325121
    %vm2567 = vcmp.ge.bf16.partialorder %v2503, 998325121
    %vm2568 = vcmp.ge.bf16.partialorder %v2504, 998325121
    %vm2569 = vcmp.ge.bf16.partialorder %v2505, 998325121
    %vm2570 = vcmp.ge.bf16.partialorder %v2506, 998325121
    %vm2571 = vcmp.ge.bf16.partialorder %v2507, 998325121
    %vm2572 = vcmp.ge.bf16.partialorder %v2508, 998325121
    %vm2573 = vcmp.ge.bf16.partialorder %v2509, 998325121
    %vm2574 = vcmp.ge.bf16.partialorder %v2510, 998325121
    %vm2575 = vcmp.ge.bf16.partialorder %v2511, 998325121
    %vm2576 = vcmp.ge.bf16.partialorder %v2512, 998325121
    %vm2577 = vcmp.ge.bf16.partialorder %v2513, 998325121
    %vm2578 = vcmp.ge.bf16.partialorder %v2514, 998325121
    %vm2579 = vcmp.ge.bf16.partialorder %v2515, 998325121
    %vm2580 = vcmp.ge.bf16.partialorder %v2516, 998325121
    %vm2581 = vcmp.ge.bf16.partialorder %v2517, 998325121
    %vm2582 = vcmp.ge.bf16.partialorder %v2518, 998325121
    %vm2583 = vcmp.ge.bf16.partialorder %v2519, 998325121
    %vm2584 = vcmp.ge.bf16.partialorder %v2520, 998325121
    %vm2585 = vcmp.ge.bf16.partialorder %v2521, 998325121
    %vm2586 = vcmp.ge.bf16.partialorder %v2522, 998325121
    %vm2587 = vcmp.ge.bf16.partialorder %v2523, 998325121
    %vm2588 = vcmp.ge.bf16.partialorder %v2524, 998325121
    %vm2589 = vcmp.ge.bf16.partialorder %v2525, 998325121
    %vm2590 = vcmp.ge.bf16.partialorder %v2526, 998325121
    %vm2591 = vcmp.ge.bf16.partialorder %v2527, 998325121
    %vm2592 = vcmp.ge.bf16.partialorder %v2528, 998325121
    %vm2593 = vcmp.ge.bf16.partialorder %v2529, 998325121
    %vm2594 = vcmp.ge.bf16.partialorder %v2530, 998325121
    %vm2595 = vcmp.ge.bf16.partialorder %v2531, 998325121
    %vm2596 = vcmp.ge.bf16.partialorder %v2532, 998325121
    %vm2597 = vcmp.ge.bf16.partialorder %v2533, 998325121
    %vm2598 = vcmp.ge.bf16.partialorder %v2534, 998325121
    %vm2599 = vcmp.ge.bf16.partialorder %v2535, 998325121
    %vm2600 = vcmp.ge.bf16.partialorder %v2536, 998325121
    %vm2601 = vcmp.ge.bf16.partialorder %v2537, 998325121
    %vm2602 = vcmp.ge.bf16.partialorder %v2538, 998325121
    %vm2603 = vcmp.ge.bf16.partialorder %v2539, 998325121
    %vm2604 = vcmp.ge.bf16.partialorder %v2540, 998325121
    %v2605 = vsel %vm2541, %v2477, 0
    %v2606 = vsel %vm2542, %v2478, 0
    %v2607 = vsel %vm2543, %v2479, 0
    %v2608 = vsel %vm2544, %v2480, 0
    %v2609 = vsel %vm2545, %v2481, 0
    %v2610 = vsel %vm2546, %v2482, 0
    %v2611 = vsel %vm2547, %v2483, 0
    %v2612 = vsel %vm2548, %v2484, 0
    %v2613 = vsel %vm2549, %v2485, 0
    %v2614 = vsel %vm2550, %v2486, 0
    %v2615 = vsel %vm2551, %v2487, 0
    %v2616 = vsel %vm2552, %v2488, 0
    %v2617 = vsel %vm2553, %v2489, 0
    %v2618 = vsel %vm2554, %v2490, 0
    %v2619 = vsel %vm2555, %v2491, 0
    %v2620 = vsel %vm2556, %v2492, 0
    %v2621 = vsel %vm2557, %v2493, 0
    %v2622 = vsel %vm2558, %v2494, 0
    %v2623 = vsel %vm2559, %v2495, 0
    %v2624 = vsel %vm2560, %v2496, 0
    %v2625 = vsel %vm2561, %v2497, 0
    %v2626 = vsel %vm2562, %v2498, 0
    %v2627 = vsel %vm2563, %v2499, 0
    %v2628 = vsel %vm2564, %v2500, 0
    %v2629 = vsel %vm2565, %v2501, 0
    %v2630 = vsel %vm2566, %v2502, 0
    %v2631 = vsel %vm2567, %v2503, 0
    %v2632 = vsel %vm2568, %v2504, 0
    %v2633 = vsel %vm2569, %v2505, 0
    %v2634 = vsel %vm2570, %v2506, 0
    %v2635 = vsel %vm2571, %v2507, 0
    %v2636 = vsel %vm2572, %v2508, 0
    %v2637 = vsel %vm2573, %v2509, 0
    %v2638 = vsel %vm2574, %v2510, 0
    %v2639 = vsel %vm2575, %v2511, 0
    %v2640 = vsel %vm2576, %v2512, 0
    %v2641 = vsel %vm2577, %v2513, 0
    %v2642 = vsel %vm2578, %v2514, 0
    %v2643 = vsel %vm2579, %v2515, 0
    %v2644 = vsel %vm2580, %v2516, 0
    %v2645 = vsel %vm2581, %v2517, 0
    %v2646 = vsel %vm2582, %v2518, 0
    %v2647 = vsel %vm2583, %v2519, 0
    %v2648 = vsel %vm2584, %v2520, 0
    %v2649 = vsel %vm2585, %v2521, 0
    %v2650 = vsel %vm2586, %v2522, 0
    %v2651 = vsel %vm2587, %v2523, 0
    %v2652 = vsel %vm2588, %v2524, 0
    %v2653 = vsel %vm2589, %v2525, 0
    %v2654 = vsel %vm2590, %v2526, 0
    %v2655 = vsel %vm2591, %v2527, 0
    %v2656 = vsel %vm2592, %v2528, 0
    %v2657 = vsel %vm2593, %v2529, 0
    %v2658 = vsel %vm2594, %v2530, 0
    %v2659 = vsel %vm2595, %v2531, 0
    %v2660 = vsel %vm2596, %v2532, 0
    %v2661 = vsel %vm2597, %v2533, 0
    %v2662 = vsel %vm2598, %v2534, 0
    %v2663 = vsel %vm2599, %v2535, 0
    %v2664 = vsel %vm2600, %v2536, 0
    %v2665 = vsel %vm2601, %v2537, 0
    %v2666 = vsel %vm2602, %v2538, 0
    %v2667 = vsel %vm2603, %v2539, 0
    %v2668 = vsel %vm2604, %v2540, 0
    %v2671 = vunpack.c.l.b16 %v85
    %v2672 = vunpack.c.h.b16 %v85
    %v2673 = vunpack.c.l.b16 %v86
    %v2674 = vunpack.c.h.b16 %v86
    %v2675 = vpack.c.b16 %v2671, %v2671
    %v2676 = vpack.c.b16 %v2672, %v2672
    %v2677 = vpack.c.b16 %v2673, %v2673
    %v2678 = vpack.c.b16 %v2674, %v2674
    %2683 = vmatprep.subr.bf16.mxu0 %v2620
    %2684 = vmatpush1.bf16.msra.mxu0 %v2619
    %2685 = vmatprep.subr.bf16.mxu0 %v2618
    %2686 = vmatpush1.bf16.msra.mxu0 %v2617
    %2687 = vmatprep.subr.bf16.mxu0 %v2616
    %2688 = vmatpush1.bf16.msra.mxu0 %v2615
    %2689 = vmatprep.subr.bf16.mxu0 %v2614
    %2690 = vmatpush1.bf16.msra.mxu0 %v2613
    %2691 = vmatprep.subr.bf16.mxu0 %v2612
    %2692 = vmatpush1.bf16.msra.mxu0 %v2611
    %2693 = vmatprep.subr.bf16.mxu0 %v2610
    %2694 = vmatpush1.bf16.msra.mxu0 %v2609
    %2695 = vmatprep.subr.bf16.mxu0 %v2608
    %2696 = vmatpush1.bf16.msra.mxu0 %v2607
    %2697 = vmatprep.subr.bf16.mxu0 %v2606
    %2698 = vmatpush1.bf16.msra.mxu0 %v2605
    %2699 = vmatprep.subr.bf16.mxu0 %v2636
    %2700 = vmatpush2.bf16.msra.mxu0 %v2635
    %2701 = vmatprep.subr.bf16.mxu0 %v2634
    %2702 = vmatpush2.bf16.msra.mxu0 %v2633
    %2703 = vmatprep.subr.bf16.mxu0 %v2632
    %2704 = vmatpush2.bf16.msra.mxu0 %v2631
    %2705 = vmatprep.subr.bf16.mxu0 %v2630
    %2706 = vmatpush2.bf16.msra.mxu0 %v2629
    %2707 = vmatprep.subr.bf16.mxu0 %v2628
    %2708 = vmatpush2.bf16.msra.mxu0 %v2627
    %2709 = vmatprep.subr.bf16.mxu0 %v2626
    %2710 = vmatpush2.bf16.msra.mxu0 %v2625
    %2711 = vmatprep.subr.bf16.mxu0 %v2624
    %2712 = vmatpush2.bf16.msra.mxu0 %v2623
    %2713 = vmatprep.subr.bf16.mxu0 %v2622
    %2714 = vmatpush2.bf16.msra.mxu0 %v2621
    %2715 = vmatprep.mubr.bf16.mxu0 %v2676
    %2716 = vmatmul.mubr.bf16.gmra.mxu0 %v2675
    %v2717 = vpop.f32.mrf.mxu0
    %v2718 = vadd.f32 0.0, %v2717
    %v2719 = vpop.f32.mrf.mxu0
    %v2720 = vadd.f32 0.0, %v2719
    %v2721 = vpop.f32.mrf.mxu0
    %v2722 = vpop.f32.mrf.mxu0
    %2723 = vdwg.mxu0
    %2724 = vmatprep.subr.bf16.mxu0 %v2652
    %2725 = vmatpush1.bf16.msra.mxu0 %v2651
    %2726 = vmatprep.subr.bf16.mxu0 %v2650
    %2727 = vmatpush1.bf16.msra.mxu0 %v2649
    %2728 = vmatprep.subr.bf16.mxu0 %v2648
    %2729 = vmatpush1.bf16.msra.mxu0 %v2647
    %2730 = vmatprep.subr.bf16.mxu0 %v2646
    %2731 = vmatpush1.bf16.msra.mxu0 %v2645
    %2732 = vmatprep.subr.bf16.mxu0 %v2644
    %2733 = vmatpush1.bf16.msra.mxu0 %v2643
    %2734 = vmatprep.subr.bf16.mxu0 %v2642
    %2735 = vmatpush1.bf16.msra.mxu0 %v2641
    %2736 = vmatprep.subr.bf16.mxu0 %v2640
    %2737 = vmatpush1.bf16.msra.mxu0 %v2639
    %2738 = vmatprep.subr.bf16.mxu0 %v2638
    %2739 = vmatpush1.bf16.msra.mxu0 %v2637
    %2740 = vmatprep.subr.bf16.mxu0 %v2668
    %2741 = vmatpush2.bf16.msra.mxu0 %v2667
    %2742 = vmatprep.subr.bf16.mxu0 %v2666
    %2743 = vmatpush2.bf16.msra.mxu0 %v2665
    %2744 = vmatprep.subr.bf16.mxu0 %v2664
    %2745 = vmatpush2.bf16.msra.mxu0 %v2663
    %2746 = vmatprep.subr.bf16.mxu0 %v2662
    %2747 = vmatpush2.bf16.msra.mxu0 %v2661
    %2748 = vmatprep.subr.bf16.mxu0 %v2660
    %2749 = vmatpush2.bf16.msra.mxu0 %v2659
    %2750 = vmatprep.subr.bf16.mxu0 %v2658
    %2751 = vmatpush2.bf16.msra.mxu0 %v2657
    %2752 = vmatprep.subr.bf16.mxu0 %v2656
    %2753 = vmatpush2.bf16.msra.mxu0 %v2655
    %2754 = vmatprep.subr.bf16.mxu0 %v2654
    %2755 = vmatpush2.bf16.msra.mxu0 %v2653
    %2756 = vmatprep.mubr.bf16.mxu0 %v2678
    %2757 = vmatmul.mubr.bf16.gmra.mxu0 %v2677
    %v2758 = vpop.f32.mrf.mxu0
    %v2759 = vadd.f32 %v2718, %v2758
    %v2760 = vpop.f32.mrf.mxu0
    %v2761 = vadd.f32 %v2720, %v2760
    %v2762 = vpop.f32.mrf.mxu0
    %v2763 = vpop.f32.mrf.mxu0
    %2764 = vdwg.mxu0
    %2765 = vst [vmem:[#allocation2] sm:$0x3f] %v2759
    %2766 = vst [vmem:[#allocation2 + $0x8] sm:$0x3f] %v2761
    // Predicated region
    $region14: #{tpu_custom_call.1} parent=1 // pred_check
      _
    $region15: #{tpu_custom_call.1} parent=1 // pred_check_branch
      %2768 = sbr.rel (0) target = $region17
    $region16: #{tpu_custom_call.1} parent=1 // pred_region
      %s2770 = ssub.s32 256, 256
      %2771 = vsyncadd [#allocation3], %s2770
      %s2773 = sshll.u32 [#allocation2], 4
      %s2774 = int_to_ptr.vmem [resolvable:$true] %s2773
      %2776 = dma.vmem_to_hbm [thread:$0]  %s2774, 256, %s3, [#allocation3]
    $region17: #{tpu_custom_call.1} parent=1 // pred_fallthru
      _
    // Predicated region
    $region18: #{tpu_custom_call.1} parent=1 // pred_check
      _
    $region19: #{tpu_custom_call.1} parent=1 // pred_check_branch
      %2778 = sbr.rel (0) target = $region21
    $region20: #{tpu_custom_call.1} parent=1 // pred_region
      %2779 = dma.done [#allocation3], 256
    $region21: #{tpu_custom_call.1} parent=1 // pred_fallthru
      _
    %2780 = vsyncpa [#allocation3], 1

</llo_original>
